<compile_context>
chip_gen: v6e
topology: v6e:2x2x1
jax: 0.10.0
libtpu: 0.0.40
codegen_flags: <defaults>
</compile_context>

<pallas_src>
import functools

import jax
import jax.numpy as jnp
from jax.experimental import pallas as pl
from jax.experimental.pallas import tpu as pltpu


# ----------------------------------------------------------------------------
# Fused kernel: one grid step = (one batch element) x (one backbone).
#   layer0 GEMM -> padded VMEM slab -> stride-2 flat-shift layer1 GEMM
#   -> bias/ReLU -> masked global mean pool -> partial (split-weight) FC.
# ----------------------------------------------------------------------------
def _mi_fused_kernel(p0_ref, w0_ref, b0_ref, w1_ref, b1_ref, fcw_ref, fcb_ref,
                     o_ref, hpad_ref, acc_ref, *,
                     H, W, C1, Ho, Wo, WP, PAD_LEFT, HP_ROWS, ACC_M):
    n = pl.program_id(1)                       # 0 = face net, 1 = tongue net

    # ---- conv layer 0: folded-tap GEMM (M=H*W, K=9*Cin padded to 32, N=C1) ----
    h1 = jnp.dot(p0_ref[...], w0_ref[n], preferred_element_type=jnp.float32)
    h1 = jnp.maximum(h1 + b0_ref[n], 0.0)      # bias + ReLU, (H*W, C1) f32

    # ---- stash the layer-0 activation into the padded VMEM slab ----
    # Flat layout: padded spatial row u (= image row + 1) occupies flat rows
    # [u*WP, (u+1)*WP); image columns start at +PAD_LEFT so every store below is tile
    # aligned; all never-written rows provide the conv zero padding (slab re-zeroed each
    # step because the scratch persists across grid iterations).
    hpad_ref[...] = jnp.zeros((HP_ROWS, C1), jnp.float32)
    for i in range(H):
        hpad_ref[pl.ds((i + 1) * WP + PAD_LEFT, W), :] = h1[i * W:(i + 1) * W, :]

    # ---- conv layer 1 (3x3, stride 2): flat-shift implicit GEMM ----
    # Output pixel (a, b), tap (di, dj) needs flat row  base + 2*(WP*a + b)  with
    # base = di*WP + dj + PAD_LEFT - 1, so ONE strided read per tap covers all output
    # pixels; the extra "junk" rows (b' >= Wo) are masked once in the epilogue.
    for di in range(3):
        for dj in range(3):
            t = di * 3 + dj
            base = di * WP + dj + PAD_LEFT - 1
            lhs = hpad_ref[pl.ds(base, ACC_M, 2), :].astype(jnp.bfloat16)
            tap = jnp.dot(lhs, w1_ref[n * 9 + t], preferred_element_type=jnp.float32)
            if t == 0:
                acc_ref[...] = tap             # f32 VMEM accumulator (no long vreg chain)
            else:
                acc_ref[...] += tap

    # ---- epilogue: bias + ReLU, drop junk rows, global mean pool, partial FC ----
    row = jax.lax.broadcasted_iota(jnp.int32, (ACC_M, 1), 0)
    valid = (row % WP) < Wo                    # flat-shift junk columns
    act = jnp.maximum(acc_ref[...] + b1_ref[n], 0.0)
    pooled = jnp.sum(jnp.where(valid, act, 0.0), axis=0, keepdims=True) * (1.0 / (Ho * Wo))
    part = jnp.dot(pooled, fcw_ref[n], preferred_element_type=jnp.float32)   # (1, NPAD)

    @pl.when(n == 0)                           # face half: initialise with the FC bias
    def _():
        o_ref[...] = fcb_ref[...] + part

    @pl.when(n != 0)                           # tongue half: accumulate (== cat + Linear)
    def _():
        o_ref[...] = o_ref[...] + part


# ----------------------------------------------------------------------------
# Wrapper: tiny input prep (one fused XLA pass) + the single pallas_call.
#   include_top=True, out_layer=False (raw logits), dropout=0.0 (identity).
# ----------------------------------------------------------------------------
def mi_model_forward(x_nchw, y_nchw, params, *, num_classes):
    w0, b0, w1, b1 = params["w0"], params["b0"], params["w1"], params["b1"]
    fc_w, fc_b = params["fc_w"], params["fc_b"]

    B, Cin, H, W = x_nchw.shape
    K0, C1 = w0.shape[1], w0.shape[2]
    C2, NPAD = fc_w.shape[1], fc_w.shape[2]
    assert W % 16 == 0 and H % 2 == 0 and 9 * Cin <= K0

    # Stand-in backbone geometry (3x3/pad1: stride 1 then stride 2) + flat-shift constants.
    Ho, Wo = (H + 2 - 3) // 2 + 1, (W + 2 - 3) // 2 + 1
    PAD_LEFT = 16                      # >=1 needed; 16 keeps every slab store tile aligned
    WP = PAD_LEFT + W                  # flat rows per padded image row
    HP_ROWS = (H + 1) * WP             # top pad row + H image rows
    ACC_M = WP * (Ho - 1) + Wo         # flat-shift GEMM M (junk rows included), mult of 8

    # Input prep + layer-0 im2col in one tiny pass over the (B,2,H,W,3) images:
    # NCHW->NHWC, f32->bf16, fold the 9 taps into the contraction dim (K=27 -> pad to K0).
    imgs = jnp.transpose(jnp.stack([x_nchw, y_nchw], axis=1), (0, 1, 3, 4, 2))
    xp = jnp.pad(imgs, ((0, 0), (0, 0), (1, 1), (1, 1), (0, 0)))
    cols = [xp[:, :, di:di + H, dj:dj + W, :] for di in range(3) for dj in range(3)]
    patches = jnp.concatenate(cols, axis=-1).reshape(B, 2, H * W, 9 * Cin)
    patches = jnp.pad(patches,
                      ((0, 0), (0, 0), (0, 0), (0, K0 - 9 * Cin))).astype(jnp.bfloat16)

    kernel = functools.partial(
        _mi_fused_kernel, H=H, W=W, C1=C1, Ho=Ho, Wo=Wo,
        WP=WP, PAD_LEFT=PAD_LEFT, HP_ROWS=HP_ROWS, ACC_M=ACC_M)

    logits = pl.pallas_call(
        kernel,
        out_shape=jax.ShapeDtypeStruct((B, 1, NPAD), jnp.float32),
        grid=(B, 2),                                       # (batch, backbone)
        in_specs=[
            pl.BlockSpec((None, None, H * W, K0), lambda b, n: (b, n, 0, 0)),  # l0 patches
            pl.BlockSpec(w0.shape, lambda b, n: (0, 0, 0)),     # both nets' weights stay
            pl.BlockSpec(b0.shape, lambda b, n: (0, 0, 0)),     # VMEM-resident (constant
            pl.BlockSpec(w1.shape, lambda b, n: (0, 0, 0)),     # block index -> fetched once)
            pl.BlockSpec(b1.shape, lambda b, n: (0, 0, 0)),
            pl.BlockSpec(fc_w.shape, lambda b, n: (0, 0, 0)),
            pl.BlockSpec(fc_b.shape, lambda b, n: (0, 0)),
        ],
        out_specs=pl.BlockSpec((None, 1, NPAD), lambda b, n: (b, 0, 0)),
        scratch_shapes=[pltpu.VMEM((HP_ROWS, C1), jnp.float32),   # padded layer-0 activation
                        pltpu.VMEM((ACC_M, C2), jnp.float32)],    # layer-1 f32 accumulator
        compiler_params=pltpu.CompilerParams(
            dimension_semantics=("parallel", "arbitrary")),
    )(patches, w0, b0, w1, b1, fc_w, fc_b)

    return logits[:, 0, :num_classes]


# ----------------------------------------------------------------------------
# Parameter init: xavier_uniform conv/linear weights, zero biases (== _init_weights).
# All padding / splitting / layout work happens once here, never per forward.
# ----------------------------------------------------------------------------
def _xavier_uniform(key, shape, fan_in, fan_out):
    bound = float((6.0 / (fan_in + fan_out)) ** 0.5)
    return jax.random.uniform(key, shape, jnp.float32, -bound, bound)


def make_params(key, cin, c1, c2, num_classes, *, k0=32, n_pad=128):
    ks = jax.random.split(key, 5)
    w0, w1 = [], []
    for i in range(2):                                     # 0 = face net, 1 = tongue net
        wa = _xavier_uniform(ks[i], (3, 3, cin, c1), cin * 9, c1 * 9).reshape(9 * cin, c1)
        w0.append(jnp.pad(wa, ((0, k0 - 9 * cin), (0, 0))))          # folded taps, K->32
        wb = _xavier_uniform(ks[2 + i], (3, 3, c1, c2), c1 * 9, c2 * 9).reshape(9, c1, c2)
        w1.append(wb)
    w0 = jnp.stack(w0).astype(jnp.bfloat16)                # (2, K0, C1)
    w1 = jnp.concatenate(w1, axis=0).astype(jnp.bfloat16)  # (2*9, C1, C2) tap-major
    # nn.Linear(fc_cells=2*c2, num_classes): stored transposed, split per backbone, and
    # zero-padded to 128 output lanes once at init (lane-dense logits block).
    fc = _xavier_uniform(ks[4], (2 * c2, num_classes), 2 * c2, num_classes)
    fc_w = jnp.zeros((2, c2, n_pad), jnp.float32)
    fc_w = fc_w.at[0, :, :num_classes].set(fc[:c2]).at[1, :, :num_classes].set(fc[c2:])
    return {"w0": w0, "b0": jnp.zeros((2, 1, c1), jnp.float32),
            "w1": w1, "b1": jnp.zeros((2, 1, c2), jnp.float32),
            "fc_w": fc_w, "fc_b": jnp.zeros((1, n_pad), jnp.float32)}


if __name__ == "__main__":
    key = jax.random.PRNGKey(0)
    kp, kx, ky = jax.random.split(key, 3)

    B, Cin, H, W = 2, 3, 16, 16
    C1 = C2 = 128                      # lane-dense stand-in backbone widths
    num_classes = 16

    params = make_params(kp, Cin, C1, C2, num_classes)
    fwd = jax.jit(functools.partial(mi_model_forward, num_classes=num_classes))

    x = jax.random.normal(kx, (B, Cin, H, W), jnp.float32)   # face image, NCHW like torch
    y = jax.random.normal(ky, (B, Cin, H, W), jnp.float32)   # tongue image, NCHW like torch

    pred = fwd(x, y, params)
    jax.block_until_ready(pred)
    assert pred.shape == (B, num_classes) and pred.dtype == jnp.float32
    print("KERNEL_OK")
</pallas_src>

<mosaic_0001>
module attributes {stable_mosaic.version = 11 : i64} {
  func.func @_mi_fused_kernel(%arg0: i32, %arg1: i32, %arg2: memref<1x1x256x32xbf16, #tpu.memory_space<vmem>>, %arg3: memref<2x32x128xbf16, #tpu.memory_space<vmem>>, %arg4: memref<2x1x128xf32, #tpu.memory_space<vmem>>, %arg5: memref<18x128x128xbf16, #tpu.memory_space<vmem>>, %arg6: memref<2x1x128xf32, #tpu.memory_space<vmem>>, %arg7: memref<2x128x128xf32, #tpu.memory_space<vmem>>, %arg8: memref<1x128xf32, #tpu.memory_space<vmem>>, %arg9: memref<1x1x128xf32, #tpu.memory_space<vmem>>, %arg10: memref<544x128xf32, #tpu.memory_space<vmem>>, %arg11: memref<232x128xf32, #tpu.memory_space<vmem>>) attributes {dimension_semantics = [#tpu.dimension_semantics<parallel>, #tpu.dimension_semantics<arbitrary>], iteration_bounds = array<i64: 2, 2>, scalar_prefetch = 0 : i64, scratch_operands = 2 : i64, tpu.core_type = #tpu.core_type<tc>, window_params = [{transform_indices = @transform_0, window_bounds = array<i64: 1, 1, 256, 32>}, {pipeline_mode = #tpu.pipeline_mode<synchronous>, transform_indices = @transform_1, window_bounds = array<i64: 2, 32, 128>}, {pipeline_mode = #tpu.pipeline_mode<synchronous>, transform_indices = @transform_2, window_bounds = array<i64: 2, 1, 128>}, {pipeline_mode = #tpu.pipeline_mode<synchronous>, transform_indices = @transform_3, window_bounds = array<i64: 18, 128, 128>}, {pipeline_mode = #tpu.pipeline_mode<synchronous>, transform_indices = @transform_4, window_bounds = array<i64: 2, 1, 128>}, {pipeline_mode = #tpu.pipeline_mode<synchronous>, transform_indices = @transform_5, window_bounds = array<i64: 2, 128, 128>}, {pipeline_mode = #tpu.pipeline_mode<synchronous>, transform_indices = @transform_6, window_bounds = array<i64: 1, 128>}, {transform_indices = @transform_7, window_bounds = array<i64: 1, 1, 128>}]} {
    %c0 = arith.constant 0 : index
    %c0_0 = arith.constant 0 : index
    %c0_1 = arith.constant 0 : index
    %c0_2 = arith.constant 0 : index
    %0 = vector.load %arg2[%c0, %c0_0, %c0_1, %c0_2] : memref<1x1x256x32xbf16, #tpu.memory_space<vmem>>, vector<1x1x256x32xbf16>
    %1 = vector.shape_cast %0 : vector<1x1x256x32xbf16> to vector<256x32xbf16>
    %2 = arith.index_cast %arg1 : i32 to index
    %c0_3 = arith.constant 0 : index
    %c0_4 = arith.constant 0 : index
    %3 = vector.load %arg3[%2, %c0_3, %c0_4] : memref<2x32x128xbf16, #tpu.memory_space<vmem>>, vector<1x32x128xbf16>
    %4 = vector.shape_cast %3 : vector<1x32x128xbf16> to vector<32x128xbf16>
    %cst = arith.constant dense<0.000000e+00> : vector<256x128xf32>
    %5 = tpu.matmul %1, %4, %cst {dimension_numbers = #tpu.dot_dimension_numbers<[1], [0], [0], [1], [0, 0, 1, 1], [], []>} : vector<256x32xbf16>, vector<32x128xbf16>, vector<256x128xf32> -> vector<256x128xf32>
    %6 = arith.index_cast %arg1 : i32 to index
    %c0_5 = arith.constant 0 : index
    %c0_6 = arith.constant 0 : index
    %7 = vector.load %arg4[%6, %c0_5, %c0_6] : memref<2x1x128xf32, #tpu.memory_space<vmem>>, vector<1x1x128xf32>
    %8 = vector.shape_cast %7 : vector<1x1x128xf32> to vector<1x128xf32>
    %9 = vector.broadcast %8 : vector<1x128xf32> to vector<256x128xf32>
    %10 = arith.addf %5, %9 : vector<256x128xf32>
    %cst_7 = arith.constant 0.000000e+00 : f32
    %11 = vector.broadcast %cst_7 : f32 to vector<256x128xf32>
    %12 = arith.maximumf %10, %11 : vector<256x128xf32>
    %cst_8 = arith.constant 0.000000e+00 : f32
    %13 = vector.broadcast %cst_8 : f32 to vector<544x128xf32>
    %c0_9 = arith.constant 0 : index
    %c0_10 = arith.constant 0 : index
    %14 = vector.load %arg10[%c0_9, %c0_10] : memref<544x128xf32, #tpu.memory_space<vmem>>, vector<544x128xf32>
    tpu.vector_store %arg10[%c0_9, %c0_10], %13 {strides = array<i32>} : memref<544x128xf32, #tpu.memory_space<vmem>>, vector<544x128xf32>,
    %15 = vector.extract_strided_slice %12 {offsets = [0, 0], sizes = [16, 128], strides = [1, 1]} : vector<256x128xf32> to vector<16x128xf32>
    %c48 = arith.constant 48 : index
    %c0_11 = arith.constant 0 : index
    %16 = vector.load %arg10[%c48, %c0_11] : memref<544x128xf32, #tpu.memory_space<vmem>>, vector<16x128xf32>
    tpu.vector_store %arg10[%c48, %c0_11], %15 {strides = array<i32>} : memref<544x128xf32, #tpu.memory_space<vmem>>, vector<16x128xf32>,
    %17 = vector.extract_strided_slice %12 {offsets = [16, 0], sizes = [16, 128], strides = [1, 1]} : vector<256x128xf32> to vector<16x128xf32>
    %c80 = arith.constant 80 : index
    %c0_12 = arith.constant 0 : index
    %18 = vector.load %arg10[%c80, %c0_12] : memref<544x128xf32, #tpu.memory_space<vmem>>, vector<16x128xf32>
    tpu.vector_store %arg10[%c80, %c0_12], %17 {strides = array<i32>} : memref<544x128xf32, #tpu.memory_space<vmem>>, vector<16x128xf32>,
    %19 = vector.extract_strided_slice %12 {offsets = [32, 0], sizes = [16, 128], strides = [1, 1]} : vector<256x128xf32> to vector<16x128xf32>
    %c112 = arith.constant 112 : index
    %c0_13 = arith.constant 0 : index
    %20 = vector.load %arg10[%c112, %c0_13] : memref<544x128xf32, #tpu.memory_space<vmem>>, vector<16x128xf32>
    tpu.vector_store %arg10[%c112, %c0_13], %19 {strides = array<i32>} : memref<544x128xf32, #tpu.memory_space<vmem>>, vector<16x128xf32>,
    %21 = vector.extract_strided_slice %12 {offsets = [48, 0], sizes = [16, 128], strides = [1, 1]} : vector<256x128xf32> to vector<16x128xf32>
    %c144 = arith.constant 144 : index
    %c0_14 = arith.constant 0 : index
    %22 = vector.load %arg10[%c144, %c0_14] : memref<544x128xf32, #tpu.memory_space<vmem>>, vector<16x128xf32>
    tpu.vector_store %arg10[%c144, %c0_14], %21 {strides = array<i32>} : memref<544x128xf32, #tpu.memory_space<vmem>>, vector<16x128xf32>,
    %23 = vector.extract_strided_slice %12 {offsets = [64, 0], sizes = [16, 128], strides = [1, 1]} : vector<256x128xf32> to vector<16x128xf32>
    %c176 = arith.constant 176 : index
    %c0_15 = arith.constant 0 : index
    %24 = vector.load %arg10[%c176, %c0_15] : memref<544x128xf32, #tpu.memory_space<vmem>>, vector<16x128xf32>
    tpu.vector_store %arg10[%c176, %c0_15], %23 {strides = array<i32>} : memref<544x128xf32, #tpu.memory_space<vmem>>, vector<16x128xf32>,
    %25 = vector.extract_strided_slice %12 {offsets = [80, 0], sizes = [16, 128], strides = [1, 1]} : vector<256x128xf32> to vector<16x128xf32>
    %c208 = arith.constant 208 : index
    %c0_16 = arith.constant 0 : index
    %26 = vector.load %arg10[%c208, %c0_16] : memref<544x128xf32, #tpu.memory_space<vmem>>, vector<16x128xf32>
    tpu.vector_store %arg10[%c208, %c0_16], %25 {strides = array<i32>} : memref<544x128xf32, #tpu.memory_space<vmem>>, vector<16x128xf32>,
    %27 = vector.extract_strided_slice %12 {offsets = [96, 0], sizes = [16, 128], strides = [1, 1]} : vector<256x128xf32> to vector<16x128xf32>
    %c240 = arith.constant 240 : index
    %c0_17 = arith.constant 0 : index
    %28 = vector.load %arg10[%c240, %c0_17] : memref<544x128xf32, #tpu.memory_space<vmem>>, vector<16x128xf32>
    tpu.vector_store %arg10[%c240, %c0_17], %27 {strides = array<i32>} : memref<544x128xf32, #tpu.memory_space<vmem>>, vector<16x128xf32>,
    %29 = vector.extract_strided_slice %12 {offsets = [112, 0], sizes = [16, 128], strides = [1, 1]} : vector<256x128xf32> to vector<16x128xf32>
    %c272 = arith.constant 272 : index
    %c0_18 = arith.constant 0 : index
    %30 = vector.load %arg10[%c272, %c0_18] : memref<544x128xf32, #tpu.memory_space<vmem>>, vector<16x128xf32>
    tpu.vector_store %arg10[%c272, %c0_18], %29 {strides = array<i32>} : memref<544x128xf32, #tpu.memory_space<vmem>>, vector<16x128xf32>,
    %31 = vector.extract_strided_slice %12 {offsets = [128, 0], sizes = [16, 128], strides = [1, 1]} : vector<256x128xf32> to vector<16x128xf32>
    %c304 = arith.constant 304 : index
    %c0_19 = arith.constant 0 : index
    %32 = vector.load %arg10[%c304, %c0_19] : memref<544x128xf32, #tpu.memory_space<vmem>>, vector<16x128xf32>
    tpu.vector_store %arg10[%c304, %c0_19], %31 {strides = array<i32>} : memref<544x128xf32, #tpu.memory_space<vmem>>, vector<16x128xf32>,
    %33 = vector.extract_strided_slice %12 {offsets = [144, 0], sizes = [16, 128], strides = [1, 1]} : vector<256x128xf32> to vector<16x128xf32>
    %c336 = arith.constant 336 : index
    %c0_20 = arith.constant 0 : index
    %34 = vector.load %arg10[%c336, %c0_20] : memref<544x128xf32, #tpu.memory_space<vmem>>, vector<16x128xf32>
    tpu.vector_store %arg10[%c336, %c0_20], %33 {strides = array<i32>} : memref<544x128xf32, #tpu.memory_space<vmem>>, vector<16x128xf32>,
    %35 = vector.extract_strided_slice %12 {offsets = [160, 0], sizes = [16, 128], strides = [1, 1]} : vector<256x128xf32> to vector<16x128xf32>
    %c368 = arith.constant 368 : index
    %c0_21 = arith.constant 0 : index
    %36 = vector.load %arg10[%c368, %c0_21] : memref<544x128xf32, #tpu.memory_space<vmem>>, vector<16x128xf32>
    tpu.vector_store %arg10[%c368, %c0_21], %35 {strides = array<i32>} : memref<544x128xf32, #tpu.memory_space<vmem>>, vector<16x128xf32>,
    %37 = vector.extract_strided_slice %12 {offsets = [176, 0], sizes = [16, 128], strides = [1, 1]} : vector<256x128xf32> to vector<16x128xf32>
    %c400 = arith.constant 400 : index
    %c0_22 = arith.constant 0 : index
    %38 = vector.load %arg10[%c400, %c0_22] : memref<544x128xf32, #tpu.memory_space<vmem>>, vector<16x128xf32>
    tpu.vector_store %arg10[%c400, %c0_22], %37 {strides = array<i32>} : memref<544x128xf32, #tpu.memory_space<vmem>>, vector<16x128xf32>,
    %39 = vector.extract_strided_slice %12 {offsets = [192, 0], sizes = [16, 128], strides = [1, 1]} : vector<256x128xf32> to vector<16x128xf32>
    %c432 = arith.constant 432 : index
    %c0_23 = arith.constant 0 : index
    %40 = vector.load %arg10[%c432, %c0_23] : memref<544x128xf32, #tpu.memory_space<vmem>>, vector<16x128xf32>
    tpu.vector_store %arg10[%c432, %c0_23], %39 {strides = array<i32>} : memref<544x128xf32, #tpu.memory_space<vmem>>, vector<16x128xf32>,
    %41 = vector.extract_strided_slice %12 {offsets = [208, 0], sizes = [16, 128], strides = [1, 1]} : vector<256x128xf32> to vector<16x128xf32>
    %c464 = arith.constant 464 : index
    %c0_24 = arith.constant 0 : index
    %42 = vector.load %arg10[%c464, %c0_24] : memref<544x128xf32, #tpu.memory_space<vmem>>, vector<16x128xf32>
    tpu.vector_store %arg10[%c464, %c0_24], %41 {strides = array<i32>} : memref<544x128xf32, #tpu.memory_space<vmem>>, vector<16x128xf32>,
    %43 = vector.extract_strided_slice %12 {offsets = [224, 0], sizes = [16, 128], strides = [1, 1]} : vector<256x128xf32> to vector<16x128xf32>
    %c496 = arith.constant 496 : index
    %c0_25 = arith.constant 0 : index
    %44 = vector.load %arg10[%c496, %c0_25] : memref<544x128xf32, #tpu.memory_space<vmem>>, vector<16x128xf32>
    tpu.vector_store %arg10[%c496, %c0_25], %43 {strides = array<i32>} : memref<544x128xf32, #tpu.memory_space<vmem>>, vector<16x128xf32>,
    %45 = vector.extract_strided_slice %12 {offsets = [240, 0], sizes = [16, 128], strides = [1, 1]} : vector<256x128xf32> to vector<16x128xf32>
    %c528 = arith.constant 528 : index
    %c0_26 = arith.constant 0 : index
    %46 = vector.load %arg10[%c528, %c0_26] : memref<544x128xf32, #tpu.memory_space<vmem>>, vector<16x128xf32>
    tpu.vector_store %arg10[%c528, %c0_26], %45 {strides = array<i32>} : memref<544x128xf32, #tpu.memory_space<vmem>>, vector<16x128xf32>,
    %c15 = arith.constant 15 : index
    %c0_27 = arith.constant 0 : index
    %47 = tpu.strided_load %arg10[%c15, %c0_27] {strides = array<i32: 2, 1>} : memref<544x128xf32, #tpu.memory_space<vmem>>, vector<232x128xf32>
    %48 = arith.truncf %47 : vector<232x128xf32> to vector<232x128xbf16>
    %c9_i32 = arith.constant 9 : i32
    %49 = arith.muli %arg1, %c9_i32 : i32
    %c0_i32 = arith.constant 0 : i32
    %50 = arith.addi %49, %c0_i32 : i32
    %51 = arith.index_cast %50 : i32 to index
    %c0_28 = arith.constant 0 : index
    %c0_29 = arith.constant 0 : index
    %52 = vector.load %arg5[%51, %c0_28, %c0_29] : memref<18x128x128xbf16, #tpu.memory_space<vmem>>, vector<1x128x128xbf16>
    %53 = vector.shape_cast %52 : vector<1x128x128xbf16> to vector<128x128xbf16>
    %cst_30 = arith.constant dense<0.000000e+00> : vector<232x128xf32>
    %54 = tpu.matmul %48, %53, %cst_30 {dimension_numbers = #tpu.dot_dimension_numbers<[1], [0], [0], [1], [0, 0, 1, 1], [], []>} : vector<232x128xbf16>, vector<128x128xbf16>, vector<232x128xf32> -> vector<232x128xf32>
    %c0_31 = arith.constant 0 : index
    %c0_32 = arith.constant 0 : index
    %55 = vector.load %arg11[%c0_31, %c0_32] : memref<232x128xf32, #tpu.memory_space<vmem>>, vector<232x128xf32>
    tpu.vector_store %arg11[%c0_31, %c0_32], %54 {strides = array<i32>} : memref<232x128xf32, #tpu.memory_space<vmem>>, vector<232x128xf32>,
    %c16 = arith.constant 16 : index
    %c0_33 = arith.constant 0 : index
    %56 = tpu.strided_load %arg10[%c16, %c0_33] {strides = array<i32: 2, 1>} : memref<544x128xf32, #tpu.memory_space<vmem>>, vector<232x128xf32>
    %57 = arith.truncf %56 : vector<232x128xf32> to vector<232x128xbf16>
    %c9_i32_34 = arith.constant 9 : i32
    %58 = arith.muli %arg1, %c9_i32_34 : i32
    %c1_i32 = arith.constant 1 : i32
    %59 = arith.addi %58, %c1_i32 : i32
    %60 = arith.index_cast %59 : i32 to index
    %c0_35 = arith.constant 0 : index
    %c0_36 = arith.constant 0 : index
    %61 = vector.load %arg5[%60, %c0_35, %c0_36] : memref<18x128x128xbf16, #tpu.memory_space<vmem>>, vector<1x128x128xbf16>
    %62 = vector.shape_cast %61 : vector<1x128x128xbf16> to vector<128x128xbf16>
    %cst_37 = arith.constant dense<0.000000e+00> : vector<232x128xf32>
    %63 = tpu.matmul %57, %62, %cst_37 {dimension_numbers = #tpu.dot_dimension_numbers<[1], [0], [0], [1], [0, 0, 1, 1], [], []>} : vector<232x128xbf16>, vector<128x128xbf16>, vector<232x128xf32> -> vector<232x128xf32>
    %c0_38 = arith.constant 0 : index
    %c0_39 = arith.constant 0 : index
    %64 = vector.load %arg11[%c0_38, %c0_39] : memref<232x128xf32, #tpu.memory_space<vmem>>, vector<232x128xf32>
    %65 = arith.addf %64, %63 : vector<232x128xf32>
    %c0_40 = arith.constant 0 : index
    %c0_41 = arith.constant 0 : index
    %66 = vector.load %arg11[%c0_40, %c0_41] : memref<232x128xf32, #tpu.memory_space<vmem>>, vector<232x128xf32>
    tpu.vector_store %arg11[%c0_40, %c0_41], %65 {strides = array<i32>} : memref<232x128xf32, #tpu.memory_space<vmem>>, vector<232x128xf32>,
    %c17 = arith.constant 17 : index
    %c0_42 = arith.constant 0 : index
    %67 = tpu.strided_load %arg10[%c17, %c0_42] {strides = array<i32: 2, 1>} : memref<544x128xf32, #tpu.memory_space<vmem>>, vector<232x128xf32>
    %68 = arith.truncf %67 : vector<232x128xf32> to vector<232x128xbf16>
    %c9_i32_43 = arith.constant 9 : i32
    %69 = arith.muli %arg1, %c9_i32_43 : i32
    %c2_i32 = arith.constant 2 : i32
    %70 = arith.addi %69, %c2_i32 : i32
    %71 = arith.index_cast %70 : i32 to index
    %c0_44 = arith.constant 0 : index
    %c0_45 = arith.constant 0 : index
    %72 = vector.load %arg5[%71, %c0_44, %c0_45] : memref<18x128x128xbf16, #tpu.memory_space<vmem>>, vector<1x128x128xbf16>
    %73 = vector.shape_cast %72 : vector<1x128x128xbf16> to vector<128x128xbf16>
    %cst_46 = arith.constant dense<0.000000e+00> : vector<232x128xf32>
    %74 = tpu.matmul %68, %73, %cst_46 {dimension_numbers = #tpu.dot_dimension_numbers<[1], [0], [0], [1], [0, 0, 1, 1], [], []>} : vector<232x128xbf16>, vector<128x128xbf16>, vector<232x128xf32> -> vector<232x128xf32>
    %c0_47 = arith.constant 0 : index
    %c0_48 = arith.constant 0 : index
    %75 = vector.load %arg11[%c0_47, %c0_48] : memref<232x128xf32, #tpu.memory_space<vmem>>, vector<232x128xf32>
    %76 = arith.addf %75, %74 : vector<232x128xf32>
    %c0_49 = arith.constant 0 : index
    %c0_50 = arith.constant 0 : index
    %77 = vector.load %arg11[%c0_49, %c0_50] : memref<232x128xf32, #tpu.memory_space<vmem>>, vector<232x128xf32>
    tpu.vector_store %arg11[%c0_49, %c0_50], %76 {strides = array<i32>} : memref<232x128xf32, #tpu.memory_space<vmem>>, vector<232x128xf32>,
    %c47 = arith.constant 47 : index
    %c0_51 = arith.constant 0 : index
    %78 = tpu.strided_load %arg10[%c47, %c0_51] {strides = array<i32: 2, 1>} : memref<544x128xf32, #tpu.memory_space<vmem>>, vector<232x128xf32>
    %79 = arith.truncf %78 : vector<232x128xf32> to vector<232x128xbf16>
    %c9_i32_52 = arith.constant 9 : i32
    %80 = arith.muli %arg1, %c9_i32_52 : i32
    %c3_i32 = arith.constant 3 : i32
    %81 = arith.addi %80, %c3_i32 : i32
    %82 = arith.index_cast %81 : i32 to index
    %c0_53 = arith.constant 0 : index
    %c0_54 = arith.constant 0 : index
    %83 = vector.load %arg5[%82, %c0_53, %c0_54] : memref<18x128x128xbf16, #tpu.memory_space<vmem>>, vector<1x128x128xbf16>
    %84 = vector.shape_cast %83 : vector<1x128x128xbf16> to vector<128x128xbf16>
    %cst_55 = arith.constant dense<0.000000e+00> : vector<232x128xf32>
    %85 = tpu.matmul %79, %84, %cst_55 {dimension_numbers = #tpu.dot_dimension_numbers<[1], [0], [0], [1], [0, 0, 1, 1], [], []>} : vector<232x128xbf16>, vector<128x128xbf16>, vector<232x128xf32> -> vector<232x128xf32>
    %c0_56 = arith.constant 0 : index
    %c0_57 = arith.constant 0 : index
    %86 = vector.load %arg11[%c0_56, %c0_57] : memref<232x128xf32, #tpu.memory_space<vmem>>, vector<232x128xf32>
    %87 = arith.addf %86, %85 : vector<232x128xf32>
    %c0_58 = arith.constant 0 : index
    %c0_59 = arith.constant 0 : index
    %88 = vector.load %arg11[%c0_58, %c0_59] : memref<232x128xf32, #tpu.memory_space<vmem>>, vector<232x128xf32>
    tpu.vector_store %arg11[%c0_58, %c0_59], %87 {strides = array<i32>} : memref<232x128xf32, #tpu.memory_space<vmem>>, vector<232x128xf32>,
    %c48_60 = arith.constant 48 : index
    %c0_61 = arith.constant 0 : index
    %89 = tpu.strided_load %arg10[%c48_60, %c0_61] {strides = array<i32: 2, 1>} : memref<544x128xf32, #tpu.memory_space<vmem>>, vector<232x128xf32>
    %90 = arith.truncf %89 : vector<232x128xf32> to vector<232x128xbf16>
    %c9_i32_62 = arith.constant 9 : i32
    %91 = arith.muli %arg1, %c9_i32_62 : i32
    %c4_i32 = arith.constant 4 : i32
    %92 = arith.addi %91, %c4_i32 : i32
    %93 = arith.index_cast %92 : i32 to index
    %c0_63 = arith.constant 0 : index
    %c0_64 = arith.constant 0 : index
    %94 = vector.load %arg5[%93, %c0_63, %c0_64] : memref<18x128x128xbf16, #tpu.memory_space<vmem>>, vector<1x128x128xbf16>
    %95 = vector.shape_cast %94 : vector<1x128x128xbf16> to vector<128x128xbf16>
    %cst_65 = arith.constant dense<0.000000e+00> : vector<232x128xf32>
    %96 = tpu.matmul %90, %95, %cst_65 {dimension_numbers = #tpu.dot_dimension_numbers<[1], [0], [0], [1], [0, 0, 1, 1], [], []>} : vector<232x128xbf16>, vector<128x128xbf16>, vector<232x128xf32> -> vector<232x128xf32>
    %c0_66 = arith.constant 0 : index
    %c0_67 = arith.constant 0 : index
    %97 = vector.load %arg11[%c0_66, %c0_67] : memref<232x128xf32, #tpu.memory_space<vmem>>, vector<232x128xf32>
    %98 = arith.addf %97, %96 : vector<232x128xf32>
    %c0_68 = arith.constant 0 : index
    %c0_69 = arith.constant 0 : index
    %99 = vector.load %arg11[%c0_68, %c0_69] : memref<232x128xf32, #tpu.memory_space<vmem>>, vector<232x128xf32>
    tpu.vector_store %arg11[%c0_68, %c0_69], %98 {strides = array<i32>} : memref<232x128xf32, #tpu.memory_space<vmem>>, vector<232x128xf32>,
    %c49 = arith.constant 49 : index
    %c0_70 = arith.constant 0 : index
    %100 = tpu.strided_load %arg10[%c49, %c0_70] {strides = array<i32: 2, 1>} : memref<544x128xf32, #tpu.memory_space<vmem>>, vector<232x128xf32>
    %101 = arith.truncf %100 : vector<232x128xf32> to vector<232x128xbf16>
    %c9_i32_71 = arith.constant 9 : i32
    %102 = arith.muli %arg1, %c9_i32_71 : i32
    %c5_i32 = arith.constant 5 : i32
    %103 = arith.addi %102, %c5_i32 : i32
    %104 = arith.index_cast %103 : i32 to index
    %c0_72 = arith.constant 0 : index
    %c0_73 = arith.constant 0 : index
    %105 = vector.load %arg5[%104, %c0_72, %c0_73] : memref<18x128x128xbf16, #tpu.memory_space<vmem>>, vector<1x128x128xbf16>
    %106 = vector.shape_cast %105 : vector<1x128x128xbf16> to vector<128x128xbf16>
    %cst_74 = arith.constant dense<0.000000e+00> : vector<232x128xf32>
    %107 = tpu.matmul %101, %106, %cst_74 {dimension_numbers = #tpu.dot_dimension_numbers<[1], [0], [0], [1], [0, 0, 1, 1], [], []>} : vector<232x128xbf16>, vector<128x128xbf16>, vector<232x128xf32> -> vector<232x128xf32>
    %c0_75 = arith.constant 0 : index
    %c0_76 = arith.constant 0 : index
    %108 = vector.load %arg11[%c0_75, %c0_76] : memref<232x128xf32, #tpu.memory_space<vmem>>, vector<232x128xf32>
    %109 = arith.addf %108, %107 : vector<232x128xf32>
    %c0_77 = arith.constant 0 : index
    %c0_78 = arith.constant 0 : index
    %110 = vector.load %arg11[%c0_77, %c0_78] : memref<232x128xf32, #tpu.memory_space<vmem>>, vector<232x128xf32>
    tpu.vector_store %arg11[%c0_77, %c0_78], %109 {strides = array<i32>} : memref<232x128xf32, #tpu.memory_space<vmem>>, vector<232x128xf32>,
    %c79 = arith.constant 79 : index
    %c0_79 = arith.constant 0 : index
    %111 = tpu.strided_load %arg10[%c79, %c0_79] {strides = array<i32: 2, 1>} : memref<544x128xf32, #tpu.memory_space<vmem>>, vector<232x128xf32>
    %112 = arith.truncf %111 : vector<232x128xf32> to vector<232x128xbf16>
    %c9_i32_80 = arith.constant 9 : i32
    %113 = arith.muli %arg1, %c9_i32_80 : i32
    %c6_i32 = arith.constant 6 : i32
    %114 = arith.addi %113, %c6_i32 : i32
    %115 = arith.index_cast %114 : i32 to index
    %c0_81 = arith.constant 0 : index
    %c0_82 = arith.constant 0 : index
    %116 = vector.load %arg5[%115, %c0_81, %c0_82] : memref<18x128x128xbf16, #tpu.memory_space<vmem>>, vector<1x128x128xbf16>
    %117 = vector.shape_cast %116 : vector<1x128x128xbf16> to vector<128x128xbf16>
    %cst_83 = arith.constant dense<0.000000e+00> : vector<232x128xf32>
    %118 = tpu.matmul %112, %117, %cst_83 {dimension_numbers = #tpu.dot_dimension_numbers<[1], [0], [0], [1], [0, 0, 1, 1], [], []>} : vector<232x128xbf16>, vector<128x128xbf16>, vector<232x128xf32> -> vector<232x128xf32>
    %c0_84 = arith.constant 0 : index
    %c0_85 = arith.constant 0 : index
    %119 = vector.load %arg11[%c0_84, %c0_85] : memref<232x128xf32, #tpu.memory_space<vmem>>, vector<232x128xf32>
    %120 = arith.addf %119, %118 : vector<232x128xf32>
    %c0_86 = arith.constant 0 : index
    %c0_87 = arith.constant 0 : index
    %121 = vector.load %arg11[%c0_86, %c0_87] : memref<232x128xf32, #tpu.memory_space<vmem>>, vector<232x128xf32>
    tpu.vector_store %arg11[%c0_86, %c0_87], %120 {strides = array<i32>} : memref<232x128xf32, #tpu.memory_space<vmem>>, vector<232x128xf32>,
    %c80_88 = arith.constant 80 : index
    %c0_89 = arith.constant 0 : index
    %122 = tpu.strided_load %arg10[%c80_88, %c0_89] {strides = array<i32: 2, 1>} : memref<544x128xf32, #tpu.memory_space<vmem>>, vector<232x128xf32>
    %123 = arith.truncf %122 : vector<232x128xf32> to vector<232x128xbf16>
    %c9_i32_90 = arith.constant 9 : i32
    %124 = arith.muli %arg1, %c9_i32_90 : i32
    %c7_i32 = arith.constant 7 : i32
    %125 = arith.addi %124, %c7_i32 : i32
    %126 = arith.index_cast %125 : i32 to index
    %c0_91 = arith.constant 0 : index
    %c0_92 = arith.constant 0 : index
    %127 = vector.load %arg5[%126, %c0_91, %c0_92] : memref<18x128x128xbf16, #tpu.memory_space<vmem>>, vector<1x128x128xbf16>
    %128 = vector.shape_cast %127 : vector<1x128x128xbf16> to vector<128x128xbf16>
    %cst_93 = arith.constant dense<0.000000e+00> : vector<232x128xf32>
    %129 = tpu.matmul %123, %128, %cst_93 {dimension_numbers = #tpu.dot_dimension_numbers<[1], [0], [0], [1], [0, 0, 1, 1], [], []>} : vector<232x128xbf16>, vector<128x128xbf16>, vector<232x128xf32> -> vector<232x128xf32>
    %c0_94 = arith.constant 0 : index
    %c0_95 = arith.constant 0 : index
    %130 = vector.load %arg11[%c0_94, %c0_95] : memref<232x128xf32, #tpu.memory_space<vmem>>, vector<232x128xf32>
    %131 = arith.addf %130, %129 : vector<232x128xf32>
    %c0_96 = arith.constant 0 : index
    %c0_97 = arith.constant 0 : index
    %132 = vector.load %arg11[%c0_96, %c0_97] : memref<232x128xf32, #tpu.memory_space<vmem>>, vector<232x128xf32>
    tpu.vector_store %arg11[%c0_96, %c0_97], %131 {strides = array<i32>} : memref<232x128xf32, #tpu.memory_space<vmem>>, vector<232x128xf32>,
    %c81 = arith.constant 81 : index
    %c0_98 = arith.constant 0 : index
    %133 = tpu.strided_load %arg10[%c81, %c0_98] {strides = array<i32: 2, 1>} : memref<544x128xf32, #tpu.memory_space<vmem>>, vector<232x128xf32>
    %134 = arith.truncf %133 : vector<232x128xf32> to vector<232x128xbf16>
    %c9_i32_99 = arith.constant 9 : i32
    %135 = arith.muli %arg1, %c9_i32_99 : i32
    %c8_i32 = arith.constant 8 : i32
    %136 = arith.addi %135, %c8_i32 : i32
    %137 = arith.index_cast %136 : i32 to index
    %c0_100 = arith.constant 0 : index
    %c0_101 = arith.constant 0 : index
    %138 = vector.load %arg5[%137, %c0_100, %c0_101] : memref<18x128x128xbf16, #tpu.memory_space<vmem>>, vector<1x128x128xbf16>
    %139 = vector.shape_cast %138 : vector<1x128x128xbf16> to vector<128x128xbf16>
    %cst_102 = arith.constant dense<0.000000e+00> : vector<232x128xf32>
    %140 = tpu.matmul %134, %139, %cst_102 {dimension_numbers = #tpu.dot_dimension_numbers<[1], [0], [0], [1], [0, 0, 1, 1], [], []>} : vector<232x128xbf16>, vector<128x128xbf16>, vector<232x128xf32> -> vector<232x128xf32>
    %c0_103 = arith.constant 0 : index
    %c0_104 = arith.constant 0 : index
    %141 = vector.load %arg11[%c0_103, %c0_104] : memref<232x128xf32, #tpu.memory_space<vmem>>, vector<232x128xf32>
    %142 = arith.addf %141, %140 : vector<232x128xf32>
    %c0_105 = arith.constant 0 : index
    %c0_106 = arith.constant 0 : index
    %143 = vector.load %arg11[%c0_105, %c0_106] : memref<232x128xf32, #tpu.memory_space<vmem>>, vector<232x128xf32>
    tpu.vector_store %arg11[%c0_105, %c0_106], %142 {strides = array<i32>} : memref<232x128xf32, #tpu.memory_space<vmem>>, vector<232x128xf32>,
    %144 = tpu.iota {dimensions = array<i32: 0>} : vector<232x1xi32>
    %c32_i32 = arith.constant 32 : i32
    %c0_i32_107 = arith.constant 0 : i32
    %145 = arith.cmpi eq, %c32_i32, %c0_i32_107 : i32
    %c1_i32_108 = arith.constant 1 : i32
    %146 = arith.select %145, %c1_i32_108, %c32_i32 : i32
    %147 = vector.broadcast %146 : i32 to vector<232x1xi32>
    %148 = arith.remsi %144, %147 : vector<232x1xi32>
    %c0_i32_109 = arith.constant 0 : i32
    %149 = vector.broadcast %c0_i32_109 : i32 to vector<232x1xi32>
    %150 = arith.cmpi ne, %148, %149 : vector<232x1xi32>
    %c0_i32_110 = arith.constant 0 : i32
    %151 = vector.broadcast %c0_i32_110 : i32 to vector<232x1xi32>
    %152 = arith.cmpi slt, %148, %151 : vector<232x1xi32>
    %c0_i32_111 = arith.constant 0 : i32
    %153 = arith.cmpi slt, %146, %c0_i32_111 : i32
    %154 = vector.broadcast %153 : i1 to vector<232x1xi1>
    %155 = vector.broadcast %154 : vector<232x1xi1> to vector<232x1xi1>
    %156 = arith.xori %152, %155 : vector<232x1xi1>
    %157 = arith.andi %156, %150 : vector<232x1xi1>
    %158 = vector.broadcast %146 : i32 to vector<232x1xi32>
    %159 = arith.addi %148, %158 : vector<232x1xi32>
    %160 = arith.select %157, %159, %148 : vector<232x1xi1>, vector<232x1xi32>
    %c8_i32_112 = arith.constant 8 : i32
    %161 = vector.broadcast %c8_i32_112 : i32 to vector<232x1xi32>
    %162 = arith.cmpi slt, %160, %161 : vector<232x1xi32>
    %c0_113 = arith.constant 0 : index
    %c0_114 = arith.constant 0 : index
    %163 = vector.load %arg11[%c0_113, %c0_114] : memref<232x128xf32, #tpu.memory_space<vmem>>, vector<232x128xf32>
    %164 = arith.index_cast %arg1 : i32 to index
    %c0_115 = arith.constant 0 : index
    %c0_116 = arith.constant 0 : index
    %165 = vector.load %arg6[%164, %c0_115, %c0_116] : memref<2x1x128xf32, #tpu.memory_space<vmem>>, vector<1x1x128xf32>
    %166 = vector.shape_cast %165 : vector<1x1x128xf32> to vector<1x128xf32>
    %167 = vector.broadcast %166 : vector<1x128xf32> to vector<232x128xf32>
    %168 = arith.addf %163, %167 : vector<232x128xf32>
    %cst_117 = arith.constant 0.000000e+00 : f32
    %169 = vector.broadcast %cst_117 : f32 to vector<232x128xf32>
    %170 = arith.maximumf %168, %169 : vector<232x128xf32>
    %cst_118 = arith.constant 0.000000e+00 : f32
    %171 = vector.shape_cast %162 : vector<232x1xi1> to vector<232x1xi1>
    %172 = vector.broadcast %171 : vector<232x1xi1> to vector<232x128xi1>
    %173 = vector.broadcast %cst_118 : f32 to vector<232x128xf32>
    %174 = arith.select %172, %170, %173 : vector<232x128xi1>, vector<232x128xf32>
    %cst_119 = arith.constant dense<0.000000e+00> : vector<128xf32>
    %175 = vector.multi_reduction <add>, %174, %cst_119 [0] : vector<232x128xf32> to vector<128xf32>
    %176 = vector.shape_cast %175 : vector<128xf32> to vector<1x128xf32>
    %cst_120 = arith.constant 1.562500e-02 : f32
    %177 = vector.broadcast %cst_120 : f32 to vector<1x128xf32>
    %178 = arith.mulf %176, %177 : vector<1x128xf32>
    %179 = arith.index_cast %arg1 : i32 to index
    %c0_121 = arith.constant 0 : index
    %c0_122 = arith.constant 0 : index
    %180 = vector.load %arg7[%179, %c0_121, %c0_122] : memref<2x128x128xf32, #tpu.memory_space<vmem>>, vector<1x128x128xf32>
    %181 = vector.shape_cast %180 : vector<1x128x128xf32> to vector<128x128xf32>
    %cst_123 = arith.constant dense<0.000000e+00> : vector<1x128xf32>
    %182 = tpu.matmul %178, %181, %cst_123 {dimension_numbers = #tpu.dot_dimension_numbers<[1], [0], [0], [1], [0, 0, 1, 1], [], []>} : vector<1x128xf32>, vector<128x128xf32>, vector<1x128xf32> -> vector<1x128xf32>
    %c0_i32_124 = arith.constant 0 : i32
    %183 = arith.cmpi eq, %arg1, %c0_i32_124 : i32
    %184 = arith.extui %183 : i1 to i32
    %c0_i32_125 = arith.constant 0 : i32
    %185 = arith.cmpi ne, %184, %c0_i32_125 : i32
    scf.if %185 {
      %c0_128 = arith.constant 0 : index
      %c0_129 = arith.constant 0 : index
      %189 = vector.load %arg8[%c0_128, %c0_129] : memref<1x128xf32, #tpu.memory_space<vmem>>, vector<1x128xf32>
      %190 = arith.addf %189, %182 : vector<1x128xf32>
      %c0_130 = arith.constant 0 : index
      %c0_131 = arith.constant 0 : index
      %c0_132 = arith.constant 0 : index
      %191 = vector.load %arg9[%c0_130, %c0_131, %c0_132] : memref<1x1x128xf32, #tpu.memory_space<vmem>>, vector<1x1x128xf32>
      %192 = vector.shape_cast %191 : vector<1x1x128xf32> to vector<1x128xf32>
      %193 = vector.shape_cast %190 : vector<1x128xf32> to vector<1x1x128xf32>
      tpu.vector_store %arg9[%c0_130, %c0_131, %c0_132], %193 {strides = array<i32>} : memref<1x1x128xf32, #tpu.memory_space<vmem>>, vector<1x1x128xf32>,
    } else {
    }
    %c0_i32_126 = arith.constant 0 : i32
    %186 = arith.cmpi ne, %arg1, %c0_i32_126 : i32
    %187 = arith.extui %186 : i1 to i32
    %c0_i32_127 = arith.constant 0 : i32
    %188 = arith.cmpi ne, %187, %c0_i32_127 : i32
    scf.if %188 {
      %c0_128 = arith.constant 0 : index
      %c0_129 = arith.constant 0 : index
      %c0_130 = arith.constant 0 : index
      %189 = vector.load %arg9[%c0_128, %c0_129, %c0_130] : memref<1x1x128xf32, #tpu.memory_space<vmem>>, vector<1x1x128xf32>
      %190 = vector.shape_cast %189 : vector<1x1x128xf32> to vector<1x128xf32>
      %191 = arith.addf %190, %182 : vector<1x128xf32>
      %c0_131 = arith.constant 0 : index
      %c0_132 = arith.constant 0 : index
      %c0_133 = arith.constant 0 : index
      %192 = vector.load %arg9[%c0_131, %c0_132, %c0_133] : memref<1x1x128xf32, #tpu.memory_space<vmem>>, vector<1x1x128xf32>
      %193 = vector.shape_cast %192 : vector<1x1x128xf32> to vector<1x128xf32>
      %194 = vector.shape_cast %191 : vector<1x128xf32> to vector<1x1x128xf32>
      tpu.vector_store %arg9[%c0_131, %c0_132, %c0_133], %194 {strides = array<i32>} : memref<1x1x128xf32, #tpu.memory_space<vmem>>, vector<1x1x128xf32>,
    } else {
    }
    return
  }
  func.func @transform_0(%arg0: i32, %arg1: i32) -> (i32, i32, i32, i32) {
    %c0_i32 = arith.constant 0 : i32
    %c0_i32_0 = arith.constant 0 : i32
    %c0_i32_1 = arith.constant 0 : i32
    return %arg0, %arg1, %c0_i32, %c0_i32_0 : i32, i32, i32, i32
  }
  func.func @transform_1(%arg0: i32, %arg1: i32) -> (i32, i32, i32) {
    %c0_i32 = arith.constant 0 : i32
    %c0_i32_0 = arith.constant 0 : i32
    %c0_i32_1 = arith.constant 0 : i32
    %c0_i32_2 = arith.constant 0 : i32
    return %c0_i32, %c0_i32_0, %c0_i32_1 : i32, i32, i32
  }
  func.func @transform_2(%arg0: i32, %arg1: i32) -> (i32, i32, i32) {
    %c0_i32 = arith.constant 0 : i32
    %c0_i32_0 = arith.constant 0 : i32
    %c0_i32_1 = arith.constant 0 : i32
    %c0_i32_2 = arith.constant 0 : i32
    return %c0_i32, %c0_i32_0, %c0_i32_1 : i32, i32, i32
  }
  func.func @transform_3(%arg0: i32, %arg1: i32) -> (i32, i32, i32) {
    %c0_i32 = arith.constant 0 : i32
    %c0_i32_0 = arith.constant 0 : i32
    %c0_i32_1 = arith.constant 0 : i32
    %c0_i32_2 = arith.constant 0 : i32
    return %c0_i32, %c0_i32_0, %c0_i32_1 : i32, i32, i32
  }
  func.func @transform_4(%arg0: i32, %arg1: i32) -> (i32, i32, i32) {
    %c0_i32 = arith.constant 0 : i32
    %c0_i32_0 = arith.constant 0 : i32
    %c0_i32_1 = arith.constant 0 : i32
    %c0_i32_2 = arith.constant 0 : i32
    return %c0_i32, %c0_i32_0, %c0_i32_1 : i32, i32, i32
  }
  func.func @transform_5(%arg0: i32, %arg1: i32) -> (i32, i32, i32) {
    %c0_i32 = arith.constant 0 : i32
    %c0_i32_0 = arith.constant 0 : i32
    %c0_i32_1 = arith.constant 0 : i32
    %c0_i32_2 = arith.constant 0 : i32
    return %c0_i32, %c0_i32_0, %c0_i32_1 : i32, i32, i32
  }
  func.func @transform_6(%arg0: i32, %arg1: i32) -> (i32, i32) {
    %c0_i32 = arith.constant 0 : i32
    %c0_i32_0 = arith.constant 0 : i32
    %c0_i32_1 = arith.constant 0 : i32
    return %c0_i32, %c0_i32_0 : i32, i32
  }
  func.func @transform_7(%arg0: i32, %arg1: i32) -> (i32, i32, i32) {
    %c0_i32 = arith.constant 0 : i32
    %c0_i32_0 = arith.constant 0 : i32
    %c0_i32_1 = arith.constant 0 : i32
    return %arg0, %c0_i32, %c0_i32_0 : i32, i32, i32
  }
}

</mosaic_0001>

<llo_original>
// kernel: mi_model_forward.1
$region0: #{mi_model_forward.1}
  #allocation0 [shape = 'u32[]', space=smem, size = 0x4, offset = 0x4, fixed_abs, tag = 'smem constant byte address 0x4 - core index']
  #allocation1 [shape = 'u32[144,128]{1,0:T(1,128)}', space=vmem, size = 0x12000, scoped, tag = 'internal scratch']
  #allocation2 [shape = 'f32[544,128]{1,0:T(8,128)}', space=vmem, size = 0x44000, scoped, tag = 'scratch operand']
  #allocation3 [shape = 'f32[232,128]{1,0:T(8,128)}', space=vmem, size = 0x1d000, scoped, tag = 'scratch operand']
  %s0 = inlined_call_operand.vmem [shape: bf16[2,2,256,32], index: 0, kind: input, shape index: {}]
  %s1 = inlined_call_operand.vmem [shape: bf16[2,32,128], index: 1, kind: input, shape index: {}]
  %s2 = inlined_call_operand.vmem [shape: f32[2,1,128], index: 2, kind: input, shape index: {}]
  %s3 = inlined_call_operand.vmem [shape: bf16[18,128,128], index: 3, kind: input, shape index: {}]
  %s4 = inlined_call_operand.vmem [shape: f32[2,1,128], index: 4, kind: input, shape index: {}]
  %s5 = inlined_call_operand.vmem [shape: f32[2,128,128], index: 5, kind: input, shape index: {}]
  %s6 = inlined_call_operand.vmem [shape: f32[1,128], index: 6, kind: input, shape index: {}]
  %s7 = inlined_call_operand.hbm [shape: f32[2,1,128], index: 7, kind: output, shape index: {}]
  %s8 = sld [smem:[#allocation0]]
  $region69: #{mi_model_forward.1} parent=0
    _
  %s10 = ssub.s32 1, %s8
  %s11 = scalar_select 0, %s10, %s8
  $region1: #{mi_model_forward.1} parent=0
    #allocation4 [shape = 'u8[1024]{0}', space=vmem, size = 0x400, scoped, tag = 'output window, operand 0']
    #allocation5 [shape = 's32[2]{0}', space=sflag, size = 0x8, scoped, tag = 'scoped memory for mi_model_forward.1']
    %12 = vsyncpa [#allocation5], 0
    %s13 = scalar_lea.sflag [#allocation5], 1
    %14 = vsyncpa %s13, 0
    loop: start=0, step=1, limit=6
    $region2: #{mi_model_forward.1} parent=1 // loop_pre_header
      _
    $region3: #{mi_model_forward.1} parent=1 // loop_header
      %s16 = sphi 0, %s20
      %p17 = scmp.ge.s32.totalorder %s16, 6
      %s23 = sphi 0, %s35
      %s24 = sphi 0, %s31
      %s25 = sphi 0, %s23
      %s26 = sphi 0, %s24
      %s27 = sphi 0, %s25
      %s28 = sphi 0, %s26
      %s40 = sphi 0, %s42
      %s43 = sphi 0, %s40
      %s44 = sphi 0, %s43
      %s60 = sphi 0, %s44
      %s64 = sphi 0, %s64
      %s66 = sphi 0, %s64
      %s67 = sphi 0, %s66
      %s81 = sphi 0, %s67
      %s85 = sphi 0, %s85
      %s87 = sphi 0, %s85
      %s88 = sphi 0, %s87
      %s102 = sphi 0, %s88
      %s106 = sphi 0, %s106
      %s108 = sphi 0, %s106
      %s109 = sphi 0, %s108
      %s123 = sphi 0, %s109
      %s127 = sphi 0, %s127
      %s129 = sphi 0, %s127
      %s130 = sphi 0, %s129
      %s144 = sphi 0, %s130
      %s148 = sphi 0, %s148
      %s150 = sphi 0, %s148
      %s151 = sphi 0, %s150
      %s165 = sphi 0, %s151
      %s169 = sphi 0, %s169
      %s171 = sphi 0, %s169
      %s172 = sphi 0, %s171
      %s186 = sphi 0, %s172
      %s192 = sphi 0, %s194
      %s195 = sphi 0, %s192
      %s196 = sphi 0, %s195
      %s212 = sphi 0, %s196
    $region4: #{mi_model_forward.1} parent=1 // loop_header_branch
      %19 = sbr.rel (%p17) target = $region8
    $region5: #{mi_model_forward.1} parent=1 // loop_body
      %s21 = ssub.s32 %s16, 1
      %s22 = ssub.s32 %s16, 2
      %s29 = sadd.s32 1, %s24
      %p30 = scmp.ge.s32.totalorder %s29, 2
      %s31 = scalar_select %p30, 0, %s29
      %s32 = sadd.s32 1, %s23
      %s33 = scalar_select %p30, %s32, %s23
      %p34 = scmp.ge.s32.totalorder %s33, 2
      %s35 = scalar_select %p34, 0, %s33
      %s36 = ssub.s32 %s23, %s35
      %s37 = ssub.s32 %s24, %s31
      %s38 = sor.u32 %s36, %s37
      %p39 = scmp.eq.s32.totalorder %s38, 0
      %s41 = sadd.s32 %s40, 1
      %s42 = scalar_select %p39, %s40, %s41
      %p45 = pneg %p39
      %p46 = scmp.eq.s32.totalorder %s16, 3
      %p47 = por %p45, %p46
      %p48 = scmp.ne.s32.totalorder %s40, %s43
      %p49 = scmp.eq.s32.totalorder %s16, 0
      %p50 = por %p48, %p49
      %p51 = scmp.ne.s32.totalorder %s40, %s43
      %p52 = scmp.eq.s32.totalorder %s21, 3
      %p53 = por %p51, %p52
      %p54 = scmp.ne.s32.totalorder %s43, %s44
      %p55 = scmp.eq.s32.totalorder %s21, 0
      %p56 = por %p54, %p55
      %p57 = scmp.ne.s32.totalorder %s43, %s44
      %p58 = scmp.eq.s32.totalorder %s22, 3
      %p59 = por %p57, %p58
      %p61 = scmp.ne.s32.totalorder %s44, %s60
      %p62 = scmp.eq.s32.totalorder %s22, 0
      %p63 = por %p61, %p62
      %s65 = sadd.s32 %s64, 1
      %p68 = scmp.eq.s32.totalorder %s16, 3
      %p69 = scmp.ne.s32.totalorder %s64, %s66
      %p70 = scmp.eq.s32.totalorder %s16, 0
      %p71 = por %p69, %p70
      %p72 = scmp.ne.s32.totalorder %s64, %s66
      %p73 = scmp.eq.s32.totalorder %s21, 3
      %p74 = por %p72, %p73
      %p75 = scmp.ne.s32.totalorder %s66, %s67
      %p76 = scmp.eq.s32.totalorder %s21, 0
      %p77 = por %p75, %p76
      %p78 = scmp.ne.s32.totalorder %s66, %s67
      %p79 = scmp.eq.s32.totalorder %s22, 3
      %p80 = por %p78, %p79
      %p82 = scmp.ne.s32.totalorder %s67, %s81
      %p83 = scmp.eq.s32.totalorder %s22, 0
      %p84 = por %p82, %p83
      %s86 = sadd.s32 %s85, 1
      %p89 = scmp.eq.s32.totalorder %s16, 3
      %p90 = scmp.ne.s32.totalorder %s85, %s87
      %p91 = scmp.eq.s32.totalorder %s16, 0
      %p92 = por %p90, %p91
      %p93 = scmp.ne.s32.totalorder %s85, %s87
      %p94 = scmp.eq.s32.totalorder %s21, 3
      %p95 = por %p93, %p94
      %p96 = scmp.ne.s32.totalorder %s87, %s88
      %p97 = scmp.eq.s32.totalorder %s21, 0
      %p98 = por %p96, %p97
      %p99 = scmp.ne.s32.totalorder %s87, %s88
      %p100 = scmp.eq.s32.totalorder %s22, 3
      %p101 = por %p99, %p100
      %p103 = scmp.ne.s32.totalorder %s88, %s102
      %p104 = scmp.eq.s32.totalorder %s22, 0
      %p105 = por %p103, %p104
      %s107 = sadd.s32 %s106, 1
      %p110 = scmp.eq.s32.totalorder %s16, 3
      %p111 = scmp.ne.s32.totalorder %s106, %s108
      %p112 = scmp.eq.s32.totalorder %s16, 0
      %p113 = por %p111, %p112
      %p114 = scmp.ne.s32.totalorder %s106, %s108
      %p115 = scmp.eq.s32.totalorder %s21, 3
      %p116 = por %p114, %p115
      %p117 = scmp.ne.s32.totalorder %s108, %s109
      %p118 = scmp.eq.s32.totalorder %s21, 0
      %p119 = por %p117, %p118
      %p120 = scmp.ne.s32.totalorder %s108, %s109
      %p121 = scmp.eq.s32.totalorder %s22, 3
      %p122 = por %p120, %p121
      %p124 = scmp.ne.s32.totalorder %s109, %s123
      %p125 = scmp.eq.s32.totalorder %s22, 0
      %p126 = por %p124, %p125
      %s128 = sadd.s32 %s127, 1
      %p131 = scmp.eq.s32.totalorder %s16, 3
      %p132 = scmp.ne.s32.totalorder %s127, %s129
      %p133 = scmp.eq.s32.totalorder %s16, 0
      %p134 = por %p132, %p133
      %p135 = scmp.ne.s32.totalorder %s127, %s129
      %p136 = scmp.eq.s32.totalorder %s21, 3
      %p137 = por %p135, %p136
      %p138 = scmp.ne.s32.totalorder %s129, %s130
      %p139 = scmp.eq.s32.totalorder %s21, 0
      %p140 = por %p138, %p139
      %p141 = scmp.ne.s32.totalorder %s129, %s130
      %p142 = scmp.eq.s32.totalorder %s22, 3
      %p143 = por %p141, %p142
      %p145 = scmp.ne.s32.totalorder %s130, %s144
      %p146 = scmp.eq.s32.totalorder %s22, 0
      %p147 = por %p145, %p146
      %s149 = sadd.s32 %s148, 1
      %p152 = scmp.eq.s32.totalorder %s16, 3
      %p153 = scmp.ne.s32.totalorder %s148, %s150
      %p154 = scmp.eq.s32.totalorder %s16, 0
      %p155 = por %p153, %p154
      %p156 = scmp.ne.s32.totalorder %s148, %s150
      %p157 = scmp.eq.s32.totalorder %s21, 3
      %p158 = por %p156, %p157
      %p159 = scmp.ne.s32.totalorder %s150, %s151
      %p160 = scmp.eq.s32.totalorder %s21, 0
      %p161 = por %p159, %p160
      %p162 = scmp.ne.s32.totalorder %s150, %s151
      %p163 = scmp.eq.s32.totalorder %s22, 3
      %p164 = por %p162, %p163
      %p166 = scmp.ne.s32.totalorder %s151, %s165
      %p167 = scmp.eq.s32.totalorder %s22, 0
      %p168 = por %p166, %p167
      %s170 = sadd.s32 %s169, 1
      %p173 = scmp.eq.s32.totalorder %s16, 3
      %p174 = scmp.ne.s32.totalorder %s169, %s171
      %p175 = scmp.eq.s32.totalorder %s16, 0
      %p176 = por %p174, %p175
      %p177 = scmp.ne.s32.totalorder %s169, %s171
      %p178 = scmp.eq.s32.totalorder %s21, 3
      %p179 = por %p177, %p178
      %p180 = scmp.ne.s32.totalorder %s171, %s172
      %p181 = scmp.eq.s32.totalorder %s21, 0
      %p182 = por %p180, %p181
      %p183 = scmp.ne.s32.totalorder %s171, %s172
      %p184 = scmp.eq.s32.totalorder %s22, 3
      %p185 = por %p183, %p184
      %p187 = scmp.ne.s32.totalorder %s172, %s186
      %p188 = scmp.eq.s32.totalorder %s22, 0
      %p189 = por %p187, %p188
      %s190 = ssub.s32 %s23, %s35
      %p191 = scmp.eq.s32.totalorder %s190, 0
      %s193 = sadd.s32 %s192, 1
      %s194 = scalar_select %p191, %s192, %s193
      %p197 = pneg %p191
      %p198 = scmp.eq.s32.totalorder %s16, 3
      %p199 = por %p197, %p198
      %p200 = scmp.ne.s32.totalorder %s192, %s195
      %p201 = scmp.eq.s32.totalorder %s16, 0
      %p202 = por %p200, %p201
      %p203 = scmp.ne.s32.totalorder %s192, %s195
      %p204 = scmp.eq.s32.totalorder %s21, 3
      %p205 = por %p203, %p204
      %p206 = scmp.ne.s32.totalorder %s195, %s196
      %p207 = scmp.eq.s32.totalorder %s21, 0
      %p208 = por %p206, %p207
      %p209 = scmp.ne.s32.totalorder %s195, %s196
      %p210 = scmp.eq.s32.totalorder %s22, 3
      %p211 = por %p209, %p210
      %p213 = scmp.ne.s32.totalorder %s196, %s212
      %p214 = scmp.eq.s32.totalorder %s22, 0
      %p215 = por %p213, %p214
      %p216 = scmp.le.s32.totalorder 1, %s16
      %p217 = scmp.lt.s32.totalorder %s16, 5
      %p218 = pnand %p216, %p217
      %p219 = pneg %p218
      // Predicated region
      $region9: #{mi_model_forward.1} parent=5 // pred_check
        _
      $region10: #{mi_model_forward.1} parent=5 // pred_check_branch
        %221 = sbr.rel (%p218) target = $region12
      $region11: #{mi_model_forward.1} parent=5 // pred_region
        %s222 = ssub.s32 %s16, 1
        // Predicated region
        $region13: #{mi_model_forward.1} parent=11 // pred_check
          %p223 = pneg %p77
        $region14: #{mi_model_forward.1} parent=11 // pred_check_branch
          %225 = sbr.rel (%p223) target = $region16
        $region15: #{mi_model_forward.1} parent=11 // pred_region
          _
        $region16: #{mi_model_forward.1} parent=11 // pred_fallthru
          _
        // Predicated region
        $region17: #{mi_model_forward.1} parent=11 // pred_check
          %p226 = pneg %p98
        $region18: #{mi_model_forward.1} parent=11 // pred_check_branch
          %228 = sbr.rel (%p226) target = $region20
        $region19: #{mi_model_forward.1} parent=11 // pred_region
          _
        $region20: #{mi_model_forward.1} parent=11 // pred_fallthru
          _
        // Predicated region
        $region21: #{mi_model_forward.1} parent=11 // pred_check
          %p229 = pneg %p119
        $region22: #{mi_model_forward.1} parent=11 // pred_check_branch
          %231 = sbr.rel (%p229) target = $region24
        $region23: #{mi_model_forward.1} parent=11 // pred_region
          _
        $region24: #{mi_model_forward.1} parent=11 // pred_fallthru
          _
        // Predicated region
        $region25: #{mi_model_forward.1} parent=11 // pred_check
          %p232 = pneg %p140
        $region26: #{mi_model_forward.1} parent=11 // pred_check_branch
          %234 = sbr.rel (%p232) target = $region28
        $region27: #{mi_model_forward.1} parent=11 // pred_region
          _
        $region28: #{mi_model_forward.1} parent=11 // pred_fallthru
          _
        // Predicated region
        $region29: #{mi_model_forward.1} parent=11 // pred_check
          %p235 = pneg %p161
        $region30: #{mi_model_forward.1} parent=11 // pred_check_branch
          %237 = sbr.rel (%p235) target = $region32
        $region31: #{mi_model_forward.1} parent=11 // pred_region
          _
        $region32: #{mi_model_forward.1} parent=11 // pred_fallthru
          _
        // Predicated region
        $region33: #{mi_model_forward.1} parent=11 // pred_check
          %p238 = pneg %p182
        $region34: #{mi_model_forward.1} parent=11 // pred_check_branch
          %240 = sbr.rel (%p238) target = $region36
        $region35: #{mi_model_forward.1} parent=11 // pred_region
          _
        $region36: #{mi_model_forward.1} parent=11 // pred_fallthru
          _
      $region12: #{mi_model_forward.1} parent=5 // pred_fallthru
        _
      %p241 = scmp.lt.s32.totalorder %s16, 4
      // Predicated region
      $region37: #{mi_model_forward.1} parent=5 // pred_check
        %p242 = pneg %p241
      $region38: #{mi_model_forward.1} parent=5 // pred_check_branch
        %244 = sbr.rel (%p242) target = $region40
      $region39: #{mi_model_forward.1} parent=5 // pred_region
        // Predicated region
        $region41: #{mi_model_forward.1} parent=39 // pred_check
          %p245 = pneg %p50
        $region42: #{mi_model_forward.1} parent=39 // pred_check_branch
          %247 = sbr.rel (%p245) target = $region44
        $region43: #{mi_model_forward.1} parent=39 // pred_region
          %p248 = scmp.lt.s32.totalorder %s23, 1
          %s249 = scalar_select %p248, %s23, 1
          %p250 = scmp.lt.s32.totalorder %s24, 1
          %s251 = scalar_select %p250, %s24, 1
          %s252 = smul.addr %s251, 32
          %s253 = smul.addr %s249, 64
          %s254 = sadd.s32 %s252, %s253
          %s255 = smul.addr %s254, 4
          %s256 = scalar_lea.vmem %s0, %s255
        $region44: #{mi_model_forward.1} parent=39 // pred_fallthru
          _
      $region40: #{mi_model_forward.1} parent=5 // pred_fallthru
        _
      %p257 = scmp.le.s32.totalorder 1, %s16
      %p258 = scmp.lt.s32.totalorder %s16, 5
      %p259 = pnand %p257, %p258
      %p260 = pneg %p259
      // Predicated region
      $region45: #{mi_model_forward.1} parent=5 // pred_check
        _
      $region46: #{mi_model_forward.1} parent=5 // pred_check_branch
        %262 = sbr.rel (%p259) target = $region48
      $region47: #{mi_model_forward.1} parent=5 // pred_region
        %s263 = ssub.s32 %s16, 1
        %p264 = scmp.lt.s32.totalorder %s25, 1
        %s265 = scalar_select %p264, %s25, 1
        %p266 = scmp.lt.s32.totalorder %s26, 1
        %s267 = scalar_select %p266, %s26, 1
        %s268 = smul.addr %s267, 32
        %s269 = smul.addr %s265, 64
        %s270 = sadd.s32 %s268, %s269
        %s271 = smul.addr %s270, 4
        %s272 = scalar_lea.vmem %s0, %s271
        %p273 = pneg %p56
        %p274 = pneg %p53
        %p275 = pneg %p77
        %p276 = pneg %p74
        %p277 = pneg %p98
        %p278 = pneg %p95
        %p279 = pneg %p119
        %p280 = pneg %p116
        %p281 = pneg %p140
        %p282 = pneg %p137
        %p283 = pneg %p161
        %p284 = pneg %p158
        %p285 = pneg %p182
        %p286 = pneg %p179
        %p287 = pneg %p208
        %p288 = pneg %p205
        %s289 = sand.u32 %s195, 1
        %s290 = scalar_lea.sflag [#allocation5], %s289
        %s291 = sand.u32 %s195, 1
        %s292 = scalar_lea.vmem [#allocation4], %s291
        %p293 = scmp.lt.s32.totalorder %s25, 1
        %s294 = scalar_select %p293, %s25, 1
        %p295 = scmp.lt.s32.totalorder %s26, 1
        %s296 = scalar_select %p295, %s26, 1
        %s297 = smul.addr %s296, 32
        %s298 = smul.addr %s294, 64
        %s299 = sadd.s32 %s297, %s298
        %s300 = smul.addr %s299, 4
        %s301 = scalar_lea.vmem %s0, %s300
        %v303 = vld [vmem:[%s301] sm:$0xf]
        %v304 = vld [vmem:[%s301 + $0x4] sm:$0xf]
        %v305 = vld [vmem:[%s301 + $0x8] sm:$0xf]
        %v306 = vld [vmem:[%s301 + $0xc] sm:$0xf]
        %v307 = vld [vmem:[%s301 + $0x10] sm:$0xf]
        %v308 = vld [vmem:[%s301 + $0x14] sm:$0xf]
        %v309 = vld [vmem:[%s301 + $0x18] sm:$0xf]
        %v310 = vld [vmem:[%s301 + $0x1c] sm:$0xf]
        %v311 = vld [vmem:[%s301 + $0x20] sm:$0xf]
        %v312 = vld [vmem:[%s301 + $0x24] sm:$0xf]
        %v313 = vld [vmem:[%s301 + $0x28] sm:$0xf]
        %v314 = vld [vmem:[%s301 + $0x2c] sm:$0xf]
        %v315 = vld [vmem:[%s301 + $0x30] sm:$0xf]
        %v316 = vld [vmem:[%s301 + $0x34] sm:$0xf]
        %v317 = vld [vmem:[%s301 + $0x38] sm:$0xf]
        %v318 = vld [vmem:[%s301 + $0x3c] sm:$0xf]
        %v319 = vld [vmem:[%s301 + $0x40] sm:$0xf]
        %v320 = vld [vmem:[%s301 + $0x44] sm:$0xf]
        %v321 = vld [vmem:[%s301 + $0x48] sm:$0xf]
        %v322 = vld [vmem:[%s301 + $0x4c] sm:$0xf]
        %v323 = vld [vmem:[%s301 + $0x50] sm:$0xf]
        %v324 = vld [vmem:[%s301 + $0x54] sm:$0xf]
        %v325 = vld [vmem:[%s301 + $0x58] sm:$0xf]
        %v326 = vld [vmem:[%s301 + $0x5c] sm:$0xf]
        %v327 = vld [vmem:[%s301 + $0x60] sm:$0xf]
        %v328 = vld [vmem:[%s301 + $0x64] sm:$0xf]
        %v329 = vld [vmem:[%s301 + $0x68] sm:$0xf]
        %v330 = vld [vmem:[%s301 + $0x6c] sm:$0xf]
        %v331 = vld [vmem:[%s301 + $0x70] sm:$0xf]
        %v332 = vld [vmem:[%s301 + $0x74] sm:$0xf]
        %v333 = vld [vmem:[%s301 + $0x78] sm:$0xf]
        %v334 = vld [vmem:[%s301 + $0x7c] sm:$0xf]
        %s335 = smul.u32 %s26, 4
        %s336 = smul.addr %s335, 4
        %s337 = scalar_lea.vmem %s1, %s336
        %v338 = vld [vmem:[%s337] sm:$0xf]
        %v339 = vld [vmem:[%s337 + $0x4] sm:$0xf]
        %v340 = vld [vmem:[%s337 + $0x8] sm:$0xf]
        %v341 = vld [vmem:[%s337 + $0xc] sm:$0xf]
        %s342 = scalar_lea.vmem %s2, %s26
        %v343 = vld [vmem:[%s342] sm:$0x1]
        %v345 = vlaneseq
        %v346 = vshrl.u32 %v345, 7
        %v347 = vsub.s32 0, %v346
        %v348 = vrot.slane %v343, %v347
        %v382 = vunpack.c.l.b16 %v303
        %v383 = vunpack.c.l.b16 %v304
        %v384 = vunpack.c.l.b16 %v305
        %v385 = vunpack.c.l.b16 %v306
        %v386 = vunpack.c.l.b16 %v307
        %v387 = vunpack.c.l.b16 %v308
        %v388 = vunpack.c.l.b16 %v309
        %v389 = vunpack.c.l.b16 %v310
        %v390 = vunpack.c.l.b16 %v311
        %v391 = vunpack.c.l.b16 %v312
        %v392 = vunpack.c.l.b16 %v313
        %v393 = vunpack.c.l.b16 %v314
        %v394 = vunpack.c.l.b16 %v315
        %v395 = vunpack.c.l.b16 %v316
        %v396 = vunpack.c.l.b16 %v317
        %v397 = vunpack.c.l.b16 %v318
        %v398 = vunpack.c.l.b16 %v319
        %v399 = vunpack.c.l.b16 %v320
        %v400 = vunpack.c.l.b16 %v321
        %v401 = vunpack.c.l.b16 %v322
        %v402 = vunpack.c.l.b16 %v323
        %v403 = vunpack.c.l.b16 %v324
        %v404 = vunpack.c.l.b16 %v325
        %v405 = vunpack.c.l.b16 %v326
        %v406 = vunpack.c.l.b16 %v327
        %v407 = vunpack.c.l.b16 %v328
        %v408 = vunpack.c.l.b16 %v329
        %v409 = vunpack.c.l.b16 %v330
        %v410 = vunpack.c.l.b16 %v331
        %v411 = vunpack.c.l.b16 %v332
        %v412 = vunpack.c.l.b16 %v333
        %v413 = vunpack.c.l.b16 %v334
        %v414 = vpack.c.b16 %v383, %v382
        %v415 = vpack.c.b16 %v385, %v384
        %v416 = vpack.c.b16 %v387, %v386
        %v417 = vpack.c.b16 %v389, %v388
        %v418 = vpack.c.b16 %v391, %v390
        %v419 = vpack.c.b16 %v393, %v392
        %v420 = vpack.c.b16 %v395, %v394
        %v421 = vpack.c.b16 %v397, %v396
        %v422 = vpack.c.b16 %v399, %v398
        %v423 = vpack.c.b16 %v401, %v400
        %v424 = vpack.c.b16 %v403, %v402
        %v425 = vpack.c.b16 %v405, %v404
        %v426 = vpack.c.b16 %v407, %v406
        %v427 = vpack.c.b16 %v409, %v408
        %v428 = vpack.c.b16 %v411, %v410
        %v429 = vpack.c.b16 %v413, %v412
        %v434 = vunpack.c.l.b16 %v338
        %v435 = vunpack.c.l.b16 %v339
        %v436 = vunpack.c.l.b16 %v340
        %v437 = vunpack.c.l.b16 %v341
        %v438 = vpack.c.b16 %v435, %v434
        %v439 = vpack.c.b16 %v437, %v436
        %vm442 = vcmask 261120
        %v444 = vsel %vm442, %v414, 0
        %v447 = vsel %vm442, %v415, 0
        %v450 = vsel %vm442, %v416, 0
        %v453 = vsel %vm442, %v417, 0
        %v456 = vsel %vm442, %v418, 0
        %v459 = vsel %vm442, %v419, 0
        %v462 = vsel %vm442, %v420, 0
        %v465 = vsel %vm442, %v421, 0
        %v468 = vsel %vm442, %v422, 0
        %v471 = vsel %vm442, %v423, 0
        %v474 = vsel %vm442, %v424, 0
        %v477 = vsel %vm442, %v425, 0
        %v480 = vsel %vm442, %v426, 0
        %v483 = vsel %vm442, %v427, 0
        %v486 = vsel %vm442, %v428, 0
        %v489 = vsel %vm442, %v429, 0
        %491 = vmatprep.subr.bf16.mxu0 0
        %492 = vmatpush1.bf16.msra.mxu0 0
        %493 = vmatprep.subr.bf16.mxu0 0
        %494 = vmatpush1.bf16.msra.mxu0 0
        %495 = vmatprep.subr.bf16.mxu0 0
        %496 = vmatpush1.bf16.msra.mxu0 0
        %497 = vmatprep.subr.bf16.mxu0 0
        %498 = vmatpush1.bf16.msra.mxu0 0
        %499 = vmatprep.subr.bf16.mxu0 0
        %500 = vmatpush1.bf16.msra.mxu0 0
        %501 = vmatprep.subr.bf16.mxu0 0
        %502 = vmatpush1.bf16.msra.mxu0 0
        %503 = vmatprep.subr.bf16.mxu0 0
        %504 = vmatpush1.bf16.msra.mxu0 %v439
        %505 = vmatprep.subr.bf16.mxu0 0
        %506 = vmatpush1.bf16.msra.mxu0 %v438
        %507 = vmatprep.subr.bf16.mxu0 0
        %508 = vmatpush2.bf16.msra.mxu0 0
        %509 = vmatprep.subr.bf16.mxu0 0
        %510 = vmatpush2.bf16.msra.mxu0 0
        %511 = vmatprep.subr.bf16.mxu0 0
        %512 = vmatpush2.bf16.msra.mxu0 0
        %513 = vmatprep.subr.bf16.mxu0 0
        %514 = vmatpush2.bf16.msra.mxu0 0
        %515 = vmatprep.subr.bf16.mxu0 0
        %516 = vmatpush2.bf16.msra.mxu0 0
        %517 = vmatprep.subr.bf16.mxu0 0
        %518 = vmatpush2.bf16.msra.mxu0 0
        %519 = vmatprep.subr.bf16.mxu0 0
        %520 = vmatpush2.bf16.msra.mxu0 0
        %521 = vmatprep.subr.bf16.mxu0 0
        %522 = vmatpush2.bf16.msra.mxu0 0
        %523 = vmatprep.mubr.bf16.mxu0 0
        %524 = vmatmul.mubr.bf16.gmra.mxu0 %v444
        %v525 = vpop.f32.mrf.mxu0
        %v526 = vadd.f32 %v348, %v525
        %v527 = vpop.f32.mrf.mxu0
        %v528 = vpop.f32.mrf.mxu0
        %v529 = vadd.f32 %v348, %v528
        %v530 = vpop.f32.mrf.mxu0
        %531 = vmatprep.mubr.bf16.mxu0 0
        %532 = vmatmul.mubr.bf16.gmra.mxu0 %v447
        %v533 = vpop.f32.mrf.mxu0
        %v534 = vadd.f32 %v348, %v533
        %v535 = vpop.f32.mrf.mxu0
        %v536 = vpop.f32.mrf.mxu0
        %v537 = vadd.f32 %v348, %v536
        %v538 = vpop.f32.mrf.mxu0
        %539 = vmatprep.mubr.bf16.mxu0 0
        %540 = vmatmul.mubr.bf16.gmra.mxu0 %v450
        %v541 = vpop.f32.mrf.mxu0
        %v542 = vadd.f32 %v348, %v541
        %v543 = vpop.f32.mrf.mxu0
        %v544 = vpop.f32.mrf.mxu0
        %v545 = vadd.f32 %v348, %v544
        %v546 = vpop.f32.mrf.mxu0
        %547 = vmatprep.mubr.bf16.mxu0 0
        %548 = vmatmul.mubr.bf16.gmra.mxu0 %v453
        %v549 = vpop.f32.mrf.mxu0
        %v550 = vadd.f32 %v348, %v549
        %v551 = vpop.f32.mrf.mxu0
        %v552 = vpop.f32.mrf.mxu0
        %v553 = vadd.f32 %v348, %v552
        %v554 = vpop.f32.mrf.mxu0
        %555 = vmatprep.mubr.bf16.mxu0 0
        %556 = vmatmul.mubr.bf16.gmra.mxu0 %v456
        %v557 = vpop.f32.mrf.mxu0
        %v558 = vadd.f32 %v348, %v557
        %v559 = vpop.f32.mrf.mxu0
        %v560 = vpop.f32.mrf.mxu0
        %v561 = vadd.f32 %v348, %v560
        %v562 = vpop.f32.mrf.mxu0
        %563 = vmatprep.mubr.bf16.mxu0 0
        %564 = vmatmul.mubr.bf16.gmra.mxu0 %v459
        %v565 = vpop.f32.mrf.mxu0
        %v566 = vadd.f32 %v348, %v565
        %v567 = vpop.f32.mrf.mxu0
        %v568 = vpop.f32.mrf.mxu0
        %v569 = vadd.f32 %v348, %v568
        %v570 = vpop.f32.mrf.mxu0
        %571 = vmatprep.mubr.bf16.mxu0 0
        %572 = vmatmul.mubr.bf16.gmra.mxu0 %v462
        %v573 = vpop.f32.mrf.mxu0
        %v574 = vadd.f32 %v348, %v573
        %v575 = vpop.f32.mrf.mxu0
        %v576 = vpop.f32.mrf.mxu0
        %v577 = vadd.f32 %v348, %v576
        %v578 = vpop.f32.mrf.mxu0
        %579 = vmatprep.mubr.bf16.mxu0 0
        %580 = vmatmul.mubr.bf16.gmra.mxu0 %v465
        %v581 = vpop.f32.mrf.mxu0
        %v582 = vadd.f32 %v348, %v581
        %v583 = vpop.f32.mrf.mxu0
        %v584 = vpop.f32.mrf.mxu0
        %v585 = vadd.f32 %v348, %v584
        %v586 = vpop.f32.mrf.mxu0
        %587 = vmatprep.mubr.bf16.mxu0 0
        %588 = vmatmul.mubr.bf16.gmra.mxu0 %v468
        %v589 = vpop.f32.mrf.mxu0
        %v590 = vadd.f32 %v348, %v589
        %v591 = vpop.f32.mrf.mxu0
        %v592 = vpop.f32.mrf.mxu0
        %v593 = vadd.f32 %v348, %v592
        %v594 = vpop.f32.mrf.mxu0
        %595 = vmatprep.mubr.bf16.mxu0 0
        %596 = vmatmul.mubr.bf16.gmra.mxu0 %v471
        %v597 = vpop.f32.mrf.mxu0
        %v598 = vadd.f32 %v348, %v597
        %v599 = vpop.f32.mrf.mxu0
        %v600 = vpop.f32.mrf.mxu0
        %v601 = vadd.f32 %v348, %v600
        %v602 = vpop.f32.mrf.mxu0
        %603 = vmatprep.mubr.bf16.mxu0 0
        %604 = vmatmul.mubr.bf16.gmra.mxu0 %v474
        %v605 = vpop.f32.mrf.mxu0
        %v606 = vadd.f32 %v348, %v605
        %v607 = vpop.f32.mrf.mxu0
        %v608 = vpop.f32.mrf.mxu0
        %v609 = vadd.f32 %v348, %v608
        %v610 = vpop.f32.mrf.mxu0
        %611 = vmatprep.mubr.bf16.mxu0 0
        %612 = vmatmul.mubr.bf16.gmra.mxu0 %v477
        %v613 = vpop.f32.mrf.mxu0
        %v614 = vadd.f32 %v348, %v613
        %v615 = vpop.f32.mrf.mxu0
        %v616 = vpop.f32.mrf.mxu0
        %v617 = vadd.f32 %v348, %v616
        %v618 = vpop.f32.mrf.mxu0
        %619 = vmatprep.mubr.bf16.mxu0 0
        %620 = vmatmul.mubr.bf16.gmra.mxu0 %v480
        %v621 = vpop.f32.mrf.mxu0
        %v622 = vadd.f32 %v348, %v621
        %v623 = vpop.f32.mrf.mxu0
        %v624 = vpop.f32.mrf.mxu0
        %v625 = vadd.f32 %v348, %v624
        %v626 = vpop.f32.mrf.mxu0
        %627 = vmatprep.mubr.bf16.mxu0 0
        %628 = vmatmul.mubr.bf16.gmra.mxu0 %v483
        %v629 = vpop.f32.mrf.mxu0
        %v630 = vadd.f32 %v348, %v629
        %v631 = vpop.f32.mrf.mxu0
        %v632 = vpop.f32.mrf.mxu0
        %v633 = vadd.f32 %v348, %v632
        %v634 = vpop.f32.mrf.mxu0
        %635 = vmatprep.mubr.bf16.mxu0 0
        %636 = vmatmul.mubr.bf16.gmra.mxu0 %v486
        %v637 = vpop.f32.mrf.mxu0
        %v638 = vadd.f32 %v348, %v637
        %v639 = vpop.f32.mrf.mxu0
        %v640 = vpop.f32.mrf.mxu0
        %v641 = vadd.f32 %v348, %v640
        %v642 = vpop.f32.mrf.mxu0
        %643 = vmatprep.mubr.bf16.mxu0 0
        %644 = vmatmul.mubr.bf16.gmra.mxu0 %v489
        %v645 = vpop.f32.mrf.mxu0
        %v646 = vadd.f32 %v348, %v645
        %v647 = vpop.f32.mrf.mxu0
        %v648 = vpop.f32.mrf.mxu0
        %v649 = vadd.f32 %v348, %v648
        %v650 = vpop.f32.mrf.mxu0
        %651 = vdwg.mxu0
        %v652 = vmax.f32 %v526, 0.0
        %v653 = vmax.f32 %v529, 0.0
        %v654 = vmax.f32 %v534, 0.0
        %v655 = vmax.f32 %v537, 0.0
        %v656 = vmax.f32 %v542, 0.0
        %v657 = vmax.f32 %v545, 0.0
        %v658 = vmax.f32 %v550, 0.0
        %v659 = vmax.f32 %v553, 0.0
        %v660 = vmax.f32 %v558, 0.0
        %v661 = vmax.f32 %v561, 0.0
        %v662 = vmax.f32 %v566, 0.0
        %v663 = vmax.f32 %v569, 0.0
        %v664 = vmax.f32 %v574, 0.0
        %v665 = vmax.f32 %v577, 0.0
        %v666 = vmax.f32 %v582, 0.0
        %v667 = vmax.f32 %v585, 0.0
        %v668 = vmax.f32 %v590, 0.0
        %v669 = vmax.f32 %v593, 0.0
        %v670 = vmax.f32 %v598, 0.0
        %v671 = vmax.f32 %v601, 0.0
        %v672 = vmax.f32 %v606, 0.0
        %v673 = vmax.f32 %v609, 0.0
        %v674 = vmax.f32 %v614, 0.0
        %v675 = vmax.f32 %v617, 0.0
        %v676 = vmax.f32 %v622, 0.0
        %v677 = vmax.f32 %v625, 0.0
        %v678 = vmax.f32 %v630, 0.0
        %v679 = vmax.f32 %v633, 0.0
        %v680 = vmax.f32 %v638, 0.0
        %v681 = vmax.f32 %v641, 0.0
        %v682 = vmax.f32 %v646, 0.0
        %v683 = vmax.f32 %v649, 0.0
        %684 = vst [vmem:[#allocation2] sm:$0xff] 0.0
        %685 = vst [vmem:[#allocation2 + $0x8] sm:$0xff] 0.0
        %686 = vst [vmem:[#allocation2 + $0x10] sm:$0xff] 0.0
        %687 = vst [vmem:[#allocation2 + $0x18] sm:$0xff] 0.0
        %688 = vst [vmem:[#allocation2 + $0x20] sm:$0xff] 0.0
        %689 = vst [vmem:[#allocation2 + $0x28] sm:$0xff] 0.0
        %690 = vst [vmem:[#allocation2 + $0x30] sm:$0xff] 0.0
        %691 = vst [vmem:[#allocation2 + $0x38] sm:$0xff] 0.0
        %692 = vst [vmem:[#allocation2 + $0x40] sm:$0xff] 0.0
        %693 = vst [vmem:[#allocation2 + $0x48] sm:$0xff] 0.0
        %694 = vst [vmem:[#allocation2 + $0x50] sm:$0xff] 0.0
        %695 = vst [vmem:[#allocation2 + $0x58] sm:$0xff] 0.0
        %696 = vst [vmem:[#allocation2 + $0x60] sm:$0xff] 0.0
        %697 = vst [vmem:[#allocation2 + $0x68] sm:$0xff] 0.0
        %698 = vst [vmem:[#allocation2 + $0x70] sm:$0xff] 0.0
        %699 = vst [vmem:[#allocation2 + $0x78] sm:$0xff] 0.0
        %700 = vst [vmem:[#allocation2 + $0x80] sm:$0xff] 0.0
        %701 = vst [vmem:[#allocation2 + $0x88] sm:$0xff] 0.0
        %702 = vst [vmem:[#allocation2 + $0x90] sm:$0xff] 0.0
        %703 = vst [vmem:[#allocation2 + $0x98] sm:$0xff] 0.0
        %704 = vst [vmem:[#allocation2 + $0xa0] sm:$0xff] 0.0
        %705 = vst [vmem:[#allocation2 + $0xa8] sm:$0xff] 0.0
        %706 = vst [vmem:[#allocation2 + $0xb0] sm:$0xff] 0.0
        %707 = vst [vmem:[#allocation2 + $0xb8] sm:$0xff] 0.0
        %708 = vst [vmem:[#allocation2 + $0xc0] sm:$0xff] 0.0
        %709 = vst [vmem:[#allocation2 + $0xc8] sm:$0xff] 0.0
        %710 = vst [vmem:[#allocation2 + $0xd0] sm:$0xff] 0.0
        %711 = vst [vmem:[#allocation2 + $0xd8] sm:$0xff] 0.0
        %712 = vst [vmem:[#allocation2 + $0xe0] sm:$0xff] 0.0
        %713 = vst [vmem:[#allocation2 + $0xe8] sm:$0xff] 0.0
        %714 = vst [vmem:[#allocation2 + $0xf0] sm:$0xff] 0.0
        %715 = vst [vmem:[#allocation2 + $0xf8] sm:$0xff] 0.0
        %716 = vst [vmem:[#allocation2 + $0x100] sm:$0xff] 0.0
        %717 = vst [vmem:[#allocation2 + $0x108] sm:$0xff] 0.0
        %718 = vst [vmem:[#allocation2 + $0x110] sm:$0xff] 0.0
        %719 = vst [vmem:[#allocation2 + $0x118] sm:$0xff] 0.0
        %720 = vst [vmem:[#allocation2 + $0x120] sm:$0xff] 0.0
        %721 = vst [vmem:[#allocation2 + $0x128] sm:$0xff] 0.0
        %722 = vst [vmem:[#allocation2 + $0x130] sm:$0xff] 0.0
        %723 = vst [vmem:[#allocation2 + $0x138] sm:$0xff] 0.0
        %724 = vst [vmem:[#allocation2 + $0x140] sm:$0xff] 0.0
        %725 = vst [vmem:[#allocation2 + $0x148] sm:$0xff] 0.0
        %726 = vst [vmem:[#allocation2 + $0x150] sm:$0xff] 0.0
        %727 = vst [vmem:[#allocation2 + $0x158] sm:$0xff] 0.0
        %728 = vst [vmem:[#allocation2 + $0x160] sm:$0xff] 0.0
        %729 = vst [vmem:[#allocation2 + $0x168] sm:$0xff] 0.0
        %730 = vst [vmem:[#allocation2 + $0x170] sm:$0xff] 0.0
        %731 = vst [vmem:[#allocation2 + $0x178] sm:$0xff] 0.0
        %732 = vst [vmem:[#allocation2 + $0x180] sm:$0xff] 0.0
        %733 = vst [vmem:[#allocation2 + $0x188] sm:$0xff] 0.0
        %734 = vst [vmem:[#allocation2 + $0x190] sm:$0xff] 0.0
        %735 = vst [vmem:[#allocation2 + $0x198] sm:$0xff] 0.0
        %736 = vst [vmem:[#allocation2 + $0x1a0] sm:$0xff] 0.0
        %737 = vst [vmem:[#allocation2 + $0x1a8] sm:$0xff] 0.0
        %738 = vst [vmem:[#allocation2 + $0x1b0] sm:$0xff] 0.0
        %739 = vst [vmem:[#allocation2 + $0x1b8] sm:$0xff] 0.0
        %740 = vst [vmem:[#allocation2 + $0x1c0] sm:$0xff] 0.0
        %741 = vst [vmem:[#allocation2 + $0x1c8] sm:$0xff] 0.0
        %742 = vst [vmem:[#allocation2 + $0x1d0] sm:$0xff] 0.0
        %743 = vst [vmem:[#allocation2 + $0x1d8] sm:$0xff] 0.0
        %744 = vst [vmem:[#allocation2 + $0x1e0] sm:$0xff] 0.0
        %745 = vst [vmem:[#allocation2 + $0x1e8] sm:$0xff] 0.0
        %746 = vst [vmem:[#allocation2 + $0x1f0] sm:$0xff] 0.0
        %747 = vst [vmem:[#allocation2 + $0x1f8] sm:$0xff] 0.0
        %748 = vst [vmem:[#allocation2 + $0x200] sm:$0xff] 0.0
        %749 = vst [vmem:[#allocation2 + $0x208] sm:$0xff] 0.0
        %750 = vst [vmem:[#allocation2 + $0x210] sm:$0xff] 0.0
        %751 = vst [vmem:[#allocation2 + $0x218] sm:$0xff] 0.0
        %752 = vst [vmem:[#allocation2 + $0x30] sm:$0xff] %v652
        %753 = vst [vmem:[#allocation2 + $0x38] sm:$0xff] %v653
        %754 = vst [vmem:[#allocation2 + $0x50] sm:$0xff] %v654
        %755 = vst [vmem:[#allocation2 + $0x58] sm:$0xff] %v655
        %756 = vst [vmem:[#allocation2 + $0x70] sm:$0xff] %v656
        %757 = vst [vmem:[#allocation2 + $0x78] sm:$0xff] %v657
        %758 = vst [vmem:[#allocation2 + $0x90] sm:$0xff] %v658
        %759 = vst [vmem:[#allocation2 + $0x98] sm:$0xff] %v659
        %760 = vst [vmem:[#allocation2 + $0xb0] sm:$0xff] %v660
        %761 = vst [vmem:[#allocation2 + $0xb8] sm:$0xff] %v661
        %762 = vst [vmem:[#allocation2 + $0xd0] sm:$0xff] %v662
        %763 = vst [vmem:[#allocation2 + $0xd8] sm:$0xff] %v663
        %764 = vst [vmem:[#allocation2 + $0xf0] sm:$0xff] %v664
        %765 = vst [vmem:[#allocation2 + $0xf8] sm:$0xff] %v665
        %766 = vst [vmem:[#allocation2 + $0x110] sm:$0xff] %v666
        %767 = vst [vmem:[#allocation2 + $0x118] sm:$0xff] %v667
        %768 = vst [vmem:[#allocation2 + $0x130] sm:$0xff] %v668
        %769 = vst [vmem:[#allocation2 + $0x138] sm:$0xff] %v669
        %770 = vst [vmem:[#allocation2 + $0x150] sm:$0xff] %v670
        %771 = vst [vmem:[#allocation2 + $0x158] sm:$0xff] %v671
        %772 = vst [vmem:[#allocation2 + $0x170] sm:$0xff] %v672
        %773 = vst [vmem:[#allocation2 + $0x178] sm:$0xff] %v673
        %774 = vst [vmem:[#allocation2 + $0x190] sm:$0xff] %v674
        %775 = vst [vmem:[#allocation2 + $0x198] sm:$0xff] %v675
        %776 = vst [vmem:[#allocation2 + $0x1b0] sm:$0xff] %v676
        %777 = vst [vmem:[#allocation2 + $0x1b8] sm:$0xff] %v677
        %778 = vst [vmem:[#allocation2 + $0x1d0] sm:$0xff] %v678
        %779 = vst [vmem:[#allocation2 + $0x1d8] sm:$0xff] %v679
        %780 = vst [vmem:[#allocation2 + $0x1f0] sm:$0xff] %v680
        %781 = vst [vmem:[#allocation2 + $0x1f8] sm:$0xff] %v681
        %782 = vst [vmem:[#allocation2 + $0x210] sm:$0xff] %v682
        %783 = vst [vmem:[#allocation2 + $0x218] sm:$0xff] %v683
        %s784 = scalar_lea.vmem [#allocation2], 15
        %v785 = vld [vmem:[%s784] ss:$2 sm:$0xff]
        %s786 = scalar_lea.vmem [#allocation2], 31
        %v787 = vld [vmem:[%s786] ss:$2 sm:$0xff]
        %s788 = scalar_lea.vmem [#allocation2], 47
        %v789 = vld [vmem:[%s788] ss:$2 sm:$0xff]
        %s790 = scalar_lea.vmem [#allocation2], 63
        %v791 = vld [vmem:[%s790] ss:$2 sm:$0xff]
        %s792 = scalar_lea.vmem [#allocation2], 79
        %v793 = vld [vmem:[%s792] ss:$2 sm:$0xff]
        %s794 = scalar_lea.vmem [#allocation2], 95
        %v795 = vld [vmem:[%s794] ss:$2 sm:$0xff]
        %s796 = scalar_lea.vmem [#allocation2], 111
        %v797 = vld [vmem:[%s796] ss:$2 sm:$0xff]
        %s798 = scalar_lea.vmem [#allocation2], 127
        %v799 = vld [vmem:[%s798] ss:$2 sm:$0xff]
        %s800 = scalar_lea.vmem [#allocation2], 143
        %v801 = vld [vmem:[%s800] ss:$2 sm:$0xff]
        %s802 = scalar_lea.vmem [#allocation2], 159
        %v803 = vld [vmem:[%s802] ss:$2 sm:$0xff]
        %s804 = scalar_lea.vmem [#allocation2], 175
        %v805 = vld [vmem:[%s804] ss:$2 sm:$0xff]
        %s806 = scalar_lea.vmem [#allocation2], 191
        %v807 = vld [vmem:[%s806] ss:$2 sm:$0xff]
        %s808 = scalar_lea.vmem [#allocation2], 207
        %v809 = vld [vmem:[%s808] ss:$2 sm:$0xff]
        %s810 = scalar_lea.vmem [#allocation2], 223
        %v811 = vld [vmem:[%s810] ss:$2 sm:$0xff]
        %s812 = scalar_lea.vmem [#allocation2], 239
        %v813 = vld [vmem:[%s812] ss:$2 sm:$0xff]
        %s814 = scalar_lea.vmem [#allocation2], 255
        %v815 = vld [vmem:[%s814] ss:$2 sm:$0xff]
        %s816 = scalar_lea.vmem [#allocation2], 271
        %v817 = vld [vmem:[%s816] ss:$2 sm:$0xff]
        %s818 = scalar_lea.vmem [#allocation2], 287
        %v819 = vld [vmem:[%s818] ss:$2 sm:$0xff]
        %s820 = scalar_lea.vmem [#allocation2], 303
        %v821 = vld [vmem:[%s820] ss:$2 sm:$0xff]
        %s822 = scalar_lea.vmem [#allocation2], 319
        %v823 = vld [vmem:[%s822] ss:$2 sm:$0xff]
        %s824 = scalar_lea.vmem [#allocation2], 335
        %v825 = vld [vmem:[%s824] ss:$2 sm:$0xff]
        %s826 = scalar_lea.vmem [#allocation2], 351
        %v827 = vld [vmem:[%s826] ss:$2 sm:$0xff]
        %s828 = scalar_lea.vmem [#allocation2], 367
        %v829 = vld [vmem:[%s828] ss:$2 sm:$0xff]
        %s830 = scalar_lea.vmem [#allocation2], 383
        %v831 = vld [vmem:[%s830] ss:$2 sm:$0xff]
        %s832 = scalar_lea.vmem [#allocation2], 399
        %v833 = vld [vmem:[%s832] ss:$2 sm:$0xff]
        %s834 = scalar_lea.vmem [#allocation2], 415
        %v835 = vld [vmem:[%s834] ss:$2 sm:$0xff]
        %s836 = scalar_lea.vmem [#allocation2], 431
        %v837 = vld [vmem:[%s836] ss:$2 sm:$0xff]
        %s838 = scalar_lea.vmem [#allocation2], 447
        %v839 = vld [vmem:[%s838] ss:$2 sm:$0xff]
        %s840 = scalar_lea.vmem [#allocation2], 463
        %v841 = vld [vmem:[%s840] ss:$2 sm:$0xff]
        %v842 = vpack.c.bf16 %v787, %v785
        %v843 = vpack.c.bf16 %v791, %v789
        %v844 = vpack.c.bf16 %v795, %v793
        %v845 = vpack.c.bf16 %v799, %v797
        %v846 = vpack.c.bf16 %v803, %v801
        %v847 = vpack.c.bf16 %v807, %v805
        %v848 = vpack.c.bf16 %v811, %v809
        %v849 = vpack.c.bf16 %v815, %v813
        %v850 = vpack.c.bf16 %v819, %v817
        %v851 = vpack.c.bf16 %v823, %v821
        %v852 = vpack.c.bf16 %v827, %v825
        %v853 = vpack.c.bf16 %v831, %v829
        %v854 = vpack.c.bf16 %v835, %v833
        %v855 = vpack.c.bf16 %v839, %v837
        %v856 = vpack.c.bf16 %v841, %v841
        %s857 = smul.u32 %s26, 9
        %s858 = smul.u32 %s857, 16
        %s859 = smul.addr %s858, 4
        %s860 = scalar_lea.vmem %s3, %s859
        %v861 = vld [vmem:[%s860] sm:$0xf]
        %v862 = vld [vmem:[%s860 + $0x4] sm:$0xf]
        %v863 = vld [vmem:[%s860 + $0x8] sm:$0xf]
        %v864 = vld [vmem:[%s860 + $0xc] sm:$0xf]
        %v865 = vld [vmem:[%s860 + $0x10] sm:$0xf]
        %v866 = vld [vmem:[%s860 + $0x14] sm:$0xf]
        %v867 = vld [vmem:[%s860 + $0x18] sm:$0xf]
        %v868 = vld [vmem:[%s860 + $0x1c] sm:$0xf]
        %v869 = vld [vmem:[%s860 + $0x20] sm:$0xf]
        %v870 = vld [vmem:[%s860 + $0x24] sm:$0xf]
        %v871 = vld [vmem:[%s860 + $0x28] sm:$0xf]
        %v872 = vld [vmem:[%s860 + $0x2c] sm:$0xf]
        %v873 = vld [vmem:[%s860 + $0x30] sm:$0xf]
        %v874 = vld [vmem:[%s860 + $0x34] sm:$0xf]
        %v875 = vld [vmem:[%s860 + $0x38] sm:$0xf]
        %v876 = vld [vmem:[%s860 + $0x3c] sm:$0xf]
        %v893 = vunpack.c.l.b16 %v861
        %v894 = vunpack.c.l.b16 %v862
        %v895 = vunpack.c.l.b16 %v863
        %v896 = vunpack.c.l.b16 %v864
        %v897 = vunpack.c.l.b16 %v865
        %v898 = vunpack.c.l.b16 %v866
        %v899 = vunpack.c.l.b16 %v867
        %v900 = vunpack.c.l.b16 %v868
        %v901 = vunpack.c.l.b16 %v869
        %v902 = vunpack.c.l.b16 %v870
        %v903 = vunpack.c.l.b16 %v871
        %v904 = vunpack.c.l.b16 %v872
        %v905 = vunpack.c.l.b16 %v873
        %v906 = vunpack.c.l.b16 %v874
        %v907 = vunpack.c.l.b16 %v875
        %v908 = vunpack.c.l.b16 %v876
        %v909 = vpack.c.b16 %v894, %v893
        %v910 = vpack.c.b16 %v896, %v895
        %v911 = vpack.c.b16 %v898, %v897
        %v912 = vpack.c.b16 %v900, %v899
        %v913 = vpack.c.b16 %v902, %v901
        %v914 = vpack.c.b16 %v904, %v903
        %v915 = vpack.c.b16 %v906, %v905
        %v916 = vpack.c.b16 %v908, %v907
        %925 = vmatprep.subr.bf16.mxu0 0
        %926 = vmatpush1.bf16.msra.mxu0 %v916
        %927 = vmatprep.subr.bf16.mxu0 0
        %928 = vmatpush1.bf16.msra.mxu0 %v915
        %929 = vmatprep.subr.bf16.mxu0 0
        %930 = vmatpush1.bf16.msra.mxu0 %v914
        %931 = vmatprep.subr.bf16.mxu0 0
        %932 = vmatpush1.bf16.msra.mxu0 %v913
        %933 = vmatprep.subr.bf16.mxu0 0
        %934 = vmatpush1.bf16.msra.mxu0 %v912
        %935 = vmatprep.subr.bf16.mxu0 0
        %936 = vmatpush1.bf16.msra.mxu0 %v911
        %937 = vmatprep.subr.bf16.mxu0 0
        %938 = vmatpush1.bf16.msra.mxu0 %v910
        %939 = vmatprep.subr.bf16.mxu0 0
        %940 = vmatpush1.bf16.msra.mxu0 %v909
        %941 = vmatprep.subr.bf16.mxu0 0
        %942 = vmatpush2.bf16.msra.mxu0 0
        %943 = vmatprep.subr.bf16.mxu0 0
        %944 = vmatpush2.bf16.msra.mxu0 0
        %945 = vmatprep.subr.bf16.mxu0 0
        %946 = vmatpush2.bf16.msra.mxu0 0
        %947 = vmatprep.subr.bf16.mxu0 0
        %948 = vmatpush2.bf16.msra.mxu0 0
        %949 = vmatprep.subr.bf16.mxu0 0
        %950 = vmatpush2.bf16.msra.mxu0 0
        %951 = vmatprep.subr.bf16.mxu0 0
        %952 = vmatpush2.bf16.msra.mxu0 0
        %953 = vmatprep.subr.bf16.mxu0 0
        %954 = vmatpush2.bf16.msra.mxu0 0
        %955 = vmatprep.subr.bf16.mxu0 0
        %956 = vmatpush2.bf16.msra.mxu0 0
        %957 = vmatprep.mubr.bf16.mxu0 0
        %958 = vmatmul.mubr.bf16.gmra.mxu0 %v842
        %v959 = vpop.f32.mrf.mxu0
        %v960 = vadd.f32 0.0, %v959
        %v961 = vpop.f32.mrf.mxu0
        %v962 = vpop.f32.mrf.mxu0
        %v963 = vadd.f32 0.0, %v962
        %v964 = vpop.f32.mrf.mxu0
        %965 = vmatprep.mubr.bf16.mxu0 0
        %966 = vmatmul.mubr.bf16.gmra.mxu0 %v843
        %v967 = vpop.f32.mrf.mxu0
        %v968 = vadd.f32 0.0, %v967
        %v969 = vpop.f32.mrf.mxu0
        %v970 = vpop.f32.mrf.mxu0
        %v971 = vadd.f32 0.0, %v970
        %v972 = vpop.f32.mrf.mxu0
        %973 = vmatprep.mubr.bf16.mxu0 0
        %974 = vmatmul.mubr.bf16.gmra.mxu0 %v844
        %v975 = vpop.f32.mrf.mxu0
        %v976 = vadd.f32 0.0, %v975
        %v977 = vpop.f32.mrf.mxu0
        %v978 = vpop.f32.mrf.mxu0
        %v979 = vadd.f32 0.0, %v978
        %v980 = vpop.f32.mrf.mxu0
        %981 = vmatprep.mubr.bf16.mxu0 0
        %982 = vmatmul.mubr.bf16.gmra.mxu0 %v845
        %v983 = vpop.f32.mrf.mxu0
        %v984 = vadd.f32 0.0, %v983
        %v985 = vpop.f32.mrf.mxu0
        %v986 = vpop.f32.mrf.mxu0
        %v987 = vadd.f32 0.0, %v986
        %v988 = vpop.f32.mrf.mxu0
        %989 = vmatprep.mubr.bf16.mxu0 0
        %990 = vmatmul.mubr.bf16.gmra.mxu0 %v846
        %v991 = vpop.f32.mrf.mxu0
        %v992 = vadd.f32 0.0, %v991
        %v993 = vpop.f32.mrf.mxu0
        %v994 = vpop.f32.mrf.mxu0
        %v995 = vadd.f32 0.0, %v994
        %v996 = vpop.f32.mrf.mxu0
        %997 = vmatprep.mubr.bf16.mxu0 0
        %998 = vmatmul.mubr.bf16.gmra.mxu0 %v847
        %v999 = vpop.f32.mrf.mxu0
        %v1000 = vadd.f32 0.0, %v999
        %v1001 = vpop.f32.mrf.mxu0
        %v1002 = vpop.f32.mrf.mxu0
        %v1003 = vadd.f32 0.0, %v1002
        %v1004 = vpop.f32.mrf.mxu0
        %1005 = vmatprep.mubr.bf16.mxu0 0
        %1006 = vmatmul.mubr.bf16.gmra.mxu0 %v848
        %v1007 = vpop.f32.mrf.mxu0
        %v1008 = vadd.f32 0.0, %v1007
        %v1009 = vpop.f32.mrf.mxu0
        %v1010 = vpop.f32.mrf.mxu0
        %v1011 = vadd.f32 0.0, %v1010
        %v1012 = vpop.f32.mrf.mxu0
        %1013 = vmatprep.mubr.bf16.mxu0 0
        %1014 = vmatmul.mubr.bf16.gmra.mxu0 %v849
        %v1015 = vpop.f32.mrf.mxu0
        %v1016 = vadd.f32 0.0, %v1015
        %v1017 = vpop.f32.mrf.mxu0
        %v1018 = vpop.f32.mrf.mxu0
        %v1019 = vadd.f32 0.0, %v1018
        %v1020 = vpop.f32.mrf.mxu0
        %1021 = vmatprep.mubr.bf16.mxu0 0
        %1022 = vmatmul.mubr.bf16.gmra.mxu0 %v850
        %v1023 = vpop.f32.mrf.mxu0
        %v1024 = vadd.f32 0.0, %v1023
        %v1025 = vpop.f32.mrf.mxu0
        %v1026 = vpop.f32.mrf.mxu0
        %v1027 = vadd.f32 0.0, %v1026
        %v1028 = vpop.f32.mrf.mxu0
        %1029 = vmatprep.mubr.bf16.mxu0 0
        %1030 = vmatmul.mubr.bf16.gmra.mxu0 %v851
        %v1031 = vpop.f32.mrf.mxu0
        %v1032 = vadd.f32 0.0, %v1031
        %v1033 = vpop.f32.mrf.mxu0
        %v1034 = vpop.f32.mrf.mxu0
        %v1035 = vadd.f32 0.0, %v1034
        %v1036 = vpop.f32.mrf.mxu0
        %1037 = vmatprep.mubr.bf16.mxu0 0
        %1038 = vmatmul.mubr.bf16.gmra.mxu0 %v852
        %v1039 = vpop.f32.mrf.mxu0
        %v1040 = vadd.f32 0.0, %v1039
        %v1041 = vpop.f32.mrf.mxu0
        %v1042 = vpop.f32.mrf.mxu0
        %v1043 = vadd.f32 0.0, %v1042
        %v1044 = vpop.f32.mrf.mxu0
        %1045 = vmatprep.mubr.bf16.mxu0 0
        %1046 = vmatmul.mubr.bf16.gmra.mxu0 %v853
        %v1047 = vpop.f32.mrf.mxu0
        %v1048 = vadd.f32 0.0, %v1047
        %v1049 = vpop.f32.mrf.mxu0
        %v1050 = vpop.f32.mrf.mxu0
        %v1051 = vadd.f32 0.0, %v1050
        %v1052 = vpop.f32.mrf.mxu0
        %1053 = vmatprep.mubr.bf16.mxu0 0
        %1054 = vmatmul.mubr.bf16.gmra.mxu0 %v854
        %v1055 = vpop.f32.mrf.mxu0
        %v1056 = vadd.f32 0.0, %v1055
        %v1057 = vpop.f32.mrf.mxu0
        %v1058 = vpop.f32.mrf.mxu0
        %v1059 = vadd.f32 0.0, %v1058
        %v1060 = vpop.f32.mrf.mxu0
        %1061 = vmatprep.mubr.bf16.mxu0 0
        %1062 = vmatmul.mubr.bf16.gmra.mxu0 %v855
        %v1063 = vpop.f32.mrf.mxu0
        %v1064 = vadd.f32 0.0, %v1063
        %v1065 = vpop.f32.mrf.mxu0
        %v1066 = vpop.f32.mrf.mxu0
        %v1067 = vadd.f32 0.0, %v1066
        %v1068 = vpop.f32.mrf.mxu0
        %1069 = vmatprep.mubr.bf16.mxu0 0
        %1070 = vmatmul.mubr.bf16.gmra.mxu0 %v856
        %v1071 = vpop.f32.mrf.mxu0
        %v1072 = vadd.f32 0.0, %v1071
        %v1073 = vpop.f32.mrf.mxu0
        %v1074 = vpop.f32.mrf.mxu0
        %v1075 = vpop.f32.mrf.mxu0
        %1076 = vdwg.mxu0
        %1077 = vst [vmem:[#allocation3] sm:$0xff] %v960
        %1078 = vst [vmem:[#allocation3 + $0x8] sm:$0xff] %v963
        %1079 = vst [vmem:[#allocation3 + $0x10] sm:$0xff] %v968
        %1080 = vst [vmem:[#allocation3 + $0x18] sm:$0xff] %v971
        %1081 = vst [vmem:[#allocation3 + $0x20] sm:$0xff] %v976
        %1082 = vst [vmem:[#allocation3 + $0x28] sm:$0xff] %v979
        %1083 = vst [vmem:[#allocation3 + $0x30] sm:$0xff] %v984
        %1084 = vst [vmem:[#allocation3 + $0x38] sm:$0xff] %v987
        %1085 = vst [vmem:[#allocation3 + $0x40] sm:$0xff] %v992
        %1086 = vst [vmem:[#allocation3 + $0x48] sm:$0xff] %v995
        %1087 = vst [vmem:[#allocation3 + $0x50] sm:$0xff] %v1000
        %1088 = vst [vmem:[#allocation3 + $0x58] sm:$0xff] %v1003
        %1089 = vst [vmem:[#allocation3 + $0x60] sm:$0xff] %v1008
        %1090 = vst [vmem:[#allocation3 + $0x68] sm:$0xff] %v1011
        %1091 = vst [vmem:[#allocation3 + $0x70] sm:$0xff] %v1016
        %1092 = vst [vmem:[#allocation3 + $0x78] sm:$0xff] %v1019
        %1093 = vst [vmem:[#allocation3 + $0x80] sm:$0xff] %v1024
        %1094 = vst [vmem:[#allocation3 + $0x88] sm:$0xff] %v1027
        %1095 = vst [vmem:[#allocation3 + $0x90] sm:$0xff] %v1032
        %1096 = vst [vmem:[#allocation3 + $0x98] sm:$0xff] %v1035
        %1097 = vst [vmem:[#allocation3 + $0xa0] sm:$0xff] %v1040
        %1098 = vst [vmem:[#allocation3 + $0xa8] sm:$0xff] %v1043
        %1099 = vst [vmem:[#allocation3 + $0xb0] sm:$0xff] %v1048
        %1100 = vst [vmem:[#allocation3 + $0xb8] sm:$0xff] %v1051
        %1101 = vst [vmem:[#allocation3 + $0xc0] sm:$0xff] %v1056
        %1102 = vst [vmem:[#allocation3 + $0xc8] sm:$0xff] %v1059
        %1103 = vst [vmem:[#allocation3 + $0xd0] sm:$0xff] %v1064
        %1104 = vst [vmem:[#allocation3 + $0xd8] sm:$0xff] %v1067
        %1105 = vst [vmem:[#allocation3 + $0xe0] sm:$0xff] %v1072
        %s1106 = scalar_lea.vmem [#allocation2], 16
        %v1107 = vld [vmem:[%s1106] ss:$2 sm:$0xff]
        %s1108 = scalar_lea.vmem [#allocation2], 32
        %v1109 = vld [vmem:[%s1108] ss:$2 sm:$0xff]
        %s1110 = scalar_lea.vmem [#allocation2], 48
        %v1111 = vld [vmem:[%s1110] ss:$2 sm:$0xff]
        %s1112 = scalar_lea.vmem [#allocation2], 64
        %v1113 = vld [vmem:[%s1112] ss:$2 sm:$0xff]
        %s1114 = scalar_lea.vmem [#allocation2], 80
        %v1115 = vld [vmem:[%s1114] ss:$2 sm:$0xff]
        %s1116 = scalar_lea.vmem [#allocation2], 96
        %v1117 = vld [vmem:[%s1116] ss:$2 sm:$0xff]
        %s1118 = scalar_lea.vmem [#allocation2], 112
        %v1119 = vld [vmem:[%s1118] ss:$2 sm:$0xff]
        %s1120 = scalar_lea.vmem [#allocation2], 128
        %v1121 = vld [vmem:[%s1120] ss:$2 sm:$0xff]
        %s1122 = scalar_lea.vmem [#allocation2], 144
        %v1123 = vld [vmem:[%s1122] ss:$2 sm:$0xff]
        %s1124 = scalar_lea.vmem [#allocation2], 160
        %v1125 = vld [vmem:[%s1124] ss:$2 sm:$0xff]
        %s1126 = scalar_lea.vmem [#allocation2], 176
        %v1127 = vld [vmem:[%s1126] ss:$2 sm:$0xff]
        %s1128 = scalar_lea.vmem [#allocation2], 192
        %v1129 = vld [vmem:[%s1128] ss:$2 sm:$0xff]
        %s1130 = scalar_lea.vmem [#allocation2], 208
        %v1131 = vld [vmem:[%s1130] ss:$2 sm:$0xff]
        %s1132 = scalar_lea.vmem [#allocation2], 224
        %v1133 = vld [vmem:[%s1132] ss:$2 sm:$0xff]
        %s1134 = scalar_lea.vmem [#allocation2], 240
        %v1135 = vld [vmem:[%s1134] ss:$2 sm:$0xff]
        %s1136 = scalar_lea.vmem [#allocation2], 256
        %v1137 = vld [vmem:[%s1136] ss:$2 sm:$0xff]
        %s1138 = scalar_lea.vmem [#allocation2], 272
        %v1139 = vld [vmem:[%s1138] ss:$2 sm:$0xff]
        %s1140 = scalar_lea.vmem [#allocation2], 288
        %v1141 = vld [vmem:[%s1140] ss:$2 sm:$0xff]
        %s1142 = scalar_lea.vmem [#allocation2], 304
        %v1143 = vld [vmem:[%s1142] ss:$2 sm:$0xff]
        %s1144 = scalar_lea.vmem [#allocation2], 320
        %v1145 = vld [vmem:[%s1144] ss:$2 sm:$0xff]
        %s1146 = scalar_lea.vmem [#allocation2], 336
        %v1147 = vld [vmem:[%s1146] ss:$2 sm:$0xff]
        %s1148 = scalar_lea.vmem [#allocation2], 352
        %v1149 = vld [vmem:[%s1148] ss:$2 sm:$0xff]
        %s1150 = scalar_lea.vmem [#allocation2], 368
        %v1151 = vld [vmem:[%s1150] ss:$2 sm:$0xff]
        %s1152 = scalar_lea.vmem [#allocation2], 384
        %v1153 = vld [vmem:[%s1152] ss:$2 sm:$0xff]
        %s1154 = scalar_lea.vmem [#allocation2], 400
        %v1155 = vld [vmem:[%s1154] ss:$2 sm:$0xff]
        %s1156 = scalar_lea.vmem [#allocation2], 416
        %v1157 = vld [vmem:[%s1156] ss:$2 sm:$0xff]
        %s1158 = scalar_lea.vmem [#allocation2], 432
        %v1159 = vld [vmem:[%s1158] ss:$2 sm:$0xff]
        %s1160 = scalar_lea.vmem [#allocation2], 448
        %v1161 = vld [vmem:[%s1160] ss:$2 sm:$0xff]
        %s1162 = scalar_lea.vmem [#allocation2], 464
        %v1163 = vld [vmem:[%s1162] ss:$2 sm:$0xff]
        %v1164 = vpack.c.bf16 %v1109, %v1107
        %v1165 = vpack.c.bf16 %v1113, %v1111
        %v1166 = vpack.c.bf16 %v1117, %v1115
        %v1167 = vpack.c.bf16 %v1121, %v1119
        %v1168 = vpack.c.bf16 %v1125, %v1123
        %v1169 = vpack.c.bf16 %v1129, %v1127
        %v1170 = vpack.c.bf16 %v1133, %v1131
        %v1171 = vpack.c.bf16 %v1137, %v1135
        %v1172 = vpack.c.bf16 %v1141, %v1139
        %v1173 = vpack.c.bf16 %v1145, %v1143
        %v1174 = vpack.c.bf16 %v1149, %v1147
        %v1175 = vpack.c.bf16 %v1153, %v1151
        %v1176 = vpack.c.bf16 %v1157, %v1155
        %v1177 = vpack.c.bf16 %v1161, %v1159
        %v1178 = vpack.c.bf16 %v1163, %v1163
        %s1179 = sadd.s32 %s857, 1
        %s1180 = smul.u32 %s1179, 16
        %s1181 = smul.addr %s1180, 4
        %s1182 = scalar_lea.vmem %s3, %s1181
        %v1183 = vld [vmem:[%s1182] sm:$0xf]
        %v1184 = vld [vmem:[%s1182 + $0x4] sm:$0xf]
        %v1185 = vld [vmem:[%s1182 + $0x8] sm:$0xf]
        %v1186 = vld [vmem:[%s1182 + $0xc] sm:$0xf]
        %v1187 = vld [vmem:[%s1182 + $0x10] sm:$0xf]
        %v1188 = vld [vmem:[%s1182 + $0x14] sm:$0xf]
        %v1189 = vld [vmem:[%s1182 + $0x18] sm:$0xf]
        %v1190 = vld [vmem:[%s1182 + $0x1c] sm:$0xf]
        %v1191 = vld [vmem:[%s1182 + $0x20] sm:$0xf]
        %v1192 = vld [vmem:[%s1182 + $0x24] sm:$0xf]
        %v1193 = vld [vmem:[%s1182 + $0x28] sm:$0xf]
        %v1194 = vld [vmem:[%s1182 + $0x2c] sm:$0xf]
        %v1195 = vld [vmem:[%s1182 + $0x30] sm:$0xf]
        %v1196 = vld [vmem:[%s1182 + $0x34] sm:$0xf]
        %v1197 = vld [vmem:[%s1182 + $0x38] sm:$0xf]
        %v1198 = vld [vmem:[%s1182 + $0x3c] sm:$0xf]
        %v1215 = vunpack.c.l.b16 %v1183
        %v1216 = vunpack.c.l.b16 %v1184
        %v1217 = vunpack.c.l.b16 %v1185
        %v1218 = vunpack.c.l.b16 %v1186
        %v1219 = vunpack.c.l.b16 %v1187
        %v1220 = vunpack.c.l.b16 %v1188
        %v1221 = vunpack.c.l.b16 %v1189
        %v1222 = vunpack.c.l.b16 %v1190
        %v1223 = vunpack.c.l.b16 %v1191
        %v1224 = vunpack.c.l.b16 %v1192
        %v1225 = vunpack.c.l.b16 %v1193
        %v1226 = vunpack.c.l.b16 %v1194
        %v1227 = vunpack.c.l.b16 %v1195
        %v1228 = vunpack.c.l.b16 %v1196
        %v1229 = vunpack.c.l.b16 %v1197
        %v1230 = vunpack.c.l.b16 %v1198
        %v1231 = vpack.c.b16 %v1216, %v1215
        %v1232 = vpack.c.b16 %v1218, %v1217
        %v1233 = vpack.c.b16 %v1220, %v1219
        %v1234 = vpack.c.b16 %v1222, %v1221
        %v1235 = vpack.c.b16 %v1224, %v1223
        %v1236 = vpack.c.b16 %v1226, %v1225
        %v1237 = vpack.c.b16 %v1228, %v1227
        %v1238 = vpack.c.b16 %v1230, %v1229
        %1247 = vmatprep.subr.bf16.mxu0 0
        %1248 = vmatpush1.bf16.msra.mxu0 %v1238
        %1249 = vmatprep.subr.bf16.mxu0 0
        %1250 = vmatpush1.bf16.msra.mxu0 %v1237
        %1251 = vmatprep.subr.bf16.mxu0 0
        %1252 = vmatpush1.bf16.msra.mxu0 %v1236
        %1253 = vmatprep.subr.bf16.mxu0 0
        %1254 = vmatpush1.bf16.msra.mxu0 %v1235
        %1255 = vmatprep.subr.bf16.mxu0 0
        %1256 = vmatpush1.bf16.msra.mxu0 %v1234
        %1257 = vmatprep.subr.bf16.mxu0 0
        %1258 = vmatpush1.bf16.msra.mxu0 %v1233
        %1259 = vmatprep.subr.bf16.mxu0 0
        %1260 = vmatpush1.bf16.msra.mxu0 %v1232
        %1261 = vmatprep.subr.bf16.mxu0 0
        %1262 = vmatpush1.bf16.msra.mxu0 %v1231
        %1263 = vmatprep.subr.bf16.mxu0 0
        %1264 = vmatpush2.bf16.msra.mxu0 0
        %1265 = vmatprep.subr.bf16.mxu0 0
        %1266 = vmatpush2.bf16.msra.mxu0 0
        %1267 = vmatprep.subr.bf16.mxu0 0
        %1268 = vmatpush2.bf16.msra.mxu0 0
        %1269 = vmatprep.subr.bf16.mxu0 0
        %1270 = vmatpush2.bf16.msra.mxu0 0
        %1271 = vmatprep.subr.bf16.mxu0 0
        %1272 = vmatpush2.bf16.msra.mxu0 0
        %1273 = vmatprep.subr.bf16.mxu0 0
        %1274 = vmatpush2.bf16.msra.mxu0 0
        %1275 = vmatprep.subr.bf16.mxu0 0
        %1276 = vmatpush2.bf16.msra.mxu0 0
        %1277 = vmatprep.subr.bf16.mxu0 0
        %1278 = vmatpush2.bf16.msra.mxu0 0
        %1279 = vmatprep.mubr.bf16.mxu0 0
        %1280 = vmatmul.mubr.bf16.gmra.mxu0 %v1164
        %v1281 = vpop.f32.mrf.mxu0
        %v1282 = vadd.f32 0.0, %v1281
        %v1283 = vpop.f32.mrf.mxu0
        %v1284 = vpop.f32.mrf.mxu0
        %v1285 = vadd.f32 0.0, %v1284
        %v1286 = vpop.f32.mrf.mxu0
        %1287 = vmatprep.mubr.bf16.mxu0 0
        %1288 = vmatmul.mubr.bf16.gmra.mxu0 %v1165
        %v1289 = vpop.f32.mrf.mxu0
        %v1290 = vadd.f32 0.0, %v1289
        %v1291 = vpop.f32.mrf.mxu0
        %v1292 = vpop.f32.mrf.mxu0
        %v1293 = vadd.f32 0.0, %v1292
        %v1294 = vpop.f32.mrf.mxu0
        %1295 = vmatprep.mubr.bf16.mxu0 0
        %1296 = vmatmul.mubr.bf16.gmra.mxu0 %v1166
        %v1297 = vpop.f32.mrf.mxu0
        %v1298 = vadd.f32 0.0, %v1297
        %v1299 = vpop.f32.mrf.mxu0
        %v1300 = vpop.f32.mrf.mxu0
        %v1301 = vadd.f32 0.0, %v1300
        %v1302 = vpop.f32.mrf.mxu0
        %1303 = vmatprep.mubr.bf16.mxu0 0
        %1304 = vmatmul.mubr.bf16.gmra.mxu0 %v1167
        %v1305 = vpop.f32.mrf.mxu0
        %v1306 = vadd.f32 0.0, %v1305
        %v1307 = vpop.f32.mrf.mxu0
        %v1308 = vpop.f32.mrf.mxu0
        %v1309 = vadd.f32 0.0, %v1308
        %v1310 = vpop.f32.mrf.mxu0
        %1311 = vmatprep.mubr.bf16.mxu0 0
        %1312 = vmatmul.mubr.bf16.gmra.mxu0 %v1168
        %v1313 = vpop.f32.mrf.mxu0
        %v1314 = vadd.f32 0.0, %v1313
        %v1315 = vpop.f32.mrf.mxu0
        %v1316 = vpop.f32.mrf.mxu0
        %v1317 = vadd.f32 0.0, %v1316
        %v1318 = vpop.f32.mrf.mxu0
        %1319 = vmatprep.mubr.bf16.mxu0 0
        %1320 = vmatmul.mubr.bf16.gmra.mxu0 %v1169
        %v1321 = vpop.f32.mrf.mxu0
        %v1322 = vadd.f32 0.0, %v1321
        %v1323 = vpop.f32.mrf.mxu0
        %v1324 = vpop.f32.mrf.mxu0
        %v1325 = vadd.f32 0.0, %v1324
        %v1326 = vpop.f32.mrf.mxu0
        %1327 = vmatprep.mubr.bf16.mxu0 0
        %1328 = vmatmul.mubr.bf16.gmra.mxu0 %v1170
        %v1329 = vpop.f32.mrf.mxu0
        %v1330 = vadd.f32 0.0, %v1329
        %v1331 = vpop.f32.mrf.mxu0
        %v1332 = vpop.f32.mrf.mxu0
        %v1333 = vadd.f32 0.0, %v1332
        %v1334 = vpop.f32.mrf.mxu0
        %1335 = vmatprep.mubr.bf16.mxu0 0
        %1336 = vmatmul.mubr.bf16.gmra.mxu0 %v1171
        %v1337 = vpop.f32.mrf.mxu0
        %v1338 = vadd.f32 0.0, %v1337
        %v1339 = vpop.f32.mrf.mxu0
        %v1340 = vpop.f32.mrf.mxu0
        %v1341 = vadd.f32 0.0, %v1340
        %v1342 = vpop.f32.mrf.mxu0
        %1343 = vmatprep.mubr.bf16.mxu0 0
        %1344 = vmatmul.mubr.bf16.gmra.mxu0 %v1172
        %v1345 = vpop.f32.mrf.mxu0
        %v1346 = vadd.f32 0.0, %v1345
        %v1347 = vpop.f32.mrf.mxu0
        %v1348 = vpop.f32.mrf.mxu0
        %v1349 = vadd.f32 0.0, %v1348
        %v1350 = vpop.f32.mrf.mxu0
        %1351 = vmatprep.mubr.bf16.mxu0 0
        %1352 = vmatmul.mubr.bf16.gmra.mxu0 %v1173
        %v1353 = vpop.f32.mrf.mxu0
        %v1354 = vadd.f32 0.0, %v1353
        %v1355 = vpop.f32.mrf.mxu0
        %v1356 = vpop.f32.mrf.mxu0
        %v1357 = vadd.f32 0.0, %v1356
        %v1358 = vpop.f32.mrf.mxu0
        %1359 = vmatprep.mubr.bf16.mxu0 0
        %1360 = vmatmul.mubr.bf16.gmra.mxu0 %v1174
        %v1361 = vpop.f32.mrf.mxu0
        %v1362 = vadd.f32 0.0, %v1361
        %v1363 = vpop.f32.mrf.mxu0
        %v1364 = vpop.f32.mrf.mxu0
        %v1365 = vadd.f32 0.0, %v1364
        %v1366 = vpop.f32.mrf.mxu0
        %1367 = vmatprep.mubr.bf16.mxu0 0
        %1368 = vmatmul.mubr.bf16.gmra.mxu0 %v1175
        %v1369 = vpop.f32.mrf.mxu0
        %v1370 = vadd.f32 0.0, %v1369
        %v1371 = vpop.f32.mrf.mxu0
        %v1372 = vpop.f32.mrf.mxu0
        %v1373 = vadd.f32 0.0, %v1372
        %v1374 = vpop.f32.mrf.mxu0
        %1375 = vmatprep.mubr.bf16.mxu0 0
        %1376 = vmatmul.mubr.bf16.gmra.mxu0 %v1176
        %v1377 = vpop.f32.mrf.mxu0
        %v1378 = vadd.f32 0.0, %v1377
        %v1379 = vpop.f32.mrf.mxu0
        %v1380 = vpop.f32.mrf.mxu0
        %v1381 = vadd.f32 0.0, %v1380
        %v1382 = vpop.f32.mrf.mxu0
        %1383 = vmatprep.mubr.bf16.mxu0 0
        %1384 = vmatmul.mubr.bf16.gmra.mxu0 %v1177
        %v1385 = vpop.f32.mrf.mxu0
        %v1386 = vadd.f32 0.0, %v1385
        %v1387 = vpop.f32.mrf.mxu0
        %v1388 = vpop.f32.mrf.mxu0
        %v1389 = vadd.f32 0.0, %v1388
        %v1390 = vpop.f32.mrf.mxu0
        %1391 = vmatprep.mubr.bf16.mxu0 0
        %1392 = vmatmul.mubr.bf16.gmra.mxu0 %v1178
        %v1393 = vpop.f32.mrf.mxu0
        %v1394 = vadd.f32 0.0, %v1393
        %v1395 = vpop.f32.mrf.mxu0
        %v1396 = vpop.f32.mrf.mxu0
        %v1397 = vpop.f32.mrf.mxu0
        %1398 = vdwg.mxu0
        %v1399 = vld [vmem:[#allocation3] sm:$0xff]
        %v1400 = vld [vmem:[#allocation3 + $0x8] sm:$0xff]
        %v1401 = vld [vmem:[#allocation3 + $0x10] sm:$0xff]
        %v1402 = vld [vmem:[#allocation3 + $0x18] sm:$0xff]
        %v1403 = vld [vmem:[#allocation3 + $0x20] sm:$0xff]
        %v1404 = vld [vmem:[#allocation3 + $0x28] sm:$0xff]
        %v1405 = vld [vmem:[#allocation3 + $0x30] sm:$0xff]
        %v1406 = vld [vmem:[#allocation3 + $0x38] sm:$0xff]
        %v1407 = vld [vmem:[#allocation3 + $0x40] sm:$0xff]
        %v1408 = vld [vmem:[#allocation3 + $0x48] sm:$0xff]
        %v1409 = vld [vmem:[#allocation3 + $0x50] sm:$0xff]
        %v1410 = vld [vmem:[#allocation3 + $0x58] sm:$0xff]
        %v1411 = vld [vmem:[#allocation3 + $0x60] sm:$0xff]
        %v1412 = vld [vmem:[#allocation3 + $0x68] sm:$0xff]
        %v1413 = vld [vmem:[#allocation3 + $0x70] sm:$0xff]
        %v1414 = vld [vmem:[#allocation3 + $0x78] sm:$0xff]
        %v1415 = vld [vmem:[#allocation3 + $0x80] sm:$0xff]
        %v1416 = vld [vmem:[#allocation3 + $0x88] sm:$0xff]
        %v1417 = vld [vmem:[#allocation3 + $0x90] sm:$0xff]
        %v1418 = vld [vmem:[#allocation3 + $0x98] sm:$0xff]
        %v1419 = vld [vmem:[#allocation3 + $0xa0] sm:$0xff]
        %v1420 = vld [vmem:[#allocation3 + $0xa8] sm:$0xff]
        %v1421 = vld [vmem:[#allocation3 + $0xb0] sm:$0xff]
        %v1422 = vld [vmem:[#allocation3 + $0xb8] sm:$0xff]
        %v1423 = vld [vmem:[#allocation3 + $0xc0] sm:$0xff]
        %v1424 = vld [vmem:[#allocation3 + $0xc8] sm:$0xff]
        %v1425 = vld [vmem:[#allocation3 + $0xd0] sm:$0xff]
        %v1426 = vld [vmem:[#allocation3 + $0xd8] sm:$0xff]
        %v1427 = vld [vmem:[#allocation3 + $0xe0] sm:$0xff]
        %v1428 = vadd.f32 %v1399, %v1282
        %v1429 = vadd.f32 %v1400, %v1285
        %v1430 = vadd.f32 %v1401, %v1290
        %v1431 = vadd.f32 %v1402, %v1293
        %v1432 = vadd.f32 %v1403, %v1298
        %v1433 = vadd.f32 %v1404, %v1301
        %v1434 = vadd.f32 %v1405, %v1306
        %v1435 = vadd.f32 %v1406, %v1309
        %v1436 = vadd.f32 %v1407, %v1314
        %v1437 = vadd.f32 %v1408, %v1317
        %v1438 = vadd.f32 %v1409, %v1322
        %v1439 = vadd.f32 %v1410, %v1325
        %v1440 = vadd.f32 %v1411, %v1330
        %v1441 = vadd.f32 %v1412, %v1333
        %v1442 = vadd.f32 %v1413, %v1338
        %v1443 = vadd.f32 %v1414, %v1341
        %v1444 = vadd.f32 %v1415, %v1346
        %v1445 = vadd.f32 %v1416, %v1349
        %v1446 = vadd.f32 %v1417, %v1354
        %v1447 = vadd.f32 %v1418, %v1357
        %v1448 = vadd.f32 %v1419, %v1362
        %v1449 = vadd.f32 %v1420, %v1365
        %v1450 = vadd.f32 %v1421, %v1370
        %v1451 = vadd.f32 %v1422, %v1373
        %v1452 = vadd.f32 %v1423, %v1378
        %v1453 = vadd.f32 %v1424, %v1381
        %v1454 = vadd.f32 %v1425, %v1386
        %v1455 = vadd.f32 %v1426, %v1389
        %v1456 = vadd.f32 %v1427, %v1394
        %1457 = vst [vmem:[#allocation3] sm:$0xff] %v1428
        %1458 = vst [vmem:[#allocation3 + $0x8] sm:$0xff] %v1429
        %1459 = vst [vmem:[#allocation3 + $0x10] sm:$0xff] %v1430
        %1460 = vst [vmem:[#allocation3 + $0x18] sm:$0xff] %v1431
        %1461 = vst [vmem:[#allocation3 + $0x20] sm:$0xff] %v1432
        %1462 = vst [vmem:[#allocation3 + $0x28] sm:$0xff] %v1433
        %1463 = vst [vmem:[#allocation3 + $0x30] sm:$0xff] %v1434
        %1464 = vst [vmem:[#allocation3 + $0x38] sm:$0xff] %v1435
        %1465 = vst [vmem:[#allocation3 + $0x40] sm:$0xff] %v1436
        %1466 = vst [vmem:[#allocation3 + $0x48] sm:$0xff] %v1437
        %1467 = vst [vmem:[#allocation3 + $0x50] sm:$0xff] %v1438
        %1468 = vst [vmem:[#allocation3 + $0x58] sm:$0xff] %v1439
        %1469 = vst [vmem:[#allocation3 + $0x60] sm:$0xff] %v1440
        %1470 = vst [vmem:[#allocation3 + $0x68] sm:$0xff] %v1441
        %1471 = vst [vmem:[#allocation3 + $0x70] sm:$0xff] %v1442
        %1472 = vst [vmem:[#allocation3 + $0x78] sm:$0xff] %v1443
        %1473 = vst [vmem:[#allocation3 + $0x80] sm:$0xff] %v1444
        %1474 = vst [vmem:[#allocation3 + $0x88] sm:$0xff] %v1445
        %1475 = vst [vmem:[#allocation3 + $0x90] sm:$0xff] %v1446
        %1476 = vst [vmem:[#allocation3 + $0x98] sm:$0xff] %v1447
        %1477 = vst [vmem:[#allocation3 + $0xa0] sm:$0xff] %v1448
        %1478 = vst [vmem:[#allocation3 + $0xa8] sm:$0xff] %v1449
        %1479 = vst [vmem:[#allocation3 + $0xb0] sm:$0xff] %v1450
        %1480 = vst [vmem:[#allocation3 + $0xb8] sm:$0xff] %v1451
        %1481 = vst [vmem:[#allocation3 + $0xc0] sm:$0xff] %v1452
        %1482 = vst [vmem:[#allocation3 + $0xc8] sm:$0xff] %v1453
        %1483 = vst [vmem:[#allocation3 + $0xd0] sm:$0xff] %v1454
        %1484 = vst [vmem:[#allocation3 + $0xd8] sm:$0xff] %v1455
        %1485 = vst [vmem:[#allocation3 + $0xe0] sm:$0xff] %v1456
        %s1486 = scalar_lea.vmem [#allocation2], 17
        %v1487 = vld [vmem:[%s1486] ss:$2 sm:$0xff]
        %s1488 = scalar_lea.vmem [#allocation2], 33
        %v1489 = vld [vmem:[%s1488] ss:$2 sm:$0xff]
        %s1490 = scalar_lea.vmem [#allocation2], 49
        %v1491 = vld [vmem:[%s1490] ss:$2 sm:$0xff]
        %s1492 = scalar_lea.vmem [#allocation2], 65
        %v1493 = vld [vmem:[%s1492] ss:$2 sm:$0xff]
        %s1494 = scalar_lea.vmem [#allocation2], 81
        %v1495 = vld [vmem:[%s1494] ss:$2 sm:$0xff]
        %s1496 = scalar_lea.vmem [#allocation2], 97
        %v1497 = vld [vmem:[%s1496] ss:$2 sm:$0xff]
        %s1498 = scalar_lea.vmem [#allocation2], 113
        %v1499 = vld [vmem:[%s1498] ss:$2 sm:$0xff]
        %s1500 = scalar_lea.vmem [#allocation2], 129
        %v1501 = vld [vmem:[%s1500] ss:$2 sm:$0xff]
        %s1502 = scalar_lea.vmem [#allocation2], 145
        %v1503 = vld [vmem:[%s1502] ss:$2 sm:$0xff]
        %s1504 = scalar_lea.vmem [#allocation2], 161
        %v1505 = vld [vmem:[%s1504] ss:$2 sm:$0xff]
        %s1506 = scalar_lea.vmem [#allocation2], 177
        %v1507 = vld [vmem:[%s1506] ss:$2 sm:$0xff]
        %s1508 = scalar_lea.vmem [#allocation2], 193
        %v1509 = vld [vmem:[%s1508] ss:$2 sm:$0xff]
        %s1510 = scalar_lea.vmem [#allocation2], 209
        %v1511 = vld [vmem:[%s1510] ss:$2 sm:$0xff]
        %s1512 = scalar_lea.vmem [#allocation2], 225
        %v1513 = vld [vmem:[%s1512] ss:$2 sm:$0xff]
        %s1514 = scalar_lea.vmem [#allocation2], 241
        %v1515 = vld [vmem:[%s1514] ss:$2 sm:$0xff]
        %s1516 = scalar_lea.vmem [#allocation2], 257
        %v1517 = vld [vmem:[%s1516] ss:$2 sm:$0xff]
        %s1518 = scalar_lea.vmem [#allocation2], 273
        %v1519 = vld [vmem:[%s1518] ss:$2 sm:$0xff]
        %s1520 = scalar_lea.vmem [#allocation2], 289
        %v1521 = vld [vmem:[%s1520] ss:$2 sm:$0xff]
        %s1522 = scalar_lea.vmem [#allocation2], 305
        %v1523 = vld [vmem:[%s1522] ss:$2 sm:$0xff]
        %s1524 = scalar_lea.vmem [#allocation2], 321
        %v1525 = vld [vmem:[%s1524] ss:$2 sm:$0xff]
        %s1526 = scalar_lea.vmem [#allocation2], 337
        %v1527 = vld [vmem:[%s1526] ss:$2 sm:$0xff]
        %s1528 = scalar_lea.vmem [#allocation2], 353
        %v1529 = vld [vmem:[%s1528] ss:$2 sm:$0xff]
        %s1530 = scalar_lea.vmem [#allocation2], 369
        %v1531 = vld [vmem:[%s1530] ss:$2 sm:$0xff]
        %s1532 = scalar_lea.vmem [#allocation2], 385
        %v1533 = vld [vmem:[%s1532] ss:$2 sm:$0xff]
        %s1534 = scalar_lea.vmem [#allocation2], 401
        %v1535 = vld [vmem:[%s1534] ss:$2 sm:$0xff]
        %s1536 = scalar_lea.vmem [#allocation2], 417
        %v1537 = vld [vmem:[%s1536] ss:$2 sm:$0xff]
        %s1538 = scalar_lea.vmem [#allocation2], 433
        %v1539 = vld [vmem:[%s1538] ss:$2 sm:$0xff]
        %s1540 = scalar_lea.vmem [#allocation2], 449
        %v1541 = vld [vmem:[%s1540] ss:$2 sm:$0xff]
        %s1542 = scalar_lea.vmem [#allocation2], 465
        %v1543 = vld [vmem:[%s1542] ss:$2 sm:$0xff]
        %v1544 = vpack.c.bf16 %v1489, %v1487
        %v1545 = vpack.c.bf16 %v1493, %v1491
        %v1546 = vpack.c.bf16 %v1497, %v1495
        %v1547 = vpack.c.bf16 %v1501, %v1499
        %v1548 = vpack.c.bf16 %v1505, %v1503
        %v1549 = vpack.c.bf16 %v1509, %v1507
        %v1550 = vpack.c.bf16 %v1513, %v1511
        %v1551 = vpack.c.bf16 %v1517, %v1515
        %v1552 = vpack.c.bf16 %v1521, %v1519
        %v1553 = vpack.c.bf16 %v1525, %v1523
        %v1554 = vpack.c.bf16 %v1529, %v1527
        %v1555 = vpack.c.bf16 %v1533, %v1531
        %v1556 = vpack.c.bf16 %v1537, %v1535
        %v1557 = vpack.c.bf16 %v1541, %v1539
        %v1558 = vpack.c.bf16 %v1543, %v1543
        %s1559 = sadd.s32 %s857, 2
        %s1560 = smul.u32 %s1559, 16
        %s1561 = smul.addr %s1560, 4
        %s1562 = scalar_lea.vmem %s3, %s1561
        %v1563 = vld [vmem:[%s1562] sm:$0xf]
        %v1564 = vld [vmem:[%s1562 + $0x4] sm:$0xf]
        %v1565 = vld [vmem:[%s1562 + $0x8] sm:$0xf]
        %v1566 = vld [vmem:[%s1562 + $0xc] sm:$0xf]
        %v1567 = vld [vmem:[%s1562 + $0x10] sm:$0xf]
        %v1568 = vld [vmem:[%s1562 + $0x14] sm:$0xf]
        %v1569 = vld [vmem:[%s1562 + $0x18] sm:$0xf]
        %v1570 = vld [vmem:[%s1562 + $0x1c] sm:$0xf]
        %v1571 = vld [vmem:[%s1562 + $0x20] sm:$0xf]
        %v1572 = vld [vmem:[%s1562 + $0x24] sm:$0xf]
        %v1573 = vld [vmem:[%s1562 + $0x28] sm:$0xf]
        %v1574 = vld [vmem:[%s1562 + $0x2c] sm:$0xf]
        %v1575 = vld [vmem:[%s1562 + $0x30] sm:$0xf]
        %v1576 = vld [vmem:[%s1562 + $0x34] sm:$0xf]
        %v1577 = vld [vmem:[%s1562 + $0x38] sm:$0xf]
        %v1578 = vld [vmem:[%s1562 + $0x3c] sm:$0xf]
        %v1595 = vunpack.c.l.b16 %v1563
        %v1596 = vunpack.c.l.b16 %v1564
        %v1597 = vunpack.c.l.b16 %v1565
        %v1598 = vunpack.c.l.b16 %v1566
        %v1599 = vunpack.c.l.b16 %v1567
        %v1600 = vunpack.c.l.b16 %v1568
        %v1601 = vunpack.c.l.b16 %v1569
        %v1602 = vunpack.c.l.b16 %v1570
        %v1603 = vunpack.c.l.b16 %v1571
        %v1604 = vunpack.c.l.b16 %v1572
        %v1605 = vunpack.c.l.b16 %v1573
        %v1606 = vunpack.c.l.b16 %v1574
        %v1607 = vunpack.c.l.b16 %v1575
        %v1608 = vunpack.c.l.b16 %v1576
        %v1609 = vunpack.c.l.b16 %v1577
        %v1610 = vunpack.c.l.b16 %v1578
        %v1611 = vpack.c.b16 %v1596, %v1595
        %v1612 = vpack.c.b16 %v1598, %v1597
        %v1613 = vpack.c.b16 %v1600, %v1599
        %v1614 = vpack.c.b16 %v1602, %v1601
        %v1615 = vpack.c.b16 %v1604, %v1603
        %v1616 = vpack.c.b16 %v1606, %v1605
        %v1617 = vpack.c.b16 %v1608, %v1607
        %v1618 = vpack.c.b16 %v1610, %v1609
        %1627 = vmatprep.subr.bf16.mxu0 0
        %1628 = vmatpush1.bf16.msra.mxu0 %v1618
        %1629 = vmatprep.subr.bf16.mxu0 0
        %1630 = vmatpush1.bf16.msra.mxu0 %v1617
        %1631 = vmatprep.subr.bf16.mxu0 0
        %1632 = vmatpush1.bf16.msra.mxu0 %v1616
        %1633 = vmatprep.subr.bf16.mxu0 0
        %1634 = vmatpush1.bf16.msra.mxu0 %v1615
        %1635 = vmatprep.subr.bf16.mxu0 0
        %1636 = vmatpush1.bf16.msra.mxu0 %v1614
        %1637 = vmatprep.subr.bf16.mxu0 0
        %1638 = vmatpush1.bf16.msra.mxu0 %v1613
        %1639 = vmatprep.subr.bf16.mxu0 0
        %1640 = vmatpush1.bf16.msra.mxu0 %v1612
        %1641 = vmatprep.subr.bf16.mxu0 0
        %1642 = vmatpush1.bf16.msra.mxu0 %v1611
        %1643 = vmatprep.subr.bf16.mxu0 0
        %1644 = vmatpush2.bf16.msra.mxu0 0
        %1645 = vmatprep.subr.bf16.mxu0 0
        %1646 = vmatpush2.bf16.msra.mxu0 0
        %1647 = vmatprep.subr.bf16.mxu0 0
        %1648 = vmatpush2.bf16.msra.mxu0 0
        %1649 = vmatprep.subr.bf16.mxu0 0
        %1650 = vmatpush2.bf16.msra.mxu0 0
        %1651 = vmatprep.subr.bf16.mxu0 0
        %1652 = vmatpush2.bf16.msra.mxu0 0
        %1653 = vmatprep.subr.bf16.mxu0 0
        %1654 = vmatpush2.bf16.msra.mxu0 0
        %1655 = vmatprep.subr.bf16.mxu0 0
        %1656 = vmatpush2.bf16.msra.mxu0 0
        %1657 = vmatprep.subr.bf16.mxu0 0
        %1658 = vmatpush2.bf16.msra.mxu0 0
        %1659 = vmatprep.mubr.bf16.mxu0 0
        %1660 = vmatmul.mubr.bf16.gmra.mxu0 %v1544
        %v1661 = vpop.f32.mrf.mxu0
        %v1662 = vadd.f32 0.0, %v1661
        %v1663 = vpop.f32.mrf.mxu0
        %v1664 = vpop.f32.mrf.mxu0
        %v1665 = vadd.f32 0.0, %v1664
        %v1666 = vpop.f32.mrf.mxu0
        %1667 = vmatprep.mubr.bf16.mxu0 0
        %1668 = vmatmul.mubr.bf16.gmra.mxu0 %v1545
        %v1669 = vpop.f32.mrf.mxu0
        %v1670 = vadd.f32 0.0, %v1669
        %v1671 = vpop.f32.mrf.mxu0
        %v1672 = vpop.f32.mrf.mxu0
        %v1673 = vadd.f32 0.0, %v1672
        %v1674 = vpop.f32.mrf.mxu0
        %1675 = vmatprep.mubr.bf16.mxu0 0
        %1676 = vmatmul.mubr.bf16.gmra.mxu0 %v1546
        %v1677 = vpop.f32.mrf.mxu0
        %v1678 = vadd.f32 0.0, %v1677
        %v1679 = vpop.f32.mrf.mxu0
        %v1680 = vpop.f32.mrf.mxu0
        %v1681 = vadd.f32 0.0, %v1680
        %v1682 = vpop.f32.mrf.mxu0
        %1683 = vmatprep.mubr.bf16.mxu0 0
        %1684 = vmatmul.mubr.bf16.gmra.mxu0 %v1547
        %v1685 = vpop.f32.mrf.mxu0
        %v1686 = vadd.f32 0.0, %v1685
        %v1687 = vpop.f32.mrf.mxu0
        %v1688 = vpop.f32.mrf.mxu0
        %v1689 = vadd.f32 0.0, %v1688
        %v1690 = vpop.f32.mrf.mxu0
        %1691 = vmatprep.mubr.bf16.mxu0 0
        %1692 = vmatmul.mubr.bf16.gmra.mxu0 %v1548
        %v1693 = vpop.f32.mrf.mxu0
        %v1694 = vadd.f32 0.0, %v1693
        %v1695 = vpop.f32.mrf.mxu0
        %v1696 = vpop.f32.mrf.mxu0
        %v1697 = vadd.f32 0.0, %v1696
        %v1698 = vpop.f32.mrf.mxu0
        %1699 = vmatprep.mubr.bf16.mxu0 0
        %1700 = vmatmul.mubr.bf16.gmra.mxu0 %v1549
        %v1701 = vpop.f32.mrf.mxu0
        %v1702 = vadd.f32 0.0, %v1701
        %v1703 = vpop.f32.mrf.mxu0
        %v1704 = vpop.f32.mrf.mxu0
        %v1705 = vadd.f32 0.0, %v1704
        %v1706 = vpop.f32.mrf.mxu0
        %1707 = vmatprep.mubr.bf16.mxu0 0
        %1708 = vmatmul.mubr.bf16.gmra.mxu0 %v1550
        %v1709 = vpop.f32.mrf.mxu0
        %v1710 = vadd.f32 0.0, %v1709
        %v1711 = vpop.f32.mrf.mxu0
        %v1712 = vpop.f32.mrf.mxu0
        %v1713 = vadd.f32 0.0, %v1712
        %v1714 = vpop.f32.mrf.mxu0
        %1715 = vmatprep.mubr.bf16.mxu0 0
        %1716 = vmatmul.mubr.bf16.gmra.mxu0 %v1551
        %v1717 = vpop.f32.mrf.mxu0
        %v1718 = vadd.f32 0.0, %v1717
        %v1719 = vpop.f32.mrf.mxu0
        %v1720 = vpop.f32.mrf.mxu0
        %v1721 = vadd.f32 0.0, %v1720
        %v1722 = vpop.f32.mrf.mxu0
        %1723 = vmatprep.mubr.bf16.mxu0 0
        %1724 = vmatmul.mubr.bf16.gmra.mxu0 %v1552
        %v1725 = vpop.f32.mrf.mxu0
        %v1726 = vadd.f32 0.0, %v1725
        %v1727 = vpop.f32.mrf.mxu0
        %v1728 = vpop.f32.mrf.mxu0
        %v1729 = vadd.f32 0.0, %v1728
        %v1730 = vpop.f32.mrf.mxu0
        %1731 = vmatprep.mubr.bf16.mxu0 0
        %1732 = vmatmul.mubr.bf16.gmra.mxu0 %v1553
        %v1733 = vpop.f32.mrf.mxu0
        %v1734 = vadd.f32 0.0, %v1733
        %v1735 = vpop.f32.mrf.mxu0
        %v1736 = vpop.f32.mrf.mxu0
        %v1737 = vadd.f32 0.0, %v1736
        %v1738 = vpop.f32.mrf.mxu0
        %1739 = vmatprep.mubr.bf16.mxu0 0
        %1740 = vmatmul.mubr.bf16.gmra.mxu0 %v1554
        %v1741 = vpop.f32.mrf.mxu0
        %v1742 = vadd.f32 0.0, %v1741
        %v1743 = vpop.f32.mrf.mxu0
        %v1744 = vpop.f32.mrf.mxu0
        %v1745 = vadd.f32 0.0, %v1744
        %v1746 = vpop.f32.mrf.mxu0
        %1747 = vmatprep.mubr.bf16.mxu0 0
        %1748 = vmatmul.mubr.bf16.gmra.mxu0 %v1555
        %v1749 = vpop.f32.mrf.mxu0
        %v1750 = vadd.f32 0.0, %v1749
        %v1751 = vpop.f32.mrf.mxu0
        %v1752 = vpop.f32.mrf.mxu0
        %v1753 = vadd.f32 0.0, %v1752
        %v1754 = vpop.f32.mrf.mxu0
        %1755 = vmatprep.mubr.bf16.mxu0 0
        %1756 = vmatmul.mubr.bf16.gmra.mxu0 %v1556
        %v1757 = vpop.f32.mrf.mxu0
        %v1758 = vadd.f32 0.0, %v1757
        %v1759 = vpop.f32.mrf.mxu0
        %v1760 = vpop.f32.mrf.mxu0
        %v1761 = vadd.f32 0.0, %v1760
        %v1762 = vpop.f32.mrf.mxu0
        %1763 = vmatprep.mubr.bf16.mxu0 0
        %1764 = vmatmul.mubr.bf16.gmra.mxu0 %v1557
        %v1765 = vpop.f32.mrf.mxu0
        %v1766 = vadd.f32 0.0, %v1765
        %v1767 = vpop.f32.mrf.mxu0
        %v1768 = vpop.f32.mrf.mxu0
        %v1769 = vadd.f32 0.0, %v1768
        %v1770 = vpop.f32.mrf.mxu0
        %1771 = vmatprep.mubr.bf16.mxu0 0
        %1772 = vmatmul.mubr.bf16.gmra.mxu0 %v1558
        %v1773 = vpop.f32.mrf.mxu0
        %v1774 = vadd.f32 0.0, %v1773
        %v1775 = vpop.f32.mrf.mxu0
        %v1776 = vpop.f32.mrf.mxu0
        %v1777 = vpop.f32.mrf.mxu0
        %1778 = vdwg.mxu0
        %v1779 = vld [vmem:[#allocation3] sm:$0xff]
        %v1780 = vld [vmem:[#allocation3 + $0x8] sm:$0xff]
        %v1781 = vld [vmem:[#allocation3 + $0x10] sm:$0xff]
        %v1782 = vld [vmem:[#allocation3 + $0x18] sm:$0xff]
        %v1783 = vld [vmem:[#allocation3 + $0x20] sm:$0xff]
        %v1784 = vld [vmem:[#allocation3 + $0x28] sm:$0xff]
        %v1785 = vld [vmem:[#allocation3 + $0x30] sm:$0xff]
        %v1786 = vld [vmem:[#allocation3 + $0x38] sm:$0xff]
        %v1787 = vld [vmem:[#allocation3 + $0x40] sm:$0xff]
        %v1788 = vld [vmem:[#allocation3 + $0x48] sm:$0xff]
        %v1789 = vld [vmem:[#allocation3 + $0x50] sm:$0xff]
        %v1790 = vld [vmem:[#allocation3 + $0x58] sm:$0xff]
        %v1791 = vld [vmem:[#allocation3 + $0x60] sm:$0xff]
        %v1792 = vld [vmem:[#allocation3 + $0x68] sm:$0xff]
        %v1793 = vld [vmem:[#allocation3 + $0x70] sm:$0xff]
        %v1794 = vld [vmem:[#allocation3 + $0x78] sm:$0xff]
        %v1795 = vld [vmem:[#allocation3 + $0x80] sm:$0xff]
        %v1796 = vld [vmem:[#allocation3 + $0x88] sm:$0xff]
        %v1797 = vld [vmem:[#allocation3 + $0x90] sm:$0xff]
        %v1798 = vld [vmem:[#allocation3 + $0x98] sm:$0xff]
        %v1799 = vld [vmem:[#allocation3 + $0xa0] sm:$0xff]
        %v1800 = vld [vmem:[#allocation3 + $0xa8] sm:$0xff]
        %v1801 = vld [vmem:[#allocation3 + $0xb0] sm:$0xff]
        %v1802 = vld [vmem:[#allocation3 + $0xb8] sm:$0xff]
        %v1803 = vld [vmem:[#allocation3 + $0xc0] sm:$0xff]
        %v1804 = vld [vmem:[#allocation3 + $0xc8] sm:$0xff]
        %v1805 = vld [vmem:[#allocation3 + $0xd0] sm:$0xff]
        %v1806 = vld [vmem:[#allocation3 + $0xd8] sm:$0xff]
        %v1807 = vld [vmem:[#allocation3 + $0xe0] sm:$0xff]
        %v1808 = vadd.f32 %v1779, %v1662
        %v1809 = vadd.f32 %v1780, %v1665
        %v1810 = vadd.f32 %v1781, %v1670
        %v1811 = vadd.f32 %v1782, %v1673
        %v1812 = vadd.f32 %v1783, %v1678
        %v1813 = vadd.f32 %v1784, %v1681
        %v1814 = vadd.f32 %v1785, %v1686
        %v1815 = vadd.f32 %v1786, %v1689
        %v1816 = vadd.f32 %v1787, %v1694
        %v1817 = vadd.f32 %v1788, %v1697
        %v1818 = vadd.f32 %v1789, %v1702
        %v1819 = vadd.f32 %v1790, %v1705
        %v1820 = vadd.f32 %v1791, %v1710
        %v1821 = vadd.f32 %v1792, %v1713
        %v1822 = vadd.f32 %v1793, %v1718
        %v1823 = vadd.f32 %v1794, %v1721
        %v1824 = vadd.f32 %v1795, %v1726
        %v1825 = vadd.f32 %v1796, %v1729
        %v1826 = vadd.f32 %v1797, %v1734
        %v1827 = vadd.f32 %v1798, %v1737
        %v1828 = vadd.f32 %v1799, %v1742
        %v1829 = vadd.f32 %v1800, %v1745
        %v1830 = vadd.f32 %v1801, %v1750
        %v1831 = vadd.f32 %v1802, %v1753
        %v1832 = vadd.f32 %v1803, %v1758
        %v1833 = vadd.f32 %v1804, %v1761
        %v1834 = vadd.f32 %v1805, %v1766
        %v1835 = vadd.f32 %v1806, %v1769
        %v1836 = vadd.f32 %v1807, %v1774
        %1837 = vst [vmem:[#allocation3] sm:$0xff] %v1808
        %1838 = vst [vmem:[#allocation3 + $0x8] sm:$0xff] %v1809
        %1839 = vst [vmem:[#allocation3 + $0x10] sm:$0xff] %v1810
        %1840 = vst [vmem:[#allocation3 + $0x18] sm:$0xff] %v1811
        %1841 = vst [vmem:[#allocation3 + $0x20] sm:$0xff] %v1812
        %1842 = vst [vmem:[#allocation3 + $0x28] sm:$0xff] %v1813
        %1843 = vst [vmem:[#allocation3 + $0x30] sm:$0xff] %v1814
        %1844 = vst [vmem:[#allocation3 + $0x38] sm:$0xff] %v1815
        %1845 = vst [vmem:[#allocation3 + $0x40] sm:$0xff] %v1816
        %1846 = vst [vmem:[#allocation3 + $0x48] sm:$0xff] %v1817
        %1847 = vst [vmem:[#allocation3 + $0x50] sm:$0xff] %v1818
        %1848 = vst [vmem:[#allocation3 + $0x58] sm:$0xff] %v1819
        %1849 = vst [vmem:[#allocation3 + $0x60] sm:$0xff] %v1820
        %1850 = vst [vmem:[#allocation3 + $0x68] sm:$0xff] %v1821
        %1851 = vst [vmem:[#allocation3 + $0x70] sm:$0xff] %v1822
        %1852 = vst [vmem:[#allocation3 + $0x78] sm:$0xff] %v1823
        %1853 = vst [vmem:[#allocation3 + $0x80] sm:$0xff] %v1824
        %1854 = vst [vmem:[#allocation3 + $0x88] sm:$0xff] %v1825
        %1855 = vst [vmem:[#allocation3 + $0x90] sm:$0xff] %v1826
        %1856 = vst [vmem:[#allocation3 + $0x98] sm:$0xff] %v1827
        %1857 = vst [vmem:[#allocation3 + $0xa0] sm:$0xff] %v1828
        %1858 = vst [vmem:[#allocation3 + $0xa8] sm:$0xff] %v1829
        %1859 = vst [vmem:[#allocation3 + $0xb0] sm:$0xff] %v1830
        %1860 = vst [vmem:[#allocation3 + $0xb8] sm:$0xff] %v1831
        %1861 = vst [vmem:[#allocation3 + $0xc0] sm:$0xff] %v1832
        %1862 = vst [vmem:[#allocation3 + $0xc8] sm:$0xff] %v1833
        %1863 = vst [vmem:[#allocation3 + $0xd0] sm:$0xff] %v1834
        %1864 = vst [vmem:[#allocation3 + $0xd8] sm:$0xff] %v1835
        %1865 = vst [vmem:[#allocation3 + $0xe0] sm:$0xff] %v1836
        %v1866 = vld [vmem:[%s788] ss:$2 sm:$0xff]
        %v1867 = vld [vmem:[%s790] ss:$2 sm:$0xff]
        %v1868 = vld [vmem:[%s792] ss:$2 sm:$0xff]
        %v1869 = vld [vmem:[%s794] ss:$2 sm:$0xff]
        %v1870 = vld [vmem:[%s796] ss:$2 sm:$0xff]
        %v1871 = vld [vmem:[%s798] ss:$2 sm:$0xff]
        %v1872 = vld [vmem:[%s800] ss:$2 sm:$0xff]
        %v1873 = vld [vmem:[%s802] ss:$2 sm:$0xff]
        %v1874 = vld [vmem:[%s804] ss:$2 sm:$0xff]
        %v1875 = vld [vmem:[%s806] ss:$2 sm:$0xff]
        %v1876 = vld [vmem:[%s808] ss:$2 sm:$0xff]
        %v1877 = vld [vmem:[%s810] ss:$2 sm:$0xff]
        %v1878 = vld [vmem:[%s812] ss:$2 sm:$0xff]
        %v1879 = vld [vmem:[%s814] ss:$2 sm:$0xff]
        %v1880 = vld [vmem:[%s816] ss:$2 sm:$0xff]
        %v1881 = vld [vmem:[%s818] ss:$2 sm:$0xff]
        %v1882 = vld [vmem:[%s820] ss:$2 sm:$0xff]
        %v1883 = vld [vmem:[%s822] ss:$2 sm:$0xff]
        %v1884 = vld [vmem:[%s824] ss:$2 sm:$0xff]
        %v1885 = vld [vmem:[%s826] ss:$2 sm:$0xff]
        %v1886 = vld [vmem:[%s828] ss:$2 sm:$0xff]
        %v1887 = vld [vmem:[%s830] ss:$2 sm:$0xff]
        %v1888 = vld [vmem:[%s832] ss:$2 sm:$0xff]
        %v1889 = vld [vmem:[%s834] ss:$2 sm:$0xff]
        %v1890 = vld [vmem:[%s836] ss:$2 sm:$0xff]
        %v1891 = vld [vmem:[%s838] ss:$2 sm:$0xff]
        %v1892 = vld [vmem:[%s840] ss:$2 sm:$0xff]
        %s1893 = scalar_lea.vmem [#allocation2], 479
        %v1894 = vld [vmem:[%s1893] ss:$2 sm:$0xff]
        %s1895 = scalar_lea.vmem [#allocation2], 495
        %v1896 = vld [vmem:[%s1895] ss:$2 sm:$0xff]
        %v1897 = vpack.c.bf16 %v1867, %v1866
        %v1898 = vpack.c.bf16 %v1869, %v1868
        %v1899 = vpack.c.bf16 %v1871, %v1870
        %v1900 = vpack.c.bf16 %v1873, %v1872
        %v1901 = vpack.c.bf16 %v1875, %v1874
        %v1902 = vpack.c.bf16 %v1877, %v1876
        %v1903 = vpack.c.bf16 %v1879, %v1878
        %v1904 = vpack.c.bf16 %v1881, %v1880
        %v1905 = vpack.c.bf16 %v1883, %v1882
        %v1906 = vpack.c.bf16 %v1885, %v1884
        %v1907 = vpack.c.bf16 %v1887, %v1886
        %v1908 = vpack.c.bf16 %v1889, %v1888
        %v1909 = vpack.c.bf16 %v1891, %v1890
        %v1910 = vpack.c.bf16 %v1894, %v1892
        %v1911 = vpack.c.bf16 %v1896, %v1896
        %s1912 = sadd.s32 %s857, 3
        %s1913 = smul.u32 %s1912, 16
        %s1914 = smul.addr %s1913, 4
        %s1915 = scalar_lea.vmem %s3, %s1914
        %v1916 = vld [vmem:[%s1915] sm:$0xf]
        %v1917 = vld [vmem:[%s1915 + $0x4] sm:$0xf]
        %v1918 = vld [vmem:[%s1915 + $0x8] sm:$0xf]
        %v1919 = vld [vmem:[%s1915 + $0xc] sm:$0xf]
        %v1920 = vld [vmem:[%s1915 + $0x10] sm:$0xf]
        %v1921 = vld [vmem:[%s1915 + $0x14] sm:$0xf]
        %v1922 = vld [vmem:[%s1915 + $0x18] sm:$0xf]
        %v1923 = vld [vmem:[%s1915 + $0x1c] sm:$0xf]
        %v1924 = vld [vmem:[%s1915 + $0x20] sm:$0xf]
        %v1925 = vld [vmem:[%s1915 + $0x24] sm:$0xf]
        %v1926 = vld [vmem:[%s1915 + $0x28] sm:$0xf]
        %v1927 = vld [vmem:[%s1915 + $0x2c] sm:$0xf]
        %v1928 = vld [vmem:[%s1915 + $0x30] sm:$0xf]
        %v1929 = vld [vmem:[%s1915 + $0x34] sm:$0xf]
        %v1930 = vld [vmem:[%s1915 + $0x38] sm:$0xf]
        %v1931 = vld [vmem:[%s1915 + $0x3c] sm:$0xf]
        %v1948 = vunpack.c.l.b16 %v1916
        %v1949 = vunpack.c.l.b16 %v1917
        %v1950 = vunpack.c.l.b16 %v1918
        %v1951 = vunpack.c.l.b16 %v1919
        %v1952 = vunpack.c.l.b16 %v1920
        %v1953 = vunpack.c.l.b16 %v1921
        %v1954 = vunpack.c.l.b16 %v1922
        %v1955 = vunpack.c.l.b16 %v1923
        %v1956 = vunpack.c.l.b16 %v1924
        %v1957 = vunpack.c.l.b16 %v1925
        %v1958 = vunpack.c.l.b16 %v1926
        %v1959 = vunpack.c.l.b16 %v1927
        %v1960 = vunpack.c.l.b16 %v1928
        %v1961 = vunpack.c.l.b16 %v1929
        %v1962 = vunpack.c.l.b16 %v1930
        %v1963 = vunpack.c.l.b16 %v1931
        %v1964 = vpack.c.b16 %v1949, %v1948
        %v1965 = vpack.c.b16 %v1951, %v1950
        %v1966 = vpack.c.b16 %v1953, %v1952
        %v1967 = vpack.c.b16 %v1955, %v1954
        %v1968 = vpack.c.b16 %v1957, %v1956
        %v1969 = vpack.c.b16 %v1959, %v1958
        %v1970 = vpack.c.b16 %v1961, %v1960
        %v1971 = vpack.c.b16 %v1963, %v1962
        %1980 = vmatprep.subr.bf16.mxu0 0
        %1981 = vmatpush1.bf16.msra.mxu0 %v1971
        %1982 = vmatprep.subr.bf16.mxu0 0
        %1983 = vmatpush1.bf16.msra.mxu0 %v1970
        %1984 = vmatprep.subr.bf16.mxu0 0
        %1985 = vmatpush1.bf16.msra.mxu0 %v1969
        %1986 = vmatprep.subr.bf16.mxu0 0
        %1987 = vmatpush1.bf16.msra.mxu0 %v1968
        %1988 = vmatprep.subr.bf16.mxu0 0
        %1989 = vmatpush1.bf16.msra.mxu0 %v1967
        %1990 = vmatprep.subr.bf16.mxu0 0
        %1991 = vmatpush1.bf16.msra.mxu0 %v1966
        %1992 = vmatprep.subr.bf16.mxu0 0
        %1993 = vmatpush1.bf16.msra.mxu0 %v1965
        %1994 = vmatprep.subr.bf16.mxu0 0
        %1995 = vmatpush1.bf16.msra.mxu0 %v1964
        %1996 = vmatprep.subr.bf16.mxu0 0
        %1997 = vmatpush2.bf16.msra.mxu0 0
        %1998 = vmatprep.subr.bf16.mxu0 0
        %1999 = vmatpush2.bf16.msra.mxu0 0
        %2000 = vmatprep.subr.bf16.mxu0 0
        %2001 = vmatpush2.bf16.msra.mxu0 0
        %2002 = vmatprep.subr.bf16.mxu0 0
        %2003 = vmatpush2.bf16.msra.mxu0 0
        %2004 = vmatprep.subr.bf16.mxu0 0
        %2005 = vmatpush2.bf16.msra.mxu0 0
        %2006 = vmatprep.subr.bf16.mxu0 0
        %2007 = vmatpush2.bf16.msra.mxu0 0
        %2008 = vmatprep.subr.bf16.mxu0 0
        %2009 = vmatpush2.bf16.msra.mxu0 0
        %2010 = vmatprep.subr.bf16.mxu0 0
        %2011 = vmatpush2.bf16.msra.mxu0 0
        %2012 = vmatprep.mubr.bf16.mxu0 0
        %2013 = vmatmul.mubr.bf16.gmra.mxu0 %v1897
        %v2014 = vpop.f32.mrf.mxu0
        %v2015 = vadd.f32 0.0, %v2014
        %v2016 = vpop.f32.mrf.mxu0
        %v2017 = vpop.f32.mrf.mxu0
        %v2018 = vadd.f32 0.0, %v2017
        %v2019 = vpop.f32.mrf.mxu0
        %2020 = vmatprep.mubr.bf16.mxu0 0
        %2021 = vmatmul.mubr.bf16.gmra.mxu0 %v1898
        %v2022 = vpop.f32.mrf.mxu0
        %v2023 = vadd.f32 0.0, %v2022
        %v2024 = vpop.f32.mrf.mxu0
        %v2025 = vpop.f32.mrf.mxu0
        %v2026 = vadd.f32 0.0, %v2025
        %v2027 = vpop.f32.mrf.mxu0
        %2028 = vmatprep.mubr.bf16.mxu0 0
        %2029 = vmatmul.mubr.bf16.gmra.mxu0 %v1899
        %v2030 = vpop.f32.mrf.mxu0
        %v2031 = vadd.f32 0.0, %v2030
        %v2032 = vpop.f32.mrf.mxu0
        %v2033 = vpop.f32.mrf.mxu0
        %v2034 = vadd.f32 0.0, %v2033
        %v2035 = vpop.f32.mrf.mxu0
        %2036 = vmatprep.mubr.bf16.mxu0 0
        %2037 = vmatmul.mubr.bf16.gmra.mxu0 %v1900
        %v2038 = vpop.f32.mrf.mxu0
        %v2039 = vadd.f32 0.0, %v2038
        %v2040 = vpop.f32.mrf.mxu0
        %v2041 = vpop.f32.mrf.mxu0
        %v2042 = vadd.f32 0.0, %v2041
        %v2043 = vpop.f32.mrf.mxu0
        %2044 = vmatprep.mubr.bf16.mxu0 0
        %2045 = vmatmul.mubr.bf16.gmra.mxu0 %v1901
        %v2046 = vpop.f32.mrf.mxu0
        %v2047 = vadd.f32 0.0, %v2046
        %v2048 = vpop.f32.mrf.mxu0
        %v2049 = vpop.f32.mrf.mxu0
        %v2050 = vadd.f32 0.0, %v2049
        %v2051 = vpop.f32.mrf.mxu0
        %2052 = vmatprep.mubr.bf16.mxu0 0
        %2053 = vmatmul.mubr.bf16.gmra.mxu0 %v1902
        %v2054 = vpop.f32.mrf.mxu0
        %v2055 = vadd.f32 0.0, %v2054
        %v2056 = vpop.f32.mrf.mxu0
        %v2057 = vpop.f32.mrf.mxu0
        %v2058 = vadd.f32 0.0, %v2057
        %v2059 = vpop.f32.mrf.mxu0
        %2060 = vmatprep.mubr.bf16.mxu0 0
        %2061 = vmatmul.mubr.bf16.gmra.mxu0 %v1903
        %v2062 = vpop.f32.mrf.mxu0
        %v2063 = vadd.f32 0.0, %v2062
        %v2064 = vpop.f32.mrf.mxu0
        %v2065 = vpop.f32.mrf.mxu0
        %v2066 = vadd.f32 0.0, %v2065
        %v2067 = vpop.f32.mrf.mxu0
        %2068 = vmatprep.mubr.bf16.mxu0 0
        %2069 = vmatmul.mubr.bf16.gmra.mxu0 %v1904
        %v2070 = vpop.f32.mrf.mxu0
        %v2071 = vadd.f32 0.0, %v2070
        %v2072 = vpop.f32.mrf.mxu0
        %v2073 = vpop.f32.mrf.mxu0
        %v2074 = vadd.f32 0.0, %v2073
        %v2075 = vpop.f32.mrf.mxu0
        %2076 = vmatprep.mubr.bf16.mxu0 0
        %2077 = vmatmul.mubr.bf16.gmra.mxu0 %v1905
        %v2078 = vpop.f32.mrf.mxu0
        %v2079 = vadd.f32 0.0, %v2078
        %v2080 = vpop.f32.mrf.mxu0
        %v2081 = vpop.f32.mrf.mxu0
        %v2082 = vadd.f32 0.0, %v2081
        %v2083 = vpop.f32.mrf.mxu0
        %2084 = vmatprep.mubr.bf16.mxu0 0
        %2085 = vmatmul.mubr.bf16.gmra.mxu0 %v1906
        %v2086 = vpop.f32.mrf.mxu0
        %v2087 = vadd.f32 0.0, %v2086
        %v2088 = vpop.f32.mrf.mxu0
        %v2089 = vpop.f32.mrf.mxu0
        %v2090 = vadd.f32 0.0, %v2089
        %v2091 = vpop.f32.mrf.mxu0
        %2092 = vmatprep.mubr.bf16.mxu0 0
        %2093 = vmatmul.mubr.bf16.gmra.mxu0 %v1907
        %v2094 = vpop.f32.mrf.mxu0
        %v2095 = vadd.f32 0.0, %v2094
        %v2096 = vpop.f32.mrf.mxu0
        %v2097 = vpop.f32.mrf.mxu0
        %v2098 = vadd.f32 0.0, %v2097
        %v2099 = vpop.f32.mrf.mxu0
        %2100 = vmatprep.mubr.bf16.mxu0 0
        %2101 = vmatmul.mubr.bf16.gmra.mxu0 %v1908
        %v2102 = vpop.f32.mrf.mxu0
        %v2103 = vadd.f32 0.0, %v2102
        %v2104 = vpop.f32.mrf.mxu0
        %v2105 = vpop.f32.mrf.mxu0
        %v2106 = vadd.f32 0.0, %v2105
        %v2107 = vpop.f32.mrf.mxu0
        %2108 = vmatprep.mubr.bf16.mxu0 0
        %2109 = vmatmul.mubr.bf16.gmra.mxu0 %v1909
        %v2110 = vpop.f32.mrf.mxu0
        %v2111 = vadd.f32 0.0, %v2110
        %v2112 = vpop.f32.mrf.mxu0
        %v2113 = vpop.f32.mrf.mxu0
        %v2114 = vadd.f32 0.0, %v2113
        %v2115 = vpop.f32.mrf.mxu0
        %2116 = vmatprep.mubr.bf16.mxu0 0
        %2117 = vmatmul.mubr.bf16.gmra.mxu0 %v1910
        %v2118 = vpop.f32.mrf.mxu0
        %v2119 = vadd.f32 0.0, %v2118
        %v2120 = vpop.f32.mrf.mxu0
        %v2121 = vpop.f32.mrf.mxu0
        %v2122 = vadd.f32 0.0, %v2121
        %v2123 = vpop.f32.mrf.mxu0
        %2124 = vmatprep.mubr.bf16.mxu0 0
        %2125 = vmatmul.mubr.bf16.gmra.mxu0 %v1911
        %v2126 = vpop.f32.mrf.mxu0
        %v2127 = vadd.f32 0.0, %v2126
        %v2128 = vpop.f32.mrf.mxu0
        %v2129 = vpop.f32.mrf.mxu0
        %v2130 = vpop.f32.mrf.mxu0
        %2131 = vdwg.mxu0
        %v2132 = vld [vmem:[#allocation3] sm:$0xff]
        %v2133 = vld [vmem:[#allocation3 + $0x8] sm:$0xff]
        %v2134 = vld [vmem:[#allocation3 + $0x10] sm:$0xff]
        %v2135 = vld [vmem:[#allocation3 + $0x18] sm:$0xff]
        %v2136 = vld [vmem:[#allocation3 + $0x20] sm:$0xff]
        %v2137 = vld [vmem:[#allocation3 + $0x28] sm:$0xff]
        %v2138 = vld [vmem:[#allocation3 + $0x30] sm:$0xff]
        %v2139 = vld [vmem:[#allocation3 + $0x38] sm:$0xff]
        %v2140 = vld [vmem:[#allocation3 + $0x40] sm:$0xff]
        %v2141 = vld [vmem:[#allocation3 + $0x48] sm:$0xff]
        %v2142 = vld [vmem:[#allocation3 + $0x50] sm:$0xff]
        %v2143 = vld [vmem:[#allocation3 + $0x58] sm:$0xff]
        %v2144 = vld [vmem:[#allocation3 + $0x60] sm:$0xff]
        %v2145 = vld [vmem:[#allocation3 + $0x68] sm:$0xff]
        %v2146 = vld [vmem:[#allocation3 + $0x70] sm:$0xff]
        %v2147 = vld [vmem:[#allocation3 + $0x78] sm:$0xff]
        %v2148 = vld [vmem:[#allocation3 + $0x80] sm:$0xff]
        %v2149 = vld [vmem:[#allocation3 + $0x88] sm:$0xff]
        %v2150 = vld [vmem:[#allocation3 + $0x90] sm:$0xff]
        %v2151 = vld [vmem:[#allocation3 + $0x98] sm:$0xff]
        %v2152 = vld [vmem:[#allocation3 + $0xa0] sm:$0xff]
        %v2153 = vld [vmem:[#allocation3 + $0xa8] sm:$0xff]
        %v2154 = vld [vmem:[#allocation3 + $0xb0] sm:$0xff]
        %v2155 = vld [vmem:[#allocation3 + $0xb8] sm:$0xff]
        %v2156 = vld [vmem:[#allocation3 + $0xc0] sm:$0xff]
        %v2157 = vld [vmem:[#allocation3 + $0xc8] sm:$0xff]
        %v2158 = vld [vmem:[#allocation3 + $0xd0] sm:$0xff]
        %v2159 = vld [vmem:[#allocation3 + $0xd8] sm:$0xff]
        %v2160 = vld [vmem:[#allocation3 + $0xe0] sm:$0xff]
        %v2161 = vadd.f32 %v2132, %v2015
        %v2162 = vadd.f32 %v2133, %v2018
        %v2163 = vadd.f32 %v2134, %v2023
        %v2164 = vadd.f32 %v2135, %v2026
        %v2165 = vadd.f32 %v2136, %v2031
        %v2166 = vadd.f32 %v2137, %v2034
        %v2167 = vadd.f32 %v2138, %v2039
        %v2168 = vadd.f32 %v2139, %v2042
        %v2169 = vadd.f32 %v2140, %v2047
        %v2170 = vadd.f32 %v2141, %v2050
        %v2171 = vadd.f32 %v2142, %v2055
        %v2172 = vadd.f32 %v2143, %v2058
        %v2173 = vadd.f32 %v2144, %v2063
        %v2174 = vadd.f32 %v2145, %v2066
        %v2175 = vadd.f32 %v2146, %v2071
        %v2176 = vadd.f32 %v2147, %v2074
        %v2177 = vadd.f32 %v2148, %v2079
        %v2178 = vadd.f32 %v2149, %v2082
        %v2179 = vadd.f32 %v2150, %v2087
        %v2180 = vadd.f32 %v2151, %v2090
        %v2181 = vadd.f32 %v2152, %v2095
        %v2182 = vadd.f32 %v2153, %v2098
        %v2183 = vadd.f32 %v2154, %v2103
        %v2184 = vadd.f32 %v2155, %v2106
        %v2185 = vadd.f32 %v2156, %v2111
        %v2186 = vadd.f32 %v2157, %v2114
        %v2187 = vadd.f32 %v2158, %v2119
        %v2188 = vadd.f32 %v2159, %v2122
        %v2189 = vadd.f32 %v2160, %v2127
        %2190 = vst [vmem:[#allocation3] sm:$0xff] %v2161
        %2191 = vst [vmem:[#allocation3 + $0x8] sm:$0xff] %v2162
        %2192 = vst [vmem:[#allocation3 + $0x10] sm:$0xff] %v2163
        %2193 = vst [vmem:[#allocation3 + $0x18] sm:$0xff] %v2164
        %2194 = vst [vmem:[#allocation3 + $0x20] sm:$0xff] %v2165
        %2195 = vst [vmem:[#allocation3 + $0x28] sm:$0xff] %v2166
        %2196 = vst [vmem:[#allocation3 + $0x30] sm:$0xff] %v2167
        %2197 = vst [vmem:[#allocation3 + $0x38] sm:$0xff] %v2168
        %2198 = vst [vmem:[#allocation3 + $0x40] sm:$0xff] %v2169
        %2199 = vst [vmem:[#allocation3 + $0x48] sm:$0xff] %v2170
        %2200 = vst [vmem:[#allocation3 + $0x50] sm:$0xff] %v2171
        %2201 = vst [vmem:[#allocation3 + $0x58] sm:$0xff] %v2172
        %2202 = vst [vmem:[#allocation3 + $0x60] sm:$0xff] %v2173
        %2203 = vst [vmem:[#allocation3 + $0x68] sm:$0xff] %v2174
        %2204 = vst [vmem:[#allocation3 + $0x70] sm:$0xff] %v2175
        %2205 = vst [vmem:[#allocation3 + $0x78] sm:$0xff] %v2176
        %2206 = vst [vmem:[#allocation3 + $0x80] sm:$0xff] %v2177
        %2207 = vst [vmem:[#allocation3 + $0x88] sm:$0xff] %v2178
        %2208 = vst [vmem:[#allocation3 + $0x90] sm:$0xff] %v2179
        %2209 = vst [vmem:[#allocation3 + $0x98] sm:$0xff] %v2180
        %2210 = vst [vmem:[#allocation3 + $0xa0] sm:$0xff] %v2181
        %2211 = vst [vmem:[#allocation3 + $0xa8] sm:$0xff] %v2182
        %2212 = vst [vmem:[#allocation3 + $0xb0] sm:$0xff] %v2183
        %2213 = vst [vmem:[#allocation3 + $0xb8] sm:$0xff] %v2184
        %2214 = vst [vmem:[#allocation3 + $0xc0] sm:$0xff] %v2185
        %2215 = vst [vmem:[#allocation3 + $0xc8] sm:$0xff] %v2186
        %2216 = vst [vmem:[#allocation3 + $0xd0] sm:$0xff] %v2187
        %2217 = vst [vmem:[#allocation3 + $0xd8] sm:$0xff] %v2188
        %2218 = vst [vmem:[#allocation3 + $0xe0] sm:$0xff] %v2189
        %v2219 = vld [vmem:[%s1110] ss:$2 sm:$0xff]
        %v2220 = vld [vmem:[%s1112] ss:$2 sm:$0xff]
        %v2221 = vld [vmem:[%s1114] ss:$2 sm:$0xff]
        %v2222 = vld [vmem:[%s1116] ss:$2 sm:$0xff]
        %v2223 = vld [vmem:[%s1118] ss:$2 sm:$0xff]
        %v2224 = vld [vmem:[%s1120] ss:$2 sm:$0xff]
        %v2225 = vld [vmem:[%s1122] ss:$2 sm:$0xff]
        %v2226 = vld [vmem:[%s1124] ss:$2 sm:$0xff]
        %v2227 = vld [vmem:[%s1126] ss:$2 sm:$0xff]
        %v2228 = vld [vmem:[%s1128] ss:$2 sm:$0xff]
        %v2229 = vld [vmem:[%s1130] ss:$2 sm:$0xff]
        %v2230 = vld [vmem:[%s1132] ss:$2 sm:$0xff]
        %v2231 = vld [vmem:[%s1134] ss:$2 sm:$0xff]
        %v2232 = vld [vmem:[%s1136] ss:$2 sm:$0xff]
        %v2233 = vld [vmem:[%s1138] ss:$2 sm:$0xff]
        %v2234 = vld [vmem:[%s1140] ss:$2 sm:$0xff]
        %v2235 = vld [vmem:[%s1142] ss:$2 sm:$0xff]
        %v2236 = vld [vmem:[%s1144] ss:$2 sm:$0xff]
        %v2237 = vld [vmem:[%s1146] ss:$2 sm:$0xff]
        %v2238 = vld [vmem:[%s1148] ss:$2 sm:$0xff]
        %v2239 = vld [vmem:[%s1150] ss:$2 sm:$0xff]
        %v2240 = vld [vmem:[%s1152] ss:$2 sm:$0xff]
        %v2241 = vld [vmem:[%s1154] ss:$2 sm:$0xff]
        %v2242 = vld [vmem:[%s1156] ss:$2 sm:$0xff]
        %v2243 = vld [vmem:[%s1158] ss:$2 sm:$0xff]
        %v2244 = vld [vmem:[%s1160] ss:$2 sm:$0xff]
        %v2245 = vld [vmem:[%s1162] ss:$2 sm:$0xff]
        %s2246 = scalar_lea.vmem [#allocation2], 480
        %v2247 = vld [vmem:[%s2246] ss:$2 sm:$0xff]
        %s2248 = scalar_lea.vmem [#allocation2], 496
        %v2249 = vld [vmem:[%s2248] ss:$2 sm:$0xff]
        %v2250 = vpack.c.bf16 %v2220, %v2219
        %v2251 = vpack.c.bf16 %v2222, %v2221
        %v2252 = vpack.c.bf16 %v2224, %v2223
        %v2253 = vpack.c.bf16 %v2226, %v2225
        %v2254 = vpack.c.bf16 %v2228, %v2227
        %v2255 = vpack.c.bf16 %v2230, %v2229
        %v2256 = vpack.c.bf16 %v2232, %v2231
        %v2257 = vpack.c.bf16 %v2234, %v2233
        %v2258 = vpack.c.bf16 %v2236, %v2235
        %v2259 = vpack.c.bf16 %v2238, %v2237
        %v2260 = vpack.c.bf16 %v2240, %v2239
        %v2261 = vpack.c.bf16 %v2242, %v2241
        %v2262 = vpack.c.bf16 %v2244, %v2243
        %v2263 = vpack.c.bf16 %v2247, %v2245
        %v2264 = vpack.c.bf16 %v2249, %v2249
        %s2265 = sadd.s32 %s857, 4
        %s2266 = smul.u32 %s2265, 16
        %s2267 = smul.addr %s2266, 4
        %s2268 = scalar_lea.vmem %s3, %s2267
        %v2269 = vld [vmem:[%s2268] sm:$0xf]
        %v2270 = vld [vmem:[%s2268 + $0x4] sm:$0xf]
        %v2271 = vld [vmem:[%s2268 + $0x8] sm:$0xf]
        %v2272 = vld [vmem:[%s2268 + $0xc] sm:$0xf]
        %v2273 = vld [vmem:[%s2268 + $0x10] sm:$0xf]
        %v2274 = vld [vmem:[%s2268 + $0x14] sm:$0xf]
        %v2275 = vld [vmem:[%s2268 + $0x18] sm:$0xf]
        %v2276 = vld [vmem:[%s2268 + $0x1c] sm:$0xf]
        %v2277 = vld [vmem:[%s2268 + $0x20] sm:$0xf]
        %v2278 = vld [vmem:[%s2268 + $0x24] sm:$0xf]
        %v2279 = vld [vmem:[%s2268 + $0x28] sm:$0xf]
        %v2280 = vld [vmem:[%s2268 + $0x2c] sm:$0xf]
        %v2281 = vld [vmem:[%s2268 + $0x30] sm:$0xf]
        %v2282 = vld [vmem:[%s2268 + $0x34] sm:$0xf]
        %v2283 = vld [vmem:[%s2268 + $0x38] sm:$0xf]
        %v2284 = vld [vmem:[%s2268 + $0x3c] sm:$0xf]
        %v2301 = vunpack.c.l.b16 %v2269
        %v2302 = vunpack.c.l.b16 %v2270
        %v2303 = vunpack.c.l.b16 %v2271
        %v2304 = vunpack.c.l.b16 %v2272
        %v2305 = vunpack.c.l.b16 %v2273
        %v2306 = vunpack.c.l.b16 %v2274
        %v2307 = vunpack.c.l.b16 %v2275
        %v2308 = vunpack.c.l.b16 %v2276
        %v2309 = vunpack.c.l.b16 %v2277
        %v2310 = vunpack.c.l.b16 %v2278
        %v2311 = vunpack.c.l.b16 %v2279
        %v2312 = vunpack.c.l.b16 %v2280
        %v2313 = vunpack.c.l.b16 %v2281
        %v2314 = vunpack.c.l.b16 %v2282
        %v2315 = vunpack.c.l.b16 %v2283
        %v2316 = vunpack.c.l.b16 %v2284
        %v2317 = vpack.c.b16 %v2302, %v2301
        %v2318 = vpack.c.b16 %v2304, %v2303
        %v2319 = vpack.c.b16 %v2306, %v2305
        %v2320 = vpack.c.b16 %v2308, %v2307
        %v2321 = vpack.c.b16 %v2310, %v2309
        %v2322 = vpack.c.b16 %v2312, %v2311
        %v2323 = vpack.c.b16 %v2314, %v2313
        %v2324 = vpack.c.b16 %v2316, %v2315
        %2333 = vmatprep.subr.bf16.mxu0 0
        %2334 = vmatpush1.bf16.msra.mxu0 %v2324
        %2335 = vmatprep.subr.bf16.mxu0 0
        %2336 = vmatpush1.bf16.msra.mxu0 %v2323
        %2337 = vmatprep.subr.bf16.mxu0 0
        %2338 = vmatpush1.bf16.msra.mxu0 %v2322
        %2339 = vmatprep.subr.bf16.mxu0 0
        %2340 = vmatpush1.bf16.msra.mxu0 %v2321
        %2341 = vmatprep.subr.bf16.mxu0 0
        %2342 = vmatpush1.bf16.msra.mxu0 %v2320
        %2343 = vmatprep.subr.bf16.mxu0 0
        %2344 = vmatpush1.bf16.msra.mxu0 %v2319
        %2345 = vmatprep.subr.bf16.mxu0 0
        %2346 = vmatpush1.bf16.msra.mxu0 %v2318
        %2347 = vmatprep.subr.bf16.mxu0 0
        %2348 = vmatpush1.bf16.msra.mxu0 %v2317
        %2349 = vmatprep.subr.bf16.mxu0 0
        %2350 = vmatpush2.bf16.msra.mxu0 0
        %2351 = vmatprep.subr.bf16.mxu0 0
        %2352 = vmatpush2.bf16.msra.mxu0 0
        %2353 = vmatprep.subr.bf16.mxu0 0
        %2354 = vmatpush2.bf16.msra.mxu0 0
        %2355 = vmatprep.subr.bf16.mxu0 0
        %2356 = vmatpush2.bf16.msra.mxu0 0
        %2357 = vmatprep.subr.bf16.mxu0 0
        %2358 = vmatpush2.bf16.msra.mxu0 0
        %2359 = vmatprep.subr.bf16.mxu0 0
        %2360 = vmatpush2.bf16.msra.mxu0 0
        %2361 = vmatprep.subr.bf16.mxu0 0
        %2362 = vmatpush2.bf16.msra.mxu0 0
        %2363 = vmatprep.subr.bf16.mxu0 0
        %2364 = vmatpush2.bf16.msra.mxu0 0
        %2365 = vmatprep.mubr.bf16.mxu0 0
        %2366 = vmatmul.mubr.bf16.gmra.mxu0 %v2250
        %v2367 = vpop.f32.mrf.mxu0
        %v2368 = vadd.f32 0.0, %v2367
        %v2369 = vpop.f32.mrf.mxu0
        %v2370 = vpop.f32.mrf.mxu0
        %v2371 = vadd.f32 0.0, %v2370
        %v2372 = vpop.f32.mrf.mxu0
        %2373 = vmatprep.mubr.bf16.mxu0 0
        %2374 = vmatmul.mubr.bf16.gmra.mxu0 %v2251
        %v2375 = vpop.f32.mrf.mxu0
        %v2376 = vadd.f32 0.0, %v2375
        %v2377 = vpop.f32.mrf.mxu0
        %v2378 = vpop.f32.mrf.mxu0
        %v2379 = vadd.f32 0.0, %v2378
        %v2380 = vpop.f32.mrf.mxu0
        %2381 = vmatprep.mubr.bf16.mxu0 0
        %2382 = vmatmul.mubr.bf16.gmra.mxu0 %v2252
        %v2383 = vpop.f32.mrf.mxu0
        %v2384 = vadd.f32 0.0, %v2383
        %v2385 = vpop.f32.mrf.mxu0
        %v2386 = vpop.f32.mrf.mxu0
        %v2387 = vadd.f32 0.0, %v2386
        %v2388 = vpop.f32.mrf.mxu0
        %2389 = vmatprep.mubr.bf16.mxu0 0
        %2390 = vmatmul.mubr.bf16.gmra.mxu0 %v2253
        %v2391 = vpop.f32.mrf.mxu0
        %v2392 = vadd.f32 0.0, %v2391
        %v2393 = vpop.f32.mrf.mxu0
        %v2394 = vpop.f32.mrf.mxu0
        %v2395 = vadd.f32 0.0, %v2394
        %v2396 = vpop.f32.mrf.mxu0
        %2397 = vmatprep.mubr.bf16.mxu0 0
        %2398 = vmatmul.mubr.bf16.gmra.mxu0 %v2254
        %v2399 = vpop.f32.mrf.mxu0
        %v2400 = vadd.f32 0.0, %v2399
        %v2401 = vpop.f32.mrf.mxu0
        %v2402 = vpop.f32.mrf.mxu0
        %v2403 = vadd.f32 0.0, %v2402
        %v2404 = vpop.f32.mrf.mxu0
        %2405 = vmatprep.mubr.bf16.mxu0 0
        %2406 = vmatmul.mubr.bf16.gmra.mxu0 %v2255
        %v2407 = vpop.f32.mrf.mxu0
        %v2408 = vadd.f32 0.0, %v2407
        %v2409 = vpop.f32.mrf.mxu0
        %v2410 = vpop.f32.mrf.mxu0
        %v2411 = vadd.f32 0.0, %v2410
        %v2412 = vpop.f32.mrf.mxu0
        %2413 = vmatprep.mubr.bf16.mxu0 0
        %2414 = vmatmul.mubr.bf16.gmra.mxu0 %v2256
        %v2415 = vpop.f32.mrf.mxu0
        %v2416 = vadd.f32 0.0, %v2415
        %v2417 = vpop.f32.mrf.mxu0
        %v2418 = vpop.f32.mrf.mxu0
        %v2419 = vadd.f32 0.0, %v2418
        %v2420 = vpop.f32.mrf.mxu0
        %2421 = vmatprep.mubr.bf16.mxu0 0
        %2422 = vmatmul.mubr.bf16.gmra.mxu0 %v2257
        %v2423 = vpop.f32.mrf.mxu0
        %v2424 = vadd.f32 0.0, %v2423
        %v2425 = vpop.f32.mrf.mxu0
        %v2426 = vpop.f32.mrf.mxu0
        %v2427 = vadd.f32 0.0, %v2426
        %v2428 = vpop.f32.mrf.mxu0
        %2429 = vmatprep.mubr.bf16.mxu0 0
        %2430 = vmatmul.mubr.bf16.gmra.mxu0 %v2258
        %v2431 = vpop.f32.mrf.mxu0
        %v2432 = vadd.f32 0.0, %v2431
        %v2433 = vpop.f32.mrf.mxu0
        %v2434 = vpop.f32.mrf.mxu0
        %v2435 = vadd.f32 0.0, %v2434
        %v2436 = vpop.f32.mrf.mxu0
        %2437 = vmatprep.mubr.bf16.mxu0 0
        %2438 = vmatmul.mubr.bf16.gmra.mxu0 %v2259
        %v2439 = vpop.f32.mrf.mxu0
        %v2440 = vadd.f32 0.0, %v2439
        %v2441 = vpop.f32.mrf.mxu0
        %v2442 = vpop.f32.mrf.mxu0
        %v2443 = vadd.f32 0.0, %v2442
        %v2444 = vpop.f32.mrf.mxu0
        %2445 = vmatprep.mubr.bf16.mxu0 0
        %2446 = vmatmul.mubr.bf16.gmra.mxu0 %v2260
        %v2447 = vpop.f32.mrf.mxu0
        %v2448 = vadd.f32 0.0, %v2447
        %v2449 = vpop.f32.mrf.mxu0
        %v2450 = vpop.f32.mrf.mxu0
        %v2451 = vadd.f32 0.0, %v2450
        %v2452 = vpop.f32.mrf.mxu0
        %2453 = vmatprep.mubr.bf16.mxu0 0
        %2454 = vmatmul.mubr.bf16.gmra.mxu0 %v2261
        %v2455 = vpop.f32.mrf.mxu0
        %v2456 = vadd.f32 0.0, %v2455
        %v2457 = vpop.f32.mrf.mxu0
        %v2458 = vpop.f32.mrf.mxu0
        %v2459 = vadd.f32 0.0, %v2458
        %v2460 = vpop.f32.mrf.mxu0
        %2461 = vmatprep.mubr.bf16.mxu0 0
        %2462 = vmatmul.mubr.bf16.gmra.mxu0 %v2262
        %v2463 = vpop.f32.mrf.mxu0
        %v2464 = vadd.f32 0.0, %v2463
        %v2465 = vpop.f32.mrf.mxu0
        %v2466 = vpop.f32.mrf.mxu0
        %v2467 = vadd.f32 0.0, %v2466
        %v2468 = vpop.f32.mrf.mxu0
        %2469 = vmatprep.mubr.bf16.mxu0 0
        %2470 = vmatmul.mubr.bf16.gmra.mxu0 %v2263
        %v2471 = vpop.f32.mrf.mxu0
        %v2472 = vadd.f32 0.0, %v2471
        %v2473 = vpop.f32.mrf.mxu0
        %v2474 = vpop.f32.mrf.mxu0
        %v2475 = vadd.f32 0.0, %v2474
        %v2476 = vpop.f32.mrf.mxu0
        %2477 = vmatprep.mubr.bf16.mxu0 0
        %2478 = vmatmul.mubr.bf16.gmra.mxu0 %v2264
        %v2479 = vpop.f32.mrf.mxu0
        %v2480 = vadd.f32 0.0, %v2479
        %v2481 = vpop.f32.mrf.mxu0
        %v2482 = vpop.f32.mrf.mxu0
        %v2483 = vpop.f32.mrf.mxu0
        %2484 = vdwg.mxu0
        %v2485 = vld [vmem:[#allocation3] sm:$0xff]
        %v2486 = vld [vmem:[#allocation3 + $0x8] sm:$0xff]
        %v2487 = vld [vmem:[#allocation3 + $0x10] sm:$0xff]
        %v2488 = vld [vmem:[#allocation3 + $0x18] sm:$0xff]
        %v2489 = vld [vmem:[#allocation3 + $0x20] sm:$0xff]
        %v2490 = vld [vmem:[#allocation3 + $0x28] sm:$0xff]
        %v2491 = vld [vmem:[#allocation3 + $0x30] sm:$0xff]
        %v2492 = vld [vmem:[#allocation3 + $0x38] sm:$0xff]
        %v2493 = vld [vmem:[#allocation3 + $0x40] sm:$0xff]
        %v2494 = vld [vmem:[#allocation3 + $0x48] sm:$0xff]
        %v2495 = vld [vmem:[#allocation3 + $0x50] sm:$0xff]
        %v2496 = vld [vmem:[#allocation3 + $0x58] sm:$0xff]
        %v2497 = vld [vmem:[#allocation3 + $0x60] sm:$0xff]
        %v2498 = vld [vmem:[#allocation3 + $0x68] sm:$0xff]
        %v2499 = vld [vmem:[#allocation3 + $0x70] sm:$0xff]
        %v2500 = vld [vmem:[#allocation3 + $0x78] sm:$0xff]
        %v2501 = vld [vmem:[#allocation3 + $0x80] sm:$0xff]
        %v2502 = vld [vmem:[#allocation3 + $0x88] sm:$0xff]
        %v2503 = vld [vmem:[#allocation3 + $0x90] sm:$0xff]
        %v2504 = vld [vmem:[#allocation3 + $0x98] sm:$0xff]
        %v2505 = vld [vmem:[#allocation3 + $0xa0] sm:$0xff]
        %v2506 = vld [vmem:[#allocation3 + $0xa8] sm:$0xff]
        %v2507 = vld [vmem:[#allocation3 + $0xb0] sm:$0xff]
        %v2508 = vld [vmem:[#allocation3 + $0xb8] sm:$0xff]
        %v2509 = vld [vmem:[#allocation3 + $0xc0] sm:$0xff]
        %v2510 = vld [vmem:[#allocation3 + $0xc8] sm:$0xff]
        %v2511 = vld [vmem:[#allocation3 + $0xd0] sm:$0xff]
        %v2512 = vld [vmem:[#allocation3 + $0xd8] sm:$0xff]
        %v2513 = vld [vmem:[#allocation3 + $0xe0] sm:$0xff]
        %v2514 = vadd.f32 %v2485, %v2368
        %v2515 = vadd.f32 %v2486, %v2371
        %v2516 = vadd.f32 %v2487, %v2376
        %v2517 = vadd.f32 %v2488, %v2379
        %v2518 = vadd.f32 %v2489, %v2384
        %v2519 = vadd.f32 %v2490, %v2387
        %v2520 = vadd.f32 %v2491, %v2392
        %v2521 = vadd.f32 %v2492, %v2395
        %v2522 = vadd.f32 %v2493, %v2400
        %v2523 = vadd.f32 %v2494, %v2403
        %v2524 = vadd.f32 %v2495, %v2408
        %v2525 = vadd.f32 %v2496, %v2411
        %v2526 = vadd.f32 %v2497, %v2416
        %v2527 = vadd.f32 %v2498, %v2419
        %v2528 = vadd.f32 %v2499, %v2424
        %v2529 = vadd.f32 %v2500, %v2427
        %v2530 = vadd.f32 %v2501, %v2432
        %v2531 = vadd.f32 %v2502, %v2435
        %v2532 = vadd.f32 %v2503, %v2440
        %v2533 = vadd.f32 %v2504, %v2443
        %v2534 = vadd.f32 %v2505, %v2448
        %v2535 = vadd.f32 %v2506, %v2451
        %v2536 = vadd.f32 %v2507, %v2456
        %v2537 = vadd.f32 %v2508, %v2459
        %v2538 = vadd.f32 %v2509, %v2464
        %v2539 = vadd.f32 %v2510, %v2467
        %v2540 = vadd.f32 %v2511, %v2472
        %v2541 = vadd.f32 %v2512, %v2475
        %v2542 = vadd.f32 %v2513, %v2480
        %2543 = vst [vmem:[#allocation3] sm:$0xff] %v2514
        %2544 = vst [vmem:[#allocation3 + $0x8] sm:$0xff] %v2515
        %2545 = vst [vmem:[#allocation3 + $0x10] sm:$0xff] %v2516
        %2546 = vst [vmem:[#allocation3 + $0x18] sm:$0xff] %v2517
        %2547 = vst [vmem:[#allocation3 + $0x20] sm:$0xff] %v2518
        %2548 = vst [vmem:[#allocation3 + $0x28] sm:$0xff] %v2519
        %2549 = vst [vmem:[#allocation3 + $0x30] sm:$0xff] %v2520
        %2550 = vst [vmem:[#allocation3 + $0x38] sm:$0xff] %v2521
        %2551 = vst [vmem:[#allocation3 + $0x40] sm:$0xff] %v2522
        %2552 = vst [vmem:[#allocation3 + $0x48] sm:$0xff] %v2523
        %2553 = vst [vmem:[#allocation3 + $0x50] sm:$0xff] %v2524
        %2554 = vst [vmem:[#allocation3 + $0x58] sm:$0xff] %v2525
        %2555 = vst [vmem:[#allocation3 + $0x60] sm:$0xff] %v2526
        %2556 = vst [vmem:[#allocation3 + $0x68] sm:$0xff] %v2527
        %2557 = vst [vmem:[#allocation3 + $0x70] sm:$0xff] %v2528
        %2558 = vst [vmem:[#allocation3 + $0x78] sm:$0xff] %v2529
        %2559 = vst [vmem:[#allocation3 + $0x80] sm:$0xff] %v2530
        %2560 = vst [vmem:[#allocation3 + $0x88] sm:$0xff] %v2531
        %2561 = vst [vmem:[#allocation3 + $0x90] sm:$0xff] %v2532
        %2562 = vst [vmem:[#allocation3 + $0x98] sm:$0xff] %v2533
        %2563 = vst [vmem:[#allocation3 + $0xa0] sm:$0xff] %v2534
        %2564 = vst [vmem:[#allocation3 + $0xa8] sm:$0xff] %v2535
        %2565 = vst [vmem:[#allocation3 + $0xb0] sm:$0xff] %v2536
        %2566 = vst [vmem:[#allocation3 + $0xb8] sm:$0xff] %v2537
        %2567 = vst [vmem:[#allocation3 + $0xc0] sm:$0xff] %v2538
        %2568 = vst [vmem:[#allocation3 + $0xc8] sm:$0xff] %v2539
        %2569 = vst [vmem:[#allocation3 + $0xd0] sm:$0xff] %v2540
        %2570 = vst [vmem:[#allocation3 + $0xd8] sm:$0xff] %v2541
        %2571 = vst [vmem:[#allocation3 + $0xe0] sm:$0xff] %v2542
        %v2572 = vld [vmem:[%s1490] ss:$2 sm:$0xff]
        %v2573 = vld [vmem:[%s1492] ss:$2 sm:$0xff]
        %v2574 = vld [vmem:[%s1494] ss:$2 sm:$0xff]
        %v2575 = vld [vmem:[%s1496] ss:$2 sm:$0xff]
        %v2576 = vld [vmem:[%s1498] ss:$2 sm:$0xff]
        %v2577 = vld [vmem:[%s1500] ss:$2 sm:$0xff]
        %v2578 = vld [vmem:[%s1502] ss:$2 sm:$0xff]
        %v2579 = vld [vmem:[%s1504] ss:$2 sm:$0xff]
        %v2580 = vld [vmem:[%s1506] ss:$2 sm:$0xff]
        %v2581 = vld [vmem:[%s1508] ss:$2 sm:$0xff]
        %v2582 = vld [vmem:[%s1510] ss:$2 sm:$0xff]
        %v2583 = vld [vmem:[%s1512] ss:$2 sm:$0xff]
        %v2584 = vld [vmem:[%s1514] ss:$2 sm:$0xff]
        %v2585 = vld [vmem:[%s1516] ss:$2 sm:$0xff]
        %v2586 = vld [vmem:[%s1518] ss:$2 sm:$0xff]
        %v2587 = vld [vmem:[%s1520] ss:$2 sm:$0xff]
        %v2588 = vld [vmem:[%s1522] ss:$2 sm:$0xff]
        %v2589 = vld [vmem:[%s1524] ss:$2 sm:$0xff]
        %v2590 = vld [vmem:[%s1526] ss:$2 sm:$0xff]
        %v2591 = vld [vmem:[%s1528] ss:$2 sm:$0xff]
        %v2592 = vld [vmem:[%s1530] ss:$2 sm:$0xff]
        %v2593 = vld [vmem:[%s1532] ss:$2 sm:$0xff]
        %v2594 = vld [vmem:[%s1534] ss:$2 sm:$0xff]
        %v2595 = vld [vmem:[%s1536] ss:$2 sm:$0xff]
        %v2596 = vld [vmem:[%s1538] ss:$2 sm:$0xff]
        %v2597 = vld [vmem:[%s1540] ss:$2 sm:$0xff]
        %v2598 = vld [vmem:[%s1542] ss:$2 sm:$0xff]
        %s2599 = scalar_lea.vmem [#allocation2], 481
        %v2600 = vld [vmem:[%s2599] ss:$2 sm:$0xff]
        %s2601 = scalar_lea.vmem [#allocation2], 497
        %v2602 = vld [vmem:[%s2601] ss:$2 sm:$0xff]
        %v2603 = vpack.c.bf16 %v2573, %v2572
        %v2604 = vpack.c.bf16 %v2575, %v2574
        %v2605 = vpack.c.bf16 %v2577, %v2576
        %v2606 = vpack.c.bf16 %v2579, %v2578
        %v2607 = vpack.c.bf16 %v2581, %v2580
        %v2608 = vpack.c.bf16 %v2583, %v2582
        %v2609 = vpack.c.bf16 %v2585, %v2584
        %v2610 = vpack.c.bf16 %v2587, %v2586
        %v2611 = vpack.c.bf16 %v2589, %v2588
        %v2612 = vpack.c.bf16 %v2591, %v2590
        %v2613 = vpack.c.bf16 %v2593, %v2592
        %v2614 = vpack.c.bf16 %v2595, %v2594
        %v2615 = vpack.c.bf16 %v2597, %v2596
        %v2616 = vpack.c.bf16 %v2600, %v2598
        %v2617 = vpack.c.bf16 %v2602, %v2602
        %s2618 = sadd.s32 %s857, 5
        %s2619 = smul.u32 %s2618, 16
        %s2620 = smul.addr %s2619, 4
        %s2621 = scalar_lea.vmem %s3, %s2620
        %v2622 = vld [vmem:[%s2621] sm:$0xf]
        %v2623 = vld [vmem:[%s2621 + $0x4] sm:$0xf]
        %v2624 = vld [vmem:[%s2621 + $0x8] sm:$0xf]
        %v2625 = vld [vmem:[%s2621 + $0xc] sm:$0xf]
        %v2626 = vld [vmem:[%s2621 + $0x10] sm:$0xf]
        %v2627 = vld [vmem:[%s2621 + $0x14] sm:$0xf]
        %v2628 = vld [vmem:[%s2621 + $0x18] sm:$0xf]
        %v2629 = vld [vmem:[%s2621 + $0x1c] sm:$0xf]
        %v2630 = vld [vmem:[%s2621 + $0x20] sm:$0xf]
        %v2631 = vld [vmem:[%s2621 + $0x24] sm:$0xf]
        %v2632 = vld [vmem:[%s2621 + $0x28] sm:$0xf]
        %v2633 = vld [vmem:[%s2621 + $0x2c] sm:$0xf]
        %v2634 = vld [vmem:[%s2621 + $0x30] sm:$0xf]
        %v2635 = vld [vmem:[%s2621 + $0x34] sm:$0xf]
        %v2636 = vld [vmem:[%s2621 + $0x38] sm:$0xf]
        %v2637 = vld [vmem:[%s2621 + $0x3c] sm:$0xf]
        %v2654 = vunpack.c.l.b16 %v2622
        %v2655 = vunpack.c.l.b16 %v2623
        %v2656 = vunpack.c.l.b16 %v2624
        %v2657 = vunpack.c.l.b16 %v2625
        %v2658 = vunpack.c.l.b16 %v2626
        %v2659 = vunpack.c.l.b16 %v2627
        %v2660 = vunpack.c.l.b16 %v2628
        %v2661 = vunpack.c.l.b16 %v2629
        %v2662 = vunpack.c.l.b16 %v2630
        %v2663 = vunpack.c.l.b16 %v2631
        %v2664 = vunpack.c.l.b16 %v2632
        %v2665 = vunpack.c.l.b16 %v2633
        %v2666 = vunpack.c.l.b16 %v2634
        %v2667 = vunpack.c.l.b16 %v2635
        %v2668 = vunpack.c.l.b16 %v2636
        %v2669 = vunpack.c.l.b16 %v2637
        %v2670 = vpack.c.b16 %v2655, %v2654
        %v2671 = vpack.c.b16 %v2657, %v2656
        %v2672 = vpack.c.b16 %v2659, %v2658
        %v2673 = vpack.c.b16 %v2661, %v2660
        %v2674 = vpack.c.b16 %v2663, %v2662
        %v2675 = vpack.c.b16 %v2665, %v2664
        %v2676 = vpack.c.b16 %v2667, %v2666
        %v2677 = vpack.c.b16 %v2669, %v2668
        %2686 = vmatprep.subr.bf16.mxu0 0
        %2687 = vmatpush1.bf16.msra.mxu0 %v2677
        %2688 = vmatprep.subr.bf16.mxu0 0
        %2689 = vmatpush1.bf16.msra.mxu0 %v2676
        %2690 = vmatprep.subr.bf16.mxu0 0
        %2691 = vmatpush1.bf16.msra.mxu0 %v2675
        %2692 = vmatprep.subr.bf16.mxu0 0
        %2693 = vmatpush1.bf16.msra.mxu0 %v2674
        %2694 = vmatprep.subr.bf16.mxu0 0
        %2695 = vmatpush1.bf16.msra.mxu0 %v2673
        %2696 = vmatprep.subr.bf16.mxu0 0
        %2697 = vmatpush1.bf16.msra.mxu0 %v2672
        %2698 = vmatprep.subr.bf16.mxu0 0
        %2699 = vmatpush1.bf16.msra.mxu0 %v2671
        %2700 = vmatprep.subr.bf16.mxu0 0
        %2701 = vmatpush1.bf16.msra.mxu0 %v2670
        %2702 = vmatprep.subr.bf16.mxu0 0
        %2703 = vmatpush2.bf16.msra.mxu0 0
        %2704 = vmatprep.subr.bf16.mxu0 0
        %2705 = vmatpush2.bf16.msra.mxu0 0
        %2706 = vmatprep.subr.bf16.mxu0 0
        %2707 = vmatpush2.bf16.msra.mxu0 0
        %2708 = vmatprep.subr.bf16.mxu0 0
        %2709 = vmatpush2.bf16.msra.mxu0 0
        %2710 = vmatprep.subr.bf16.mxu0 0
        %2711 = vmatpush2.bf16.msra.mxu0 0
        %2712 = vmatprep.subr.bf16.mxu0 0
        %2713 = vmatpush2.bf16.msra.mxu0 0
        %2714 = vmatprep.subr.bf16.mxu0 0
        %2715 = vmatpush2.bf16.msra.mxu0 0
        %2716 = vmatprep.subr.bf16.mxu0 0
        %2717 = vmatpush2.bf16.msra.mxu0 0
        %2718 = vmatprep.mubr.bf16.mxu0 0
        %2719 = vmatmul.mubr.bf16.gmra.mxu0 %v2603
        %v2720 = vpop.f32.mrf.mxu0
        %v2721 = vadd.f32 0.0, %v2720
        %v2722 = vpop.f32.mrf.mxu0
        %v2723 = vpop.f32.mrf.mxu0
        %v2724 = vadd.f32 0.0, %v2723
        %v2725 = vpop.f32.mrf.mxu0
        %2726 = vmatprep.mubr.bf16.mxu0 0
        %2727 = vmatmul.mubr.bf16.gmra.mxu0 %v2604
        %v2728 = vpop.f32.mrf.mxu0
        %v2729 = vadd.f32 0.0, %v2728
        %v2730 = vpop.f32.mrf.mxu0
        %v2731 = vpop.f32.mrf.mxu0
        %v2732 = vadd.f32 0.0, %v2731
        %v2733 = vpop.f32.mrf.mxu0
        %2734 = vmatprep.mubr.bf16.mxu0 0
        %2735 = vmatmul.mubr.bf16.gmra.mxu0 %v2605
        %v2736 = vpop.f32.mrf.mxu0
        %v2737 = vadd.f32 0.0, %v2736
        %v2738 = vpop.f32.mrf.mxu0
        %v2739 = vpop.f32.mrf.mxu0
        %v2740 = vadd.f32 0.0, %v2739
        %v2741 = vpop.f32.mrf.mxu0
        %2742 = vmatprep.mubr.bf16.mxu0 0
        %2743 = vmatmul.mubr.bf16.gmra.mxu0 %v2606
        %v2744 = vpop.f32.mrf.mxu0
        %v2745 = vadd.f32 0.0, %v2744
        %v2746 = vpop.f32.mrf.mxu0
        %v2747 = vpop.f32.mrf.mxu0
        %v2748 = vadd.f32 0.0, %v2747
        %v2749 = vpop.f32.mrf.mxu0
        %2750 = vmatprep.mubr.bf16.mxu0 0
        %2751 = vmatmul.mubr.bf16.gmra.mxu0 %v2607
        %v2752 = vpop.f32.mrf.mxu0
        %v2753 = vadd.f32 0.0, %v2752
        %v2754 = vpop.f32.mrf.mxu0
        %v2755 = vpop.f32.mrf.mxu0
        %v2756 = vadd.f32 0.0, %v2755
        %v2757 = vpop.f32.mrf.mxu0
        %2758 = vmatprep.mubr.bf16.mxu0 0
        %2759 = vmatmul.mubr.bf16.gmra.mxu0 %v2608
        %v2760 = vpop.f32.mrf.mxu0
        %v2761 = vadd.f32 0.0, %v2760
        %v2762 = vpop.f32.mrf.mxu0
        %v2763 = vpop.f32.mrf.mxu0
        %v2764 = vadd.f32 0.0, %v2763
        %v2765 = vpop.f32.mrf.mxu0
        %2766 = vmatprep.mubr.bf16.mxu0 0
        %2767 = vmatmul.mubr.bf16.gmra.mxu0 %v2609
        %v2768 = vpop.f32.mrf.mxu0
        %v2769 = vadd.f32 0.0, %v2768
        %v2770 = vpop.f32.mrf.mxu0
        %v2771 = vpop.f32.mrf.mxu0
        %v2772 = vadd.f32 0.0, %v2771
        %v2773 = vpop.f32.mrf.mxu0
        %2774 = vmatprep.mubr.bf16.mxu0 0
        %2775 = vmatmul.mubr.bf16.gmra.mxu0 %v2610
        %v2776 = vpop.f32.mrf.mxu0
        %v2777 = vadd.f32 0.0, %v2776
        %v2778 = vpop.f32.mrf.mxu0
        %v2779 = vpop.f32.mrf.mxu0
        %v2780 = vadd.f32 0.0, %v2779
        %v2781 = vpop.f32.mrf.mxu0
        %2782 = vmatprep.mubr.bf16.mxu0 0
        %2783 = vmatmul.mubr.bf16.gmra.mxu0 %v2611
        %v2784 = vpop.f32.mrf.mxu0
        %v2785 = vadd.f32 0.0, %v2784
        %v2786 = vpop.f32.mrf.mxu0
        %v2787 = vpop.f32.mrf.mxu0
        %v2788 = vadd.f32 0.0, %v2787
        %v2789 = vpop.f32.mrf.mxu0
        %2790 = vmatprep.mubr.bf16.mxu0 0
        %2791 = vmatmul.mubr.bf16.gmra.mxu0 %v2612
        %v2792 = vpop.f32.mrf.mxu0
        %v2793 = vadd.f32 0.0, %v2792
        %v2794 = vpop.f32.mrf.mxu0
        %v2795 = vpop.f32.mrf.mxu0
        %v2796 = vadd.f32 0.0, %v2795
        %v2797 = vpop.f32.mrf.mxu0
        %2798 = vmatprep.mubr.bf16.mxu0 0
        %2799 = vmatmul.mubr.bf16.gmra.mxu0 %v2613
        %v2800 = vpop.f32.mrf.mxu0
        %v2801 = vadd.f32 0.0, %v2800
        %v2802 = vpop.f32.mrf.mxu0
        %v2803 = vpop.f32.mrf.mxu0
        %v2804 = vadd.f32 0.0, %v2803
        %v2805 = vpop.f32.mrf.mxu0
        %2806 = vmatprep.mubr.bf16.mxu0 0
        %2807 = vmatmul.mubr.bf16.gmra.mxu0 %v2614
        %v2808 = vpop.f32.mrf.mxu0
        %v2809 = vadd.f32 0.0, %v2808
        %v2810 = vpop.f32.mrf.mxu0
        %v2811 = vpop.f32.mrf.mxu0
        %v2812 = vadd.f32 0.0, %v2811
        %v2813 = vpop.f32.mrf.mxu0
        %2814 = vmatprep.mubr.bf16.mxu0 0
        %2815 = vmatmul.mubr.bf16.gmra.mxu0 %v2615
        %v2816 = vpop.f32.mrf.mxu0
        %v2817 = vadd.f32 0.0, %v2816
        %v2818 = vpop.f32.mrf.mxu0
        %v2819 = vpop.f32.mrf.mxu0
        %v2820 = vadd.f32 0.0, %v2819
        %v2821 = vpop.f32.mrf.mxu0
        %2822 = vmatprep.mubr.bf16.mxu0 0
        %2823 = vmatmul.mubr.bf16.gmra.mxu0 %v2616
        %v2824 = vpop.f32.mrf.mxu0
        %v2825 = vadd.f32 0.0, %v2824
        %v2826 = vpop.f32.mrf.mxu0
        %v2827 = vpop.f32.mrf.mxu0
        %v2828 = vadd.f32 0.0, %v2827
        %v2829 = vpop.f32.mrf.mxu0
        %2830 = vmatprep.mubr.bf16.mxu0 0
        %2831 = vmatmul.mubr.bf16.gmra.mxu0 %v2617
        %v2832 = vpop.f32.mrf.mxu0
        %v2833 = vadd.f32 0.0, %v2832
        %v2834 = vpop.f32.mrf.mxu0
        %v2835 = vpop.f32.mrf.mxu0
        %v2836 = vpop.f32.mrf.mxu0
        %2837 = vdwg.mxu0
        %v2838 = vld [vmem:[#allocation3] sm:$0xff]
        %v2839 = vld [vmem:[#allocation3 + $0x8] sm:$0xff]
        %v2840 = vld [vmem:[#allocation3 + $0x10] sm:$0xff]
        %v2841 = vld [vmem:[#allocation3 + $0x18] sm:$0xff]
        %v2842 = vld [vmem:[#allocation3 + $0x20] sm:$0xff]
        %v2843 = vld [vmem:[#allocation3 + $0x28] sm:$0xff]
        %v2844 = vld [vmem:[#allocation3 + $0x30] sm:$0xff]
        %v2845 = vld [vmem:[#allocation3 + $0x38] sm:$0xff]
        %v2846 = vld [vmem:[#allocation3 + $0x40] sm:$0xff]
        %v2847 = vld [vmem:[#allocation3 + $0x48] sm:$0xff]
        %v2848 = vld [vmem:[#allocation3 + $0x50] sm:$0xff]
        %v2849 = vld [vmem:[#allocation3 + $0x58] sm:$0xff]
        %v2850 = vld [vmem:[#allocation3 + $0x60] sm:$0xff]
        %v2851 = vld [vmem:[#allocation3 + $0x68] sm:$0xff]
        %v2852 = vld [vmem:[#allocation3 + $0x70] sm:$0xff]
        %v2853 = vld [vmem:[#allocation3 + $0x78] sm:$0xff]
        %v2854 = vld [vmem:[#allocation3 + $0x80] sm:$0xff]
        %v2855 = vld [vmem:[#allocation3 + $0x88] sm:$0xff]
        %v2856 = vld [vmem:[#allocation3 + $0x90] sm:$0xff]
        %v2857 = vld [vmem:[#allocation3 + $0x98] sm:$0xff]
        %v2858 = vld [vmem:[#allocation3 + $0xa0] sm:$0xff]
        %v2859 = vld [vmem:[#allocation3 + $0xa8] sm:$0xff]
        %v2860 = vld [vmem:[#allocation3 + $0xb0] sm:$0xff]
        %v2861 = vld [vmem:[#allocation3 + $0xb8] sm:$0xff]
        %v2862 = vld [vmem:[#allocation3 + $0xc0] sm:$0xff]
        %v2863 = vld [vmem:[#allocation3 + $0xc8] sm:$0xff]
        %v2864 = vld [vmem:[#allocation3 + $0xd0] sm:$0xff]
        %v2865 = vld [vmem:[#allocation3 + $0xd8] sm:$0xff]
        %v2866 = vld [vmem:[#allocation3 + $0xe0] sm:$0xff]
        %v2867 = vadd.f32 %v2838, %v2721
        %v2868 = vadd.f32 %v2839, %v2724
        %v2869 = vadd.f32 %v2840, %v2729
        %v2870 = vadd.f32 %v2841, %v2732
        %v2871 = vadd.f32 %v2842, %v2737
        %v2872 = vadd.f32 %v2843, %v2740
        %v2873 = vadd.f32 %v2844, %v2745
        %v2874 = vadd.f32 %v2845, %v2748
        %v2875 = vadd.f32 %v2846, %v2753
        %v2876 = vadd.f32 %v2847, %v2756
        %v2877 = vadd.f32 %v2848, %v2761
        %v2878 = vadd.f32 %v2849, %v2764
        %v2879 = vadd.f32 %v2850, %v2769
        %v2880 = vadd.f32 %v2851, %v2772
        %v2881 = vadd.f32 %v2852, %v2777
        %v2882 = vadd.f32 %v2853, %v2780
        %v2883 = vadd.f32 %v2854, %v2785
        %v2884 = vadd.f32 %v2855, %v2788
        %v2885 = vadd.f32 %v2856, %v2793
        %v2886 = vadd.f32 %v2857, %v2796
        %v2887 = vadd.f32 %v2858, %v2801
        %v2888 = vadd.f32 %v2859, %v2804
        %v2889 = vadd.f32 %v2860, %v2809
        %v2890 = vadd.f32 %v2861, %v2812
        %v2891 = vadd.f32 %v2862, %v2817
        %v2892 = vadd.f32 %v2863, %v2820
        %v2893 = vadd.f32 %v2864, %v2825
        %v2894 = vadd.f32 %v2865, %v2828
        %v2895 = vadd.f32 %v2866, %v2833
        %2896 = vst [vmem:[#allocation3] sm:$0xff] %v2867
        %2897 = vst [vmem:[#allocation3 + $0x8] sm:$0xff] %v2868
        %2898 = vst [vmem:[#allocation3 + $0x10] sm:$0xff] %v2869
        %2899 = vst [vmem:[#allocation3 + $0x18] sm:$0xff] %v2870
        %2900 = vst [vmem:[#allocation3 + $0x20] sm:$0xff] %v2871
        %2901 = vst [vmem:[#allocation3 + $0x28] sm:$0xff] %v2872
        %2902 = vst [vmem:[#allocation3 + $0x30] sm:$0xff] %v2873
        %2903 = vst [vmem:[#allocation3 + $0x38] sm:$0xff] %v2874
        %2904 = vst [vmem:[#allocation3 + $0x40] sm:$0xff] %v2875
        %2905 = vst [vmem:[#allocation3 + $0x48] sm:$0xff] %v2876
        %2906 = vst [vmem:[#allocation3 + $0x50] sm:$0xff] %v2877
        %2907 = vst [vmem:[#allocation3 + $0x58] sm:$0xff] %v2878
        %2908 = vst [vmem:[#allocation3 + $0x60] sm:$0xff] %v2879
        %2909 = vst [vmem:[#allocation3 + $0x68] sm:$0xff] %v2880
        %2910 = vst [vmem:[#allocation3 + $0x70] sm:$0xff] %v2881
        %2911 = vst [vmem:[#allocation3 + $0x78] sm:$0xff] %v2882
        %2912 = vst [vmem:[#allocation3 + $0x80] sm:$0xff] %v2883
        %2913 = vst [vmem:[#allocation3 + $0x88] sm:$0xff] %v2884
        %2914 = vst [vmem:[#allocation3 + $0x90] sm:$0xff] %v2885
        %2915 = vst [vmem:[#allocation3 + $0x98] sm:$0xff] %v2886
        %2916 = vst [vmem:[#allocation3 + $0xa0] sm:$0xff] %v2887
        %2917 = vst [vmem:[#allocation3 + $0xa8] sm:$0xff] %v2888
        %2918 = vst [vmem:[#allocation3 + $0xb0] sm:$0xff] %v2889
        %2919 = vst [vmem:[#allocation3 + $0xb8] sm:$0xff] %v2890
        %2920 = vst [vmem:[#allocation3 + $0xc0] sm:$0xff] %v2891
        %2921 = vst [vmem:[#allocation3 + $0xc8] sm:$0xff] %v2892
        %2922 = vst [vmem:[#allocation3 + $0xd0] sm:$0xff] %v2893
        %2923 = vst [vmem:[#allocation3 + $0xd8] sm:$0xff] %v2894
        %2924 = vst [vmem:[#allocation3 + $0xe0] sm:$0xff] %v2895
        %v2925 = vld [vmem:[%s792] ss:$2 sm:$0xff]
        %v2926 = vld [vmem:[%s794] ss:$2 sm:$0xff]
        %v2927 = vld [vmem:[%s796] ss:$2 sm:$0xff]
        %v2928 = vld [vmem:[%s798] ss:$2 sm:$0xff]
        %v2929 = vld [vmem:[%s800] ss:$2 sm:$0xff]
        %v2930 = vld [vmem:[%s802] ss:$2 sm:$0xff]
        %v2931 = vld [vmem:[%s804] ss:$2 sm:$0xff]
        %v2932 = vld [vmem:[%s806] ss:$2 sm:$0xff]
        %v2933 = vld [vmem:[%s808] ss:$2 sm:$0xff]
        %v2934 = vld [vmem:[%s810] ss:$2 sm:$0xff]
        %v2935 = vld [vmem:[%s812] ss:$2 sm:$0xff]
        %v2936 = vld [vmem:[%s814] ss:$2 sm:$0xff]
        %v2937 = vld [vmem:[%s816] ss:$2 sm:$0xff]
        %v2938 = vld [vmem:[%s818] ss:$2 sm:$0xff]
        %v2939 = vld [vmem:[%s820] ss:$2 sm:$0xff]
        %v2940 = vld [vmem:[%s822] ss:$2 sm:$0xff]
        %v2941 = vld [vmem:[%s824] ss:$2 sm:$0xff]
        %v2942 = vld [vmem:[%s826] ss:$2 sm:$0xff]
        %v2943 = vld [vmem:[%s828] ss:$2 sm:$0xff]
        %v2944 = vld [vmem:[%s830] ss:$2 sm:$0xff]
        %v2945 = vld [vmem:[%s832] ss:$2 sm:$0xff]
        %v2946 = vld [vmem:[%s834] ss:$2 sm:$0xff]
        %v2947 = vld [vmem:[%s836] ss:$2 sm:$0xff]
        %v2948 = vld [vmem:[%s838] ss:$2 sm:$0xff]
        %v2949 = vld [vmem:[%s840] ss:$2 sm:$0xff]
        %v2950 = vld [vmem:[%s1893] ss:$2 sm:$0xff]
        %v2951 = vld [vmem:[%s1895] ss:$2 sm:$0xff]
        %s2952 = scalar_lea.vmem [#allocation2], 511
        %v2953 = vld [vmem:[%s2952] ss:$2 sm:$0xff]
        %s2954 = scalar_lea.vmem [#allocation2], 527
        %v2955 = vld [vmem:[%s2954] ss:$2 sm:$0xff]
        %v2956 = vpack.c.bf16 %v2926, %v2925
        %v2957 = vpack.c.bf16 %v2928, %v2927
        %v2958 = vpack.c.bf16 %v2930, %v2929
        %v2959 = vpack.c.bf16 %v2932, %v2931
        %v2960 = vpack.c.bf16 %v2934, %v2933
        %v2961 = vpack.c.bf16 %v2936, %v2935
        %v2962 = vpack.c.bf16 %v2938, %v2937
        %v2963 = vpack.c.bf16 %v2940, %v2939
        %v2964 = vpack.c.bf16 %v2942, %v2941
        %v2965 = vpack.c.bf16 %v2944, %v2943
        %v2966 = vpack.c.bf16 %v2946, %v2945
        %v2967 = vpack.c.bf16 %v2948, %v2947
        %v2968 = vpack.c.bf16 %v2950, %v2949
        %v2969 = vpack.c.bf16 %v2953, %v2951
        %v2970 = vpack.c.bf16 %v2955, %v2955
        %s2971 = sadd.s32 %s857, 6
        %s2972 = smul.u32 %s2971, 16
        %s2973 = smul.addr %s2972, 4
        %s2974 = scalar_lea.vmem %s3, %s2973
        %v2975 = vld [vmem:[%s2974] sm:$0xf]
        %v2976 = vld [vmem:[%s2974 + $0x4] sm:$0xf]
        %v2977 = vld [vmem:[%s2974 + $0x8] sm:$0xf]
        %v2978 = vld [vmem:[%s2974 + $0xc] sm:$0xf]
        %v2979 = vld [vmem:[%s2974 + $0x10] sm:$0xf]
        %v2980 = vld [vmem:[%s2974 + $0x14] sm:$0xf]
        %v2981 = vld [vmem:[%s2974 + $0x18] sm:$0xf]
        %v2982 = vld [vmem:[%s2974 + $0x1c] sm:$0xf]
        %v2983 = vld [vmem:[%s2974 + $0x20] sm:$0xf]
        %v2984 = vld [vmem:[%s2974 + $0x24] sm:$0xf]
        %v2985 = vld [vmem:[%s2974 + $0x28] sm:$0xf]
        %v2986 = vld [vmem:[%s2974 + $0x2c] sm:$0xf]
        %v2987 = vld [vmem:[%s2974 + $0x30] sm:$0xf]
        %v2988 = vld [vmem:[%s2974 + $0x34] sm:$0xf]
        %v2989 = vld [vmem:[%s2974 + $0x38] sm:$0xf]
        %v2990 = vld [vmem:[%s2974 + $0x3c] sm:$0xf]
        %v3007 = vunpack.c.l.b16 %v2975
        %v3008 = vunpack.c.l.b16 %v2976
        %v3009 = vunpack.c.l.b16 %v2977
        %v3010 = vunpack.c.l.b16 %v2978
        %v3011 = vunpack.c.l.b16 %v2979
        %v3012 = vunpack.c.l.b16 %v2980
        %v3013 = vunpack.c.l.b16 %v2981
        %v3014 = vunpack.c.l.b16 %v2982
        %v3015 = vunpack.c.l.b16 %v2983
        %v3016 = vunpack.c.l.b16 %v2984
        %v3017 = vunpack.c.l.b16 %v2985
        %v3018 = vunpack.c.l.b16 %v2986
        %v3019 = vunpack.c.l.b16 %v2987
        %v3020 = vunpack.c.l.b16 %v2988
        %v3021 = vunpack.c.l.b16 %v2989
        %v3022 = vunpack.c.l.b16 %v2990
        %v3023 = vpack.c.b16 %v3008, %v3007
        %v3024 = vpack.c.b16 %v3010, %v3009
        %v3025 = vpack.c.b16 %v3012, %v3011
        %v3026 = vpack.c.b16 %v3014, %v3013
        %v3027 = vpack.c.b16 %v3016, %v3015
        %v3028 = vpack.c.b16 %v3018, %v3017
        %v3029 = vpack.c.b16 %v3020, %v3019
        %v3030 = vpack.c.b16 %v3022, %v3021
        %3039 = vmatprep.subr.bf16.mxu0 0
        %3040 = vmatpush1.bf16.msra.mxu0 %v3030
        %3041 = vmatprep.subr.bf16.mxu0 0
        %3042 = vmatpush1.bf16.msra.mxu0 %v3029
        %3043 = vmatprep.subr.bf16.mxu0 0
        %3044 = vmatpush1.bf16.msra.mxu0 %v3028
        %3045 = vmatprep.subr.bf16.mxu0 0
        %3046 = vmatpush1.bf16.msra.mxu0 %v3027
        %3047 = vmatprep.subr.bf16.mxu0 0
        %3048 = vmatpush1.bf16.msra.mxu0 %v3026
        %3049 = vmatprep.subr.bf16.mxu0 0
        %3050 = vmatpush1.bf16.msra.mxu0 %v3025
        %3051 = vmatprep.subr.bf16.mxu0 0
        %3052 = vmatpush1.bf16.msra.mxu0 %v3024
        %3053 = vmatprep.subr.bf16.mxu0 0
        %3054 = vmatpush1.bf16.msra.mxu0 %v3023
        %3055 = vmatprep.subr.bf16.mxu0 0
        %3056 = vmatpush2.bf16.msra.mxu0 0
        %3057 = vmatprep.subr.bf16.mxu0 0
        %3058 = vmatpush2.bf16.msra.mxu0 0
        %3059 = vmatprep.subr.bf16.mxu0 0
        %3060 = vmatpush2.bf16.msra.mxu0 0
        %3061 = vmatprep.subr.bf16.mxu0 0
        %3062 = vmatpush2.bf16.msra.mxu0 0
        %3063 = vmatprep.subr.bf16.mxu0 0
        %3064 = vmatpush2.bf16.msra.mxu0 0
        %3065 = vmatprep.subr.bf16.mxu0 0
        %3066 = vmatpush2.bf16.msra.mxu0 0
        %3067 = vmatprep.subr.bf16.mxu0 0
        %3068 = vmatpush2.bf16.msra.mxu0 0
        %3069 = vmatprep.subr.bf16.mxu0 0
        %3070 = vmatpush2.bf16.msra.mxu0 0
        %3071 = vmatprep.mubr.bf16.mxu0 0
        %3072 = vmatmul.mubr.bf16.gmra.mxu0 %v2956
        %v3073 = vpop.f32.mrf.mxu0
        %v3074 = vadd.f32 0.0, %v3073
        %v3075 = vpop.f32.mrf.mxu0
        %v3076 = vpop.f32.mrf.mxu0
        %v3077 = vadd.f32 0.0, %v3076
        %v3078 = vpop.f32.mrf.mxu0
        %3079 = vmatprep.mubr.bf16.mxu0 0
        %3080 = vmatmul.mubr.bf16.gmra.mxu0 %v2957
        %v3081 = vpop.f32.mrf.mxu0
        %v3082 = vadd.f32 0.0, %v3081
        %v3083 = vpop.f32.mrf.mxu0
        %v3084 = vpop.f32.mrf.mxu0
        %v3085 = vadd.f32 0.0, %v3084
        %v3086 = vpop.f32.mrf.mxu0
        %3087 = vmatprep.mubr.bf16.mxu0 0
        %3088 = vmatmul.mubr.bf16.gmra.mxu0 %v2958
        %v3089 = vpop.f32.mrf.mxu0
        %v3090 = vadd.f32 0.0, %v3089
        %v3091 = vpop.f32.mrf.mxu0
        %v3092 = vpop.f32.mrf.mxu0
        %v3093 = vadd.f32 0.0, %v3092
        %v3094 = vpop.f32.mrf.mxu0
        %3095 = vmatprep.mubr.bf16.mxu0 0
        %3096 = vmatmul.mubr.bf16.gmra.mxu0 %v2959
        %v3097 = vpop.f32.mrf.mxu0
        %v3098 = vadd.f32 0.0, %v3097
        %v3099 = vpop.f32.mrf.mxu0
        %v3100 = vpop.f32.mrf.mxu0
        %v3101 = vadd.f32 0.0, %v3100
        %v3102 = vpop.f32.mrf.mxu0
        %3103 = vmatprep.mubr.bf16.mxu0 0
        %3104 = vmatmul.mubr.bf16.gmra.mxu0 %v2960
        %v3105 = vpop.f32.mrf.mxu0
        %v3106 = vadd.f32 0.0, %v3105
        %v3107 = vpop.f32.mrf.mxu0
        %v3108 = vpop.f32.mrf.mxu0
        %v3109 = vadd.f32 0.0, %v3108
        %v3110 = vpop.f32.mrf.mxu0
        %3111 = vmatprep.mubr.bf16.mxu0 0
        %3112 = vmatmul.mubr.bf16.gmra.mxu0 %v2961
        %v3113 = vpop.f32.mrf.mxu0
        %v3114 = vadd.f32 0.0, %v3113
        %v3115 = vpop.f32.mrf.mxu0
        %v3116 = vpop.f32.mrf.mxu0
        %v3117 = vadd.f32 0.0, %v3116
        %v3118 = vpop.f32.mrf.mxu0
        %3119 = vmatprep.mubr.bf16.mxu0 0
        %3120 = vmatmul.mubr.bf16.gmra.mxu0 %v2962
        %v3121 = vpop.f32.mrf.mxu0
        %v3122 = vadd.f32 0.0, %v3121
        %v3123 = vpop.f32.mrf.mxu0
        %v3124 = vpop.f32.mrf.mxu0
        %v3125 = vadd.f32 0.0, %v3124
        %v3126 = vpop.f32.mrf.mxu0
        %3127 = vmatprep.mubr.bf16.mxu0 0
        %3128 = vmatmul.mubr.bf16.gmra.mxu0 %v2963
        %v3129 = vpop.f32.mrf.mxu0
        %v3130 = vadd.f32 0.0, %v3129
        %v3131 = vpop.f32.mrf.mxu0
        %v3132 = vpop.f32.mrf.mxu0
        %v3133 = vadd.f32 0.0, %v3132
        %v3134 = vpop.f32.mrf.mxu0
        %3135 = vmatprep.mubr.bf16.mxu0 0
        %3136 = vmatmul.mubr.bf16.gmra.mxu0 %v2964
        %v3137 = vpop.f32.mrf.mxu0
        %v3138 = vadd.f32 0.0, %v3137
        %v3139 = vpop.f32.mrf.mxu0
        %v3140 = vpop.f32.mrf.mxu0
        %v3141 = vadd.f32 0.0, %v3140
        %v3142 = vpop.f32.mrf.mxu0
        %3143 = vmatprep.mubr.bf16.mxu0 0
        %3144 = vmatmul.mubr.bf16.gmra.mxu0 %v2965
        %v3145 = vpop.f32.mrf.mxu0
        %v3146 = vadd.f32 0.0, %v3145
        %v3147 = vpop.f32.mrf.mxu0
        %v3148 = vpop.f32.mrf.mxu0
        %v3149 = vadd.f32 0.0, %v3148
        %v3150 = vpop.f32.mrf.mxu0
        %3151 = vmatprep.mubr.bf16.mxu0 0
        %3152 = vmatmul.mubr.bf16.gmra.mxu0 %v2966
        %v3153 = vpop.f32.mrf.mxu0
        %v3154 = vadd.f32 0.0, %v3153
        %v3155 = vpop.f32.mrf.mxu0
        %v3156 = vpop.f32.mrf.mxu0
        %v3157 = vadd.f32 0.0, %v3156
        %v3158 = vpop.f32.mrf.mxu0
        %3159 = vmatprep.mubr.bf16.mxu0 0
        %3160 = vmatmul.mubr.bf16.gmra.mxu0 %v2967
        %v3161 = vpop.f32.mrf.mxu0
        %v3162 = vadd.f32 0.0, %v3161
        %v3163 = vpop.f32.mrf.mxu0
        %v3164 = vpop.f32.mrf.mxu0
        %v3165 = vadd.f32 0.0, %v3164
        %v3166 = vpop.f32.mrf.mxu0
        %3167 = vmatprep.mubr.bf16.mxu0 0
        %3168 = vmatmul.mubr.bf16.gmra.mxu0 %v2968
        %v3169 = vpop.f32.mrf.mxu0
        %v3170 = vadd.f32 0.0, %v3169
        %v3171 = vpop.f32.mrf.mxu0
        %v3172 = vpop.f32.mrf.mxu0
        %v3173 = vadd.f32 0.0, %v3172
        %v3174 = vpop.f32.mrf.mxu0
        %3175 = vmatprep.mubr.bf16.mxu0 0
        %3176 = vmatmul.mubr.bf16.gmra.mxu0 %v2969
        %v3177 = vpop.f32.mrf.mxu0
        %v3178 = vadd.f32 0.0, %v3177
        %v3179 = vpop.f32.mrf.mxu0
        %v3180 = vpop.f32.mrf.mxu0
        %v3181 = vadd.f32 0.0, %v3180
        %v3182 = vpop.f32.mrf.mxu0
        %3183 = vmatprep.mubr.bf16.mxu0 0
        %3184 = vmatmul.mubr.bf16.gmra.mxu0 %v2970
        %v3185 = vpop.f32.mrf.mxu0
        %v3186 = vadd.f32 0.0, %v3185
        %v3187 = vpop.f32.mrf.mxu0
        %v3188 = vpop.f32.mrf.mxu0
        %v3189 = vpop.f32.mrf.mxu0
        %3190 = vdwg.mxu0
        %v3191 = vld [vmem:[#allocation3] sm:$0xff]
        %v3192 = vld [vmem:[#allocation3 + $0x8] sm:$0xff]
        %v3193 = vld [vmem:[#allocation3 + $0x10] sm:$0xff]
        %v3194 = vld [vmem:[#allocation3 + $0x18] sm:$0xff]
        %v3195 = vld [vmem:[#allocation3 + $0x20] sm:$0xff]
        %v3196 = vld [vmem:[#allocation3 + $0x28] sm:$0xff]
        %v3197 = vld [vmem:[#allocation3 + $0x30] sm:$0xff]
        %v3198 = vld [vmem:[#allocation3 + $0x38] sm:$0xff]
        %v3199 = vld [vmem:[#allocation3 + $0x40] sm:$0xff]
        %v3200 = vld [vmem:[#allocation3 + $0x48] sm:$0xff]
        %v3201 = vld [vmem:[#allocation3 + $0x50] sm:$0xff]
        %v3202 = vld [vmem:[#allocation3 + $0x58] sm:$0xff]
        %v3203 = vld [vmem:[#allocation3 + $0x60] sm:$0xff]
        %v3204 = vld [vmem:[#allocation3 + $0x68] sm:$0xff]
        %v3205 = vld [vmem:[#allocation3 + $0x70] sm:$0xff]
        %v3206 = vld [vmem:[#allocation3 + $0x78] sm:$0xff]
        %v3207 = vld [vmem:[#allocation3 + $0x80] sm:$0xff]
        %v3208 = vld [vmem:[#allocation3 + $0x88] sm:$0xff]
        %v3209 = vld [vmem:[#allocation3 + $0x90] sm:$0xff]
        %v3210 = vld [vmem:[#allocation3 + $0x98] sm:$0xff]
        %v3211 = vld [vmem:[#allocation3 + $0xa0] sm:$0xff]
        %v3212 = vld [vmem:[#allocation3 + $0xa8] sm:$0xff]
        %v3213 = vld [vmem:[#allocation3 + $0xb0] sm:$0xff]
        %v3214 = vld [vmem:[#allocation3 + $0xb8] sm:$0xff]
        %v3215 = vld [vmem:[#allocation3 + $0xc0] sm:$0xff]
        %v3216 = vld [vmem:[#allocation3 + $0xc8] sm:$0xff]
        %v3217 = vld [vmem:[#allocation3 + $0xd0] sm:$0xff]
        %v3218 = vld [vmem:[#allocation3 + $0xd8] sm:$0xff]
        %v3219 = vld [vmem:[#allocation3 + $0xe0] sm:$0xff]
        %v3220 = vadd.f32 %v3191, %v3074
        %v3221 = vadd.f32 %v3192, %v3077
        %v3222 = vadd.f32 %v3193, %v3082
        %v3223 = vadd.f32 %v3194, %v3085
        %v3224 = vadd.f32 %v3195, %v3090
        %v3225 = vadd.f32 %v3196, %v3093
        %v3226 = vadd.f32 %v3197, %v3098
        %v3227 = vadd.f32 %v3198, %v3101
        %v3228 = vadd.f32 %v3199, %v3106
        %v3229 = vadd.f32 %v3200, %v3109
        %v3230 = vadd.f32 %v3201, %v3114
        %v3231 = vadd.f32 %v3202, %v3117
        %v3232 = vadd.f32 %v3203, %v3122
        %v3233 = vadd.f32 %v3204, %v3125
        %v3234 = vadd.f32 %v3205, %v3130
        %v3235 = vadd.f32 %v3206, %v3133
        %v3236 = vadd.f32 %v3207, %v3138
        %v3237 = vadd.f32 %v3208, %v3141
        %v3238 = vadd.f32 %v3209, %v3146
        %v3239 = vadd.f32 %v3210, %v3149
        %v3240 = vadd.f32 %v3211, %v3154
        %v3241 = vadd.f32 %v3212, %v3157
        %v3242 = vadd.f32 %v3213, %v3162
        %v3243 = vadd.f32 %v3214, %v3165
        %v3244 = vadd.f32 %v3215, %v3170
        %v3245 = vadd.f32 %v3216, %v3173
        %v3246 = vadd.f32 %v3217, %v3178
        %v3247 = vadd.f32 %v3218, %v3181
        %v3248 = vadd.f32 %v3219, %v3186
        %3249 = vst [vmem:[#allocation3] sm:$0xff] %v3220
        %3250 = vst [vmem:[#allocation3 + $0x8] sm:$0xff] %v3221
        %3251 = vst [vmem:[#allocation3 + $0x10] sm:$0xff] %v3222
        %3252 = vst [vmem:[#allocation3 + $0x18] sm:$0xff] %v3223
        %3253 = vst [vmem:[#allocation3 + $0x20] sm:$0xff] %v3224
        %3254 = vst [vmem:[#allocation3 + $0x28] sm:$0xff] %v3225
        %3255 = vst [vmem:[#allocation3 + $0x30] sm:$0xff] %v3226
        %3256 = vst [vmem:[#allocation3 + $0x38] sm:$0xff] %v3227
        %3257 = vst [vmem:[#allocation3 + $0x40] sm:$0xff] %v3228
        %3258 = vst [vmem:[#allocation3 + $0x48] sm:$0xff] %v3229
        %3259 = vst [vmem:[#allocation3 + $0x50] sm:$0xff] %v3230
        %3260 = vst [vmem:[#allocation3 + $0x58] sm:$0xff] %v3231
        %3261 = vst [vmem:[#allocation3 + $0x60] sm:$0xff] %v3232
        %3262 = vst [vmem:[#allocation3 + $0x68] sm:$0xff] %v3233
        %3263 = vst [vmem:[#allocation3 + $0x70] sm:$0xff] %v3234
        %3264 = vst [vmem:[#allocation3 + $0x78] sm:$0xff] %v3235
        %3265 = vst [vmem:[#allocation3 + $0x80] sm:$0xff] %v3236
        %3266 = vst [vmem:[#allocation3 + $0x88] sm:$0xff] %v3237
        %3267 = vst [vmem:[#allocation3 + $0x90] sm:$0xff] %v3238
        %3268 = vst [vmem:[#allocation3 + $0x98] sm:$0xff] %v3239
        %3269 = vst [vmem:[#allocation3 + $0xa0] sm:$0xff] %v3240
        %3270 = vst [vmem:[#allocation3 + $0xa8] sm:$0xff] %v3241
        %3271 = vst [vmem:[#allocation3 + $0xb0] sm:$0xff] %v3242
        %3272 = vst [vmem:[#allocation3 + $0xb8] sm:$0xff] %v3243
        %3273 = vst [vmem:[#allocation3 + $0xc0] sm:$0xff] %v3244
        %3274 = vst [vmem:[#allocation3 + $0xc8] sm:$0xff] %v3245
        %3275 = vst [vmem:[#allocation3 + $0xd0] sm:$0xff] %v3246
        %3276 = vst [vmem:[#allocation3 + $0xd8] sm:$0xff] %v3247
        %3277 = vst [vmem:[#allocation3 + $0xe0] sm:$0xff] %v3248
        %s3278 = scalar_lea.vmem [#allocation2], 80
        %v3279 = vld [vmem:[%s3278] ss:$2 sm:$0xff]
        %s3280 = scalar_lea.vmem [#allocation2], 96
        %v3281 = vld [vmem:[%s3280] ss:$2 sm:$0xff]
        %s3282 = scalar_lea.vmem [#allocation2], 112
        %v3283 = vld [vmem:[%s3282] ss:$2 sm:$0xff]
        %s3284 = scalar_lea.vmem [#allocation2], 128
        %v3285 = vld [vmem:[%s3284] ss:$2 sm:$0xff]
        %s3286 = scalar_lea.vmem [#allocation2], 144
        %v3287 = vld [vmem:[%s3286] ss:$2 sm:$0xff]
        %s3288 = scalar_lea.vmem [#allocation2], 160
        %v3289 = vld [vmem:[%s3288] ss:$2 sm:$0xff]
        %s3290 = scalar_lea.vmem [#allocation2], 176
        %v3291 = vld [vmem:[%s3290] ss:$2 sm:$0xff]
        %s3292 = scalar_lea.vmem [#allocation2], 192
        %v3293 = vld [vmem:[%s3292] ss:$2 sm:$0xff]
        %s3294 = scalar_lea.vmem [#allocation2], 208
        %v3295 = vld [vmem:[%s3294] ss:$2 sm:$0xff]
        %s3296 = scalar_lea.vmem [#allocation2], 224
        %v3297 = vld [vmem:[%s3296] ss:$2 sm:$0xff]
        %s3298 = scalar_lea.vmem [#allocation2], 240
        %v3299 = vld [vmem:[%s3298] ss:$2 sm:$0xff]
        %s3300 = scalar_lea.vmem [#allocation2], 256
        %v3301 = vld [vmem:[%s3300] ss:$2 sm:$0xff]
        %s3302 = scalar_lea.vmem [#allocation2], 272
        %v3303 = vld [vmem:[%s3302] ss:$2 sm:$0xff]
        %s3304 = scalar_lea.vmem [#allocation2], 288
        %v3305 = vld [vmem:[%s3304] ss:$2 sm:$0xff]
        %s3306 = scalar_lea.vmem [#allocation2], 304
        %v3307 = vld [vmem:[%s3306] ss:$2 sm:$0xff]
        %s3308 = scalar_lea.vmem [#allocation2], 320
        %v3309 = vld [vmem:[%s3308] ss:$2 sm:$0xff]
        %s3310 = scalar_lea.vmem [#allocation2], 336
        %v3311 = vld [vmem:[%s3310] ss:$2 sm:$0xff]
        %s3312 = scalar_lea.vmem [#allocation2], 352
        %v3313 = vld [vmem:[%s3312] ss:$2 sm:$0xff]
        %s3314 = scalar_lea.vmem [#allocation2], 368
        %v3315 = vld [vmem:[%s3314] ss:$2 sm:$0xff]
        %s3316 = scalar_lea.vmem [#allocation2], 384
        %v3317 = vld [vmem:[%s3316] ss:$2 sm:$0xff]
        %s3318 = scalar_lea.vmem [#allocation2], 400
        %v3319 = vld [vmem:[%s3318] ss:$2 sm:$0xff]
        %s3320 = scalar_lea.vmem [#allocation2], 416
        %v3321 = vld [vmem:[%s3320] ss:$2 sm:$0xff]
        %s3322 = scalar_lea.vmem [#allocation2], 432
        %v3323 = vld [vmem:[%s3322] ss:$2 sm:$0xff]
        %s3324 = scalar_lea.vmem [#allocation2], 448
        %v3325 = vld [vmem:[%s3324] ss:$2 sm:$0xff]
        %s3326 = scalar_lea.vmem [#allocation2], 464
        %v3327 = vld [vmem:[%s3326] ss:$2 sm:$0xff]
        %s3328 = scalar_lea.vmem [#allocation2], 480
        %v3329 = vld [vmem:[%s3328] ss:$2 sm:$0xff]
        %s3330 = scalar_lea.vmem [#allocation2], 496
        %v3331 = vld [vmem:[%s3330] ss:$2 sm:$0xff]
        %s3332 = scalar_lea.vmem [#allocation2], 512
        %v3333 = vld [vmem:[%s3332] ss:$2 sm:$0xff]
        %s3334 = scalar_lea.vmem [#allocation2], 528
        %v3335 = vld [vmem:[%s3334] ss:$2 sm:$0xff]
        %v3336 = vpack.c.bf16 %v3281, %v3279
        %v3337 = vpack.c.bf16 %v3285, %v3283
        %v3338 = vpack.c.bf16 %v3289, %v3287
        %v3339 = vpack.c.bf16 %v3293, %v3291
        %v3340 = vpack.c.bf16 %v3297, %v3295
        %v3341 = vpack.c.bf16 %v3301, %v3299
        %v3342 = vpack.c.bf16 %v3305, %v3303
        %v3343 = vpack.c.bf16 %v3309, %v3307
        %v3344 = vpack.c.bf16 %v3313, %v3311
        %v3345 = vpack.c.bf16 %v3317, %v3315
        %v3346 = vpack.c.bf16 %v3321, %v3319
        %v3347 = vpack.c.bf16 %v3325, %v3323
        %v3348 = vpack.c.bf16 %v3329, %v3327
        %v3349 = vpack.c.bf16 %v3333, %v3331
        %v3350 = vpack.c.bf16 %v3335, %v3335
        %s3351 = sadd.s32 %s857, 7
        %s3352 = smul.u32 %s3351, 16
        %s3353 = smul.addr %s3352, 4
        %s3354 = scalar_lea.vmem %s3, %s3353
        %v3355 = vld [vmem:[%s3354] sm:$0xf]
        %v3356 = vld [vmem:[%s3354 + $0x4] sm:$0xf]
        %v3357 = vld [vmem:[%s3354 + $0x8] sm:$0xf]
        %v3358 = vld [vmem:[%s3354 + $0xc] sm:$0xf]
        %v3359 = vld [vmem:[%s3354 + $0x10] sm:$0xf]
        %v3360 = vld [vmem:[%s3354 + $0x14] sm:$0xf]
        %v3361 = vld [vmem:[%s3354 + $0x18] sm:$0xf]
        %v3362 = vld [vmem:[%s3354 + $0x1c] sm:$0xf]
        %v3363 = vld [vmem:[%s3354 + $0x20] sm:$0xf]
        %v3364 = vld [vmem:[%s3354 + $0x24] sm:$0xf]
        %v3365 = vld [vmem:[%s3354 + $0x28] sm:$0xf]
        %v3366 = vld [vmem:[%s3354 + $0x2c] sm:$0xf]
        %v3367 = vld [vmem:[%s3354 + $0x30] sm:$0xf]
        %v3368 = vld [vmem:[%s3354 + $0x34] sm:$0xf]
        %v3369 = vld [vmem:[%s3354 + $0x38] sm:$0xf]
        %v3370 = vld [vmem:[%s3354 + $0x3c] sm:$0xf]
        %v3387 = vunpack.c.l.b16 %v3355
        %v3388 = vunpack.c.l.b16 %v3356
        %v3389 = vunpack.c.l.b16 %v3357
        %v3390 = vunpack.c.l.b16 %v3358
        %v3391 = vunpack.c.l.b16 %v3359
        %v3392 = vunpack.c.l.b16 %v3360
        %v3393 = vunpack.c.l.b16 %v3361
        %v3394 = vunpack.c.l.b16 %v3362
        %v3395 = vunpack.c.l.b16 %v3363
        %v3396 = vunpack.c.l.b16 %v3364
        %v3397 = vunpack.c.l.b16 %v3365
        %v3398 = vunpack.c.l.b16 %v3366
        %v3399 = vunpack.c.l.b16 %v3367
        %v3400 = vunpack.c.l.b16 %v3368
        %v3401 = vunpack.c.l.b16 %v3369
        %v3402 = vunpack.c.l.b16 %v3370
        %v3403 = vpack.c.b16 %v3388, %v3387
        %v3404 = vpack.c.b16 %v3390, %v3389
        %v3405 = vpack.c.b16 %v3392, %v3391
        %v3406 = vpack.c.b16 %v3394, %v3393
        %v3407 = vpack.c.b16 %v3396, %v3395
        %v3408 = vpack.c.b16 %v3398, %v3397
        %v3409 = vpack.c.b16 %v3400, %v3399
        %v3410 = vpack.c.b16 %v3402, %v3401
        %3419 = vmatprep.subr.bf16.mxu0 0
        %3420 = vmatpush1.bf16.msra.mxu0 %v3410
        %3421 = vmatprep.subr.bf16.mxu0 0
        %3422 = vmatpush1.bf16.msra.mxu0 %v3409
        %3423 = vmatprep.subr.bf16.mxu0 0
        %3424 = vmatpush1.bf16.msra.mxu0 %v3408
        %3425 = vmatprep.subr.bf16.mxu0 0
        %3426 = vmatpush1.bf16.msra.mxu0 %v3407
        %3427 = vmatprep.subr.bf16.mxu0 0
        %3428 = vmatpush1.bf16.msra.mxu0 %v3406
        %3429 = vmatprep.subr.bf16.mxu0 0
        %3430 = vmatpush1.bf16.msra.mxu0 %v3405
        %3431 = vmatprep.subr.bf16.mxu0 0
        %3432 = vmatpush1.bf16.msra.mxu0 %v3404
        %3433 = vmatprep.subr.bf16.mxu0 0
        %3434 = vmatpush1.bf16.msra.mxu0 %v3403
        %3435 = vmatprep.subr.bf16.mxu0 0
        %3436 = vmatpush2.bf16.msra.mxu0 0
        %3437 = vmatprep.subr.bf16.mxu0 0
        %3438 = vmatpush2.bf16.msra.mxu0 0
        %3439 = vmatprep.subr.bf16.mxu0 0
        %3440 = vmatpush2.bf16.msra.mxu0 0
        %3441 = vmatprep.subr.bf16.mxu0 0
        %3442 = vmatpush2.bf16.msra.mxu0 0
        %3443 = vmatprep.subr.bf16.mxu0 0
        %3444 = vmatpush2.bf16.msra.mxu0 0
        %3445 = vmatprep.subr.bf16.mxu0 0
        %3446 = vmatpush2.bf16.msra.mxu0 0
        %3447 = vmatprep.subr.bf16.mxu0 0
        %3448 = vmatpush2.bf16.msra.mxu0 0
        %3449 = vmatprep.subr.bf16.mxu0 0
        %3450 = vmatpush2.bf16.msra.mxu0 0
        %3451 = vmatprep.mubr.bf16.mxu0 0
        %3452 = vmatmul.mubr.bf16.gmra.mxu0 %v3336
        %v3453 = vpop.f32.mrf.mxu0
        %v3454 = vadd.f32 0.0, %v3453
        %v3455 = vpop.f32.mrf.mxu0
        %v3456 = vpop.f32.mrf.mxu0
        %v3457 = vadd.f32 0.0, %v3456
        %v3458 = vpop.f32.mrf.mxu0
        %3459 = vmatprep.mubr.bf16.mxu0 0
        %3460 = vmatmul.mubr.bf16.gmra.mxu0 %v3337
        %v3461 = vpop.f32.mrf.mxu0
        %v3462 = vadd.f32 0.0, %v3461
        %v3463 = vpop.f32.mrf.mxu0
        %v3464 = vpop.f32.mrf.mxu0
        %v3465 = vadd.f32 0.0, %v3464
        %v3466 = vpop.f32.mrf.mxu0
        %3467 = vmatprep.mubr.bf16.mxu0 0
        %3468 = vmatmul.mubr.bf16.gmra.mxu0 %v3338
        %v3469 = vpop.f32.mrf.mxu0
        %v3470 = vadd.f32 0.0, %v3469
        %v3471 = vpop.f32.mrf.mxu0
        %v3472 = vpop.f32.mrf.mxu0
        %v3473 = vadd.f32 0.0, %v3472
        %v3474 = vpop.f32.mrf.mxu0
        %3475 = vmatprep.mubr.bf16.mxu0 0
        %3476 = vmatmul.mubr.bf16.gmra.mxu0 %v3339
        %v3477 = vpop.f32.mrf.mxu0
        %v3478 = vadd.f32 0.0, %v3477
        %v3479 = vpop.f32.mrf.mxu0
        %v3480 = vpop.f32.mrf.mxu0
        %v3481 = vadd.f32 0.0, %v3480
        %v3482 = vpop.f32.mrf.mxu0
        %3483 = vmatprep.mubr.bf16.mxu0 0
        %3484 = vmatmul.mubr.bf16.gmra.mxu0 %v3340
        %v3485 = vpop.f32.mrf.mxu0
        %v3486 = vadd.f32 0.0, %v3485
        %v3487 = vpop.f32.mrf.mxu0
        %v3488 = vpop.f32.mrf.mxu0
        %v3489 = vadd.f32 0.0, %v3488
        %v3490 = vpop.f32.mrf.mxu0
        %3491 = vmatprep.mubr.bf16.mxu0 0
        %3492 = vmatmul.mubr.bf16.gmra.mxu0 %v3341
        %v3493 = vpop.f32.mrf.mxu0
        %v3494 = vadd.f32 0.0, %v3493
        %v3495 = vpop.f32.mrf.mxu0
        %v3496 = vpop.f32.mrf.mxu0
        %v3497 = vadd.f32 0.0, %v3496
        %v3498 = vpop.f32.mrf.mxu0
        %3499 = vmatprep.mubr.bf16.mxu0 0
        %3500 = vmatmul.mubr.bf16.gmra.mxu0 %v3342
        %v3501 = vpop.f32.mrf.mxu0
        %v3502 = vadd.f32 0.0, %v3501
        %v3503 = vpop.f32.mrf.mxu0
        %v3504 = vpop.f32.mrf.mxu0
        %v3505 = vadd.f32 0.0, %v3504
        %v3506 = vpop.f32.mrf.mxu0
        %3507 = vmatprep.mubr.bf16.mxu0 0
        %3508 = vmatmul.mubr.bf16.gmra.mxu0 %v3343
        %v3509 = vpop.f32.mrf.mxu0
        %v3510 = vadd.f32 0.0, %v3509
        %v3511 = vpop.f32.mrf.mxu0
        %v3512 = vpop.f32.mrf.mxu0
        %v3513 = vadd.f32 0.0, %v3512
        %v3514 = vpop.f32.mrf.mxu0
        %3515 = vmatprep.mubr.bf16.mxu0 0
        %3516 = vmatmul.mubr.bf16.gmra.mxu0 %v3344
        %v3517 = vpop.f32.mrf.mxu0
        %v3518 = vadd.f32 0.0, %v3517
        %v3519 = vpop.f32.mrf.mxu0
        %v3520 = vpop.f32.mrf.mxu0
        %v3521 = vadd.f32 0.0, %v3520
        %v3522 = vpop.f32.mrf.mxu0
        %3523 = vmatprep.mubr.bf16.mxu0 0
        %3524 = vmatmul.mubr.bf16.gmra.mxu0 %v3345
        %v3525 = vpop.f32.mrf.mxu0
        %v3526 = vadd.f32 0.0, %v3525
        %v3527 = vpop.f32.mrf.mxu0
        %v3528 = vpop.f32.mrf.mxu0
        %v3529 = vadd.f32 0.0, %v3528
        %v3530 = vpop.f32.mrf.mxu0
        %3531 = vmatprep.mubr.bf16.mxu0 0
        %3532 = vmatmul.mubr.bf16.gmra.mxu0 %v3346
        %v3533 = vpop.f32.mrf.mxu0
        %v3534 = vadd.f32 0.0, %v3533
        %v3535 = vpop.f32.mrf.mxu0
        %v3536 = vpop.f32.mrf.mxu0
        %v3537 = vadd.f32 0.0, %v3536
        %v3538 = vpop.f32.mrf.mxu0
        %3539 = vmatprep.mubr.bf16.mxu0 0
        %3540 = vmatmul.mubr.bf16.gmra.mxu0 %v3347
        %v3541 = vpop.f32.mrf.mxu0
        %v3542 = vadd.f32 0.0, %v3541
        %v3543 = vpop.f32.mrf.mxu0
        %v3544 = vpop.f32.mrf.mxu0
        %v3545 = vadd.f32 0.0, %v3544
        %v3546 = vpop.f32.mrf.mxu0
        %3547 = vmatprep.mubr.bf16.mxu0 0
        %3548 = vmatmul.mubr.bf16.gmra.mxu0 %v3348
        %v3549 = vpop.f32.mrf.mxu0
        %v3550 = vadd.f32 0.0, %v3549
        %v3551 = vpop.f32.mrf.mxu0
        %v3552 = vpop.f32.mrf.mxu0
        %v3553 = vadd.f32 0.0, %v3552
        %v3554 = vpop.f32.mrf.mxu0
        %3555 = vmatprep.mubr.bf16.mxu0 0
        %3556 = vmatmul.mubr.bf16.gmra.mxu0 %v3349
        %v3557 = vpop.f32.mrf.mxu0
        %v3558 = vadd.f32 0.0, %v3557
        %v3559 = vpop.f32.mrf.mxu0
        %v3560 = vpop.f32.mrf.mxu0
        %v3561 = vadd.f32 0.0, %v3560
        %v3562 = vpop.f32.mrf.mxu0
        %3563 = vmatprep.mubr.bf16.mxu0 0
        %3564 = vmatmul.mubr.bf16.gmra.mxu0 %v3350
        %v3565 = vpop.f32.mrf.mxu0
        %v3566 = vadd.f32 0.0, %v3565
        %v3567 = vpop.f32.mrf.mxu0
        %v3568 = vpop.f32.mrf.mxu0
        %v3569 = vpop.f32.mrf.mxu0
        %3570 = vdwg.mxu0
        %v3571 = vld [vmem:[#allocation3] sm:$0xff]
        %v3572 = vld [vmem:[#allocation3 + $0x8] sm:$0xff]
        %v3573 = vld [vmem:[#allocation3 + $0x10] sm:$0xff]
        %v3574 = vld [vmem:[#allocation3 + $0x18] sm:$0xff]
        %v3575 = vld [vmem:[#allocation3 + $0x20] sm:$0xff]
        %v3576 = vld [vmem:[#allocation3 + $0x28] sm:$0xff]
        %v3577 = vld [vmem:[#allocation3 + $0x30] sm:$0xff]
        %v3578 = vld [vmem:[#allocation3 + $0x38] sm:$0xff]
        %v3579 = vld [vmem:[#allocation3 + $0x40] sm:$0xff]
        %v3580 = vld [vmem:[#allocation3 + $0x48] sm:$0xff]
        %v3581 = vld [vmem:[#allocation3 + $0x50] sm:$0xff]
        %v3582 = vld [vmem:[#allocation3 + $0x58] sm:$0xff]
        %v3583 = vld [vmem:[#allocation3 + $0x60] sm:$0xff]
        %v3584 = vld [vmem:[#allocation3 + $0x68] sm:$0xff]
        %v3585 = vld [vmem:[#allocation3 + $0x70] sm:$0xff]
        %v3586 = vld [vmem:[#allocation3 + $0x78] sm:$0xff]
        %v3587 = vld [vmem:[#allocation3 + $0x80] sm:$0xff]
        %v3588 = vld [vmem:[#allocation3 + $0x88] sm:$0xff]
        %v3589 = vld [vmem:[#allocation3 + $0x90] sm:$0xff]
        %v3590 = vld [vmem:[#allocation3 + $0x98] sm:$0xff]
        %v3591 = vld [vmem:[#allocation3 + $0xa0] sm:$0xff]
        %v3592 = vld [vmem:[#allocation3 + $0xa8] sm:$0xff]
        %v3593 = vld [vmem:[#allocation3 + $0xb0] sm:$0xff]
        %v3594 = vld [vmem:[#allocation3 + $0xb8] sm:$0xff]
        %v3595 = vld [vmem:[#allocation3 + $0xc0] sm:$0xff]
        %v3596 = vld [vmem:[#allocation3 + $0xc8] sm:$0xff]
        %v3597 = vld [vmem:[#allocation3 + $0xd0] sm:$0xff]
        %v3598 = vld [vmem:[#allocation3 + $0xd8] sm:$0xff]
        %v3599 = vld [vmem:[#allocation3 + $0xe0] sm:$0xff]
        %v3600 = vadd.f32 %v3571, %v3454
        %v3601 = vadd.f32 %v3572, %v3457
        %v3602 = vadd.f32 %v3573, %v3462
        %v3603 = vadd.f32 %v3574, %v3465
        %v3604 = vadd.f32 %v3575, %v3470
        %v3605 = vadd.f32 %v3576, %v3473
        %v3606 = vadd.f32 %v3577, %v3478
        %v3607 = vadd.f32 %v3578, %v3481
        %v3608 = vadd.f32 %v3579, %v3486
        %v3609 = vadd.f32 %v3580, %v3489
        %v3610 = vadd.f32 %v3581, %v3494
        %v3611 = vadd.f32 %v3582, %v3497
        %v3612 = vadd.f32 %v3583, %v3502
        %v3613 = vadd.f32 %v3584, %v3505
        %v3614 = vadd.f32 %v3585, %v3510
        %v3615 = vadd.f32 %v3586, %v3513
        %v3616 = vadd.f32 %v3587, %v3518
        %v3617 = vadd.f32 %v3588, %v3521
        %v3618 = vadd.f32 %v3589, %v3526
        %v3619 = vadd.f32 %v3590, %v3529
        %v3620 = vadd.f32 %v3591, %v3534
        %v3621 = vadd.f32 %v3592, %v3537
        %v3622 = vadd.f32 %v3593, %v3542
        %v3623 = vadd.f32 %v3594, %v3545
        %v3624 = vadd.f32 %v3595, %v3550
        %v3625 = vadd.f32 %v3596, %v3553
        %v3626 = vadd.f32 %v3597, %v3558
        %v3627 = vadd.f32 %v3598, %v3561
        %v3628 = vadd.f32 %v3599, %v3566
        %3629 = vst [vmem:[#allocation3] sm:$0xff] %v3600
        %3630 = vst [vmem:[#allocation3 + $0x8] sm:$0xff] %v3601
        %3631 = vst [vmem:[#allocation3 + $0x10] sm:$0xff] %v3602
        %3632 = vst [vmem:[#allocation3 + $0x18] sm:$0xff] %v3603
        %3633 = vst [vmem:[#allocation3 + $0x20] sm:$0xff] %v3604
        %3634 = vst [vmem:[#allocation3 + $0x28] sm:$0xff] %v3605
        %3635 = vst [vmem:[#allocation3 + $0x30] sm:$0xff] %v3606
        %3636 = vst [vmem:[#allocation3 + $0x38] sm:$0xff] %v3607
        %3637 = vst [vmem:[#allocation3 + $0x40] sm:$0xff] %v3608
        %3638 = vst [vmem:[#allocation3 + $0x48] sm:$0xff] %v3609
        %3639 = vst [vmem:[#allocation3 + $0x50] sm:$0xff] %v3610
        %3640 = vst [vmem:[#allocation3 + $0x58] sm:$0xff] %v3611
        %3641 = vst [vmem:[#allocation3 + $0x60] sm:$0xff] %v3612
        %3642 = vst [vmem:[#allocation3 + $0x68] sm:$0xff] %v3613
        %3643 = vst [vmem:[#allocation3 + $0x70] sm:$0xff] %v3614
        %3644 = vst [vmem:[#allocation3 + $0x78] sm:$0xff] %v3615
        %3645 = vst [vmem:[#allocation3 + $0x80] sm:$0xff] %v3616
        %3646 = vst [vmem:[#allocation3 + $0x88] sm:$0xff] %v3617
        %3647 = vst [vmem:[#allocation3 + $0x90] sm:$0xff] %v3618
        %3648 = vst [vmem:[#allocation3 + $0x98] sm:$0xff] %v3619
        %3649 = vst [vmem:[#allocation3 + $0xa0] sm:$0xff] %v3620
        %3650 = vst [vmem:[#allocation3 + $0xa8] sm:$0xff] %v3621
        %3651 = vst [vmem:[#allocation3 + $0xb0] sm:$0xff] %v3622
        %3652 = vst [vmem:[#allocation3 + $0xb8] sm:$0xff] %v3623
        %3653 = vst [vmem:[#allocation3 + $0xc0] sm:$0xff] %v3624
        %3654 = vst [vmem:[#allocation3 + $0xc8] sm:$0xff] %v3625
        %3655 = vst [vmem:[#allocation3 + $0xd0] sm:$0xff] %v3626
        %3656 = vst [vmem:[#allocation3 + $0xd8] sm:$0xff] %v3627
        %3657 = vst [vmem:[#allocation3 + $0xe0] sm:$0xff] %v3628
        %v3658 = vld [vmem:[%s1494] ss:$2 sm:$0xff]
        %v3659 = vld [vmem:[%s1496] ss:$2 sm:$0xff]
        %v3660 = vld [vmem:[%s1498] ss:$2 sm:$0xff]
        %v3661 = vld [vmem:[%s1500] ss:$2 sm:$0xff]
        %v3662 = vld [vmem:[%s1502] ss:$2 sm:$0xff]
        %v3663 = vld [vmem:[%s1504] ss:$2 sm:$0xff]
        %v3664 = vld [vmem:[%s1506] ss:$2 sm:$0xff]
        %v3665 = vld [vmem:[%s1508] ss:$2 sm:$0xff]
        %v3666 = vld [vmem:[%s1510] ss:$2 sm:$0xff]
        %v3667 = vld [vmem:[%s1512] ss:$2 sm:$0xff]
        %v3668 = vld [vmem:[%s1514] ss:$2 sm:$0xff]
        %v3669 = vld [vmem:[%s1516] ss:$2 sm:$0xff]
        %v3670 = vld [vmem:[%s1518] ss:$2 sm:$0xff]
        %v3671 = vld [vmem:[%s1520] ss:$2 sm:$0xff]
        %v3672 = vld [vmem:[%s1522] ss:$2 sm:$0xff]
        %v3673 = vld [vmem:[%s1524] ss:$2 sm:$0xff]
        %v3674 = vld [vmem:[%s1526] ss:$2 sm:$0xff]
        %v3675 = vld [vmem:[%s1528] ss:$2 sm:$0xff]
        %v3676 = vld [vmem:[%s1530] ss:$2 sm:$0xff]
        %v3677 = vld [vmem:[%s1532] ss:$2 sm:$0xff]
        %v3678 = vld [vmem:[%s1534] ss:$2 sm:$0xff]
        %v3679 = vld [vmem:[%s1536] ss:$2 sm:$0xff]
        %v3680 = vld [vmem:[%s1538] ss:$2 sm:$0xff]
        %v3681 = vld [vmem:[%s1540] ss:$2 sm:$0xff]
        %v3682 = vld [vmem:[%s1542] ss:$2 sm:$0xff]
        %v3683 = vld [vmem:[%s2599] ss:$2 sm:$0xff]
        %v3684 = vld [vmem:[%s2601] ss:$2 sm:$0xff]
        %s3685 = scalar_lea.vmem [#allocation2], 513
        %v3686 = vld [vmem:[%s3685] ss:$2 sm:$0xff]
        %s3687 = scalar_lea.vmem [#allocation2], 529
        %v3688 = vld [vmem:[%s3687] ss:$2 sm:$0xff]
        %v3689 = vpack.c.bf16 %v3659, %v3658
        %v3690 = vpack.c.bf16 %v3661, %v3660
        %v3691 = vpack.c.bf16 %v3663, %v3662
        %v3692 = vpack.c.bf16 %v3665, %v3664
        %v3693 = vpack.c.bf16 %v3667, %v3666
        %v3694 = vpack.c.bf16 %v3669, %v3668
        %v3695 = vpack.c.bf16 %v3671, %v3670
        %v3696 = vpack.c.bf16 %v3673, %v3672
        %v3697 = vpack.c.bf16 %v3675, %v3674
        %v3698 = vpack.c.bf16 %v3677, %v3676
        %v3699 = vpack.c.bf16 %v3679, %v3678
        %v3700 = vpack.c.bf16 %v3681, %v3680
        %v3701 = vpack.c.bf16 %v3683, %v3682
        %v3702 = vpack.c.bf16 %v3686, %v3684
        %v3703 = vpack.c.bf16 %v3688, %v3688
        %s3704 = sadd.s32 %s857, 8
        %s3705 = smul.u32 %s3704, 16
        %s3706 = smul.addr %s3705, 4
        %s3707 = scalar_lea.vmem %s3, %s3706
        %v3708 = vld [vmem:[%s3707] sm:$0xf]
        %v3709 = vld [vmem:[%s3707 + $0x4] sm:$0xf]
        %v3710 = vld [vmem:[%s3707 + $0x8] sm:$0xf]
        %v3711 = vld [vmem:[%s3707 + $0xc] sm:$0xf]
        %v3712 = vld [vmem:[%s3707 + $0x10] sm:$0xf]
        %v3713 = vld [vmem:[%s3707 + $0x14] sm:$0xf]
        %v3714 = vld [vmem:[%s3707 + $0x18] sm:$0xf]
        %v3715 = vld [vmem:[%s3707 + $0x1c] sm:$0xf]
        %v3716 = vld [vmem:[%s3707 + $0x20] sm:$0xf]
        %v3717 = vld [vmem:[%s3707 + $0x24] sm:$0xf]
        %v3718 = vld [vmem:[%s3707 + $0x28] sm:$0xf]
        %v3719 = vld [vmem:[%s3707 + $0x2c] sm:$0xf]
        %v3720 = vld [vmem:[%s3707 + $0x30] sm:$0xf]
        %v3721 = vld [vmem:[%s3707 + $0x34] sm:$0xf]
        %v3722 = vld [vmem:[%s3707 + $0x38] sm:$0xf]
        %v3723 = vld [vmem:[%s3707 + $0x3c] sm:$0xf]
        %v3740 = vunpack.c.l.b16 %v3708
        %v3741 = vunpack.c.l.b16 %v3709
        %v3742 = vunpack.c.l.b16 %v3710
        %v3743 = vunpack.c.l.b16 %v3711
        %v3744 = vunpack.c.l.b16 %v3712
        %v3745 = vunpack.c.l.b16 %v3713
        %v3746 = vunpack.c.l.b16 %v3714
        %v3747 = vunpack.c.l.b16 %v3715
        %v3748 = vunpack.c.l.b16 %v3716
        %v3749 = vunpack.c.l.b16 %v3717
        %v3750 = vunpack.c.l.b16 %v3718
        %v3751 = vunpack.c.l.b16 %v3719
        %v3752 = vunpack.c.l.b16 %v3720
        %v3753 = vunpack.c.l.b16 %v3721
        %v3754 = vunpack.c.l.b16 %v3722
        %v3755 = vunpack.c.l.b16 %v3723
        %v3756 = vpack.c.b16 %v3741, %v3740
        %v3757 = vpack.c.b16 %v3743, %v3742
        %v3758 = vpack.c.b16 %v3745, %v3744
        %v3759 = vpack.c.b16 %v3747, %v3746
        %v3760 = vpack.c.b16 %v3749, %v3748
        %v3761 = vpack.c.b16 %v3751, %v3750
        %v3762 = vpack.c.b16 %v3753, %v3752
        %v3763 = vpack.c.b16 %v3755, %v3754
        %3772 = vmatprep.subr.bf16.mxu0 0
        %3773 = vmatpush1.bf16.msra.mxu0 %v3763
        %3774 = vmatprep.subr.bf16.mxu0 0
        %3775 = vmatpush1.bf16.msra.mxu0 %v3762
        %3776 = vmatprep.subr.bf16.mxu0 0
        %3777 = vmatpush1.bf16.msra.mxu0 %v3761
        %3778 = vmatprep.subr.bf16.mxu0 0
        %3779 = vmatpush1.bf16.msra.mxu0 %v3760
        %3780 = vmatprep.subr.bf16.mxu0 0
        %3781 = vmatpush1.bf16.msra.mxu0 %v3759
        %3782 = vmatprep.subr.bf16.mxu0 0
        %3783 = vmatpush1.bf16.msra.mxu0 %v3758
        %3784 = vmatprep.subr.bf16.mxu0 0
        %3785 = vmatpush1.bf16.msra.mxu0 %v3757
        %3786 = vmatprep.subr.bf16.mxu0 0
        %3787 = vmatpush1.bf16.msra.mxu0 %v3756
        %3788 = vmatprep.subr.bf16.mxu0 0
        %3789 = vmatpush2.bf16.msra.mxu0 0
        %3790 = vmatprep.subr.bf16.mxu0 0
        %3791 = vmatpush2.bf16.msra.mxu0 0
        %3792 = vmatprep.subr.bf16.mxu0 0
        %3793 = vmatpush2.bf16.msra.mxu0 0
        %3794 = vmatprep.subr.bf16.mxu0 0
        %3795 = vmatpush2.bf16.msra.mxu0 0
        %3796 = vmatprep.subr.bf16.mxu0 0
        %3797 = vmatpush2.bf16.msra.mxu0 0
        %3798 = vmatprep.subr.bf16.mxu0 0
        %3799 = vmatpush2.bf16.msra.mxu0 0
        %3800 = vmatprep.subr.bf16.mxu0 0
        %3801 = vmatpush2.bf16.msra.mxu0 0
        %3802 = vmatprep.subr.bf16.mxu0 0
        %3803 = vmatpush2.bf16.msra.mxu0 0
        %3804 = vmatprep.mubr.bf16.mxu0 0
        %3805 = vmatmul.mubr.bf16.gmra.mxu0 %v3689
        %v3806 = vpop.f32.mrf.mxu0
        %v3807 = vadd.f32 0.0, %v3806
        %v3808 = vpop.f32.mrf.mxu0
        %v3809 = vpop.f32.mrf.mxu0
        %v3810 = vadd.f32 0.0, %v3809
        %v3811 = vpop.f32.mrf.mxu0
        %3812 = vmatprep.mubr.bf16.mxu0 0
        %3813 = vmatmul.mubr.bf16.gmra.mxu0 %v3690
        %v3814 = vpop.f32.mrf.mxu0
        %v3815 = vadd.f32 0.0, %v3814
        %v3816 = vpop.f32.mrf.mxu0
        %v3817 = vpop.f32.mrf.mxu0
        %v3818 = vadd.f32 0.0, %v3817
        %v3819 = vpop.f32.mrf.mxu0
        %3820 = vmatprep.mubr.bf16.mxu0 0
        %3821 = vmatmul.mubr.bf16.gmra.mxu0 %v3691
        %v3822 = vpop.f32.mrf.mxu0
        %v3823 = vadd.f32 0.0, %v3822
        %v3824 = vpop.f32.mrf.mxu0
        %v3825 = vpop.f32.mrf.mxu0
        %v3826 = vadd.f32 0.0, %v3825
        %v3827 = vpop.f32.mrf.mxu0
        %3828 = vmatprep.mubr.bf16.mxu0 0
        %3829 = vmatmul.mubr.bf16.gmra.mxu0 %v3692
        %v3830 = vpop.f32.mrf.mxu0
        %v3831 = vadd.f32 0.0, %v3830
        %v3832 = vpop.f32.mrf.mxu0
        %v3833 = vpop.f32.mrf.mxu0
        %v3834 = vadd.f32 0.0, %v3833
        %v3835 = vpop.f32.mrf.mxu0
        %3836 = vmatprep.mubr.bf16.mxu0 0
        %3837 = vmatmul.mubr.bf16.gmra.mxu0 %v3693
        %v3838 = vpop.f32.mrf.mxu0
        %v3839 = vadd.f32 0.0, %v3838
        %v3840 = vpop.f32.mrf.mxu0
        %v3841 = vpop.f32.mrf.mxu0
        %v3842 = vadd.f32 0.0, %v3841
        %v3843 = vpop.f32.mrf.mxu0
        %3844 = vmatprep.mubr.bf16.mxu0 0
        %3845 = vmatmul.mubr.bf16.gmra.mxu0 %v3694
        %v3846 = vpop.f32.mrf.mxu0
        %v3847 = vadd.f32 0.0, %v3846
        %v3848 = vpop.f32.mrf.mxu0
        %v3849 = vpop.f32.mrf.mxu0
        %v3850 = vadd.f32 0.0, %v3849
        %v3851 = vpop.f32.mrf.mxu0
        %3852 = vmatprep.mubr.bf16.mxu0 0
        %3853 = vmatmul.mubr.bf16.gmra.mxu0 %v3695
        %v3854 = vpop.f32.mrf.mxu0
        %v3855 = vadd.f32 0.0, %v3854
        %v3856 = vpop.f32.mrf.mxu0
        %v3857 = vpop.f32.mrf.mxu0
        %v3858 = vadd.f32 0.0, %v3857
        %v3859 = vpop.f32.mrf.mxu0
        %3860 = vmatprep.mubr.bf16.mxu0 0
        %3861 = vmatmul.mubr.bf16.gmra.mxu0 %v3696
        %v3862 = vpop.f32.mrf.mxu0
        %v3863 = vadd.f32 0.0, %v3862
        %v3864 = vpop.f32.mrf.mxu0
        %v3865 = vpop.f32.mrf.mxu0
        %v3866 = vadd.f32 0.0, %v3865
        %v3867 = vpop.f32.mrf.mxu0
        %3868 = vmatprep.mubr.bf16.mxu0 0
        %3869 = vmatmul.mubr.bf16.gmra.mxu0 %v3697
        %v3870 = vpop.f32.mrf.mxu0
        %v3871 = vadd.f32 0.0, %v3870
        %v3872 = vpop.f32.mrf.mxu0
        %v3873 = vpop.f32.mrf.mxu0
        %v3874 = vadd.f32 0.0, %v3873
        %v3875 = vpop.f32.mrf.mxu0
        %3876 = vmatprep.mubr.bf16.mxu0 0
        %3877 = vmatmul.mubr.bf16.gmra.mxu0 %v3698
        %v3878 = vpop.f32.mrf.mxu0
        %v3879 = vadd.f32 0.0, %v3878
        %v3880 = vpop.f32.mrf.mxu0
        %v3881 = vpop.f32.mrf.mxu0
        %v3882 = vadd.f32 0.0, %v3881
        %v3883 = vpop.f32.mrf.mxu0
        %3884 = vmatprep.mubr.bf16.mxu0 0
        %3885 = vmatmul.mubr.bf16.gmra.mxu0 %v3699
        %v3886 = vpop.f32.mrf.mxu0
        %v3887 = vadd.f32 0.0, %v3886
        %v3888 = vpop.f32.mrf.mxu0
        %v3889 = vpop.f32.mrf.mxu0
        %v3890 = vadd.f32 0.0, %v3889
        %v3891 = vpop.f32.mrf.mxu0
        %3892 = vmatprep.mubr.bf16.mxu0 0
        %3893 = vmatmul.mubr.bf16.gmra.mxu0 %v3700
        %v3894 = vpop.f32.mrf.mxu0
        %v3895 = vadd.f32 0.0, %v3894
        %v3896 = vpop.f32.mrf.mxu0
        %v3897 = vpop.f32.mrf.mxu0
        %v3898 = vadd.f32 0.0, %v3897
        %v3899 = vpop.f32.mrf.mxu0
        %3900 = vmatprep.mubr.bf16.mxu0 0
        %3901 = vmatmul.mubr.bf16.gmra.mxu0 %v3701
        %v3902 = vpop.f32.mrf.mxu0
        %v3903 = vadd.f32 0.0, %v3902
        %v3904 = vpop.f32.mrf.mxu0
        %v3905 = vpop.f32.mrf.mxu0
        %v3906 = vadd.f32 0.0, %v3905
        %v3907 = vpop.f32.mrf.mxu0
        %3908 = vmatprep.mubr.bf16.mxu0 0
        %3909 = vmatmul.mubr.bf16.gmra.mxu0 %v3702
        %v3910 = vpop.f32.mrf.mxu0
        %v3911 = vadd.f32 0.0, %v3910
        %v3912 = vpop.f32.mrf.mxu0
        %v3913 = vpop.f32.mrf.mxu0
        %v3914 = vadd.f32 0.0, %v3913
        %v3915 = vpop.f32.mrf.mxu0
        %3916 = vmatprep.mubr.bf16.mxu0 0
        %3917 = vmatmul.mubr.bf16.gmra.mxu0 %v3703
        %v3918 = vpop.f32.mrf.mxu0
        %v3919 = vadd.f32 0.0, %v3918
        %v3920 = vpop.f32.mrf.mxu0
        %v3921 = vpop.f32.mrf.mxu0
        %v3922 = vpop.f32.mrf.mxu0
        %3923 = vdwg.mxu0
        %v3924 = vld [vmem:[#allocation3] sm:$0xff]
        %v3925 = vld [vmem:[#allocation3 + $0x8] sm:$0xff]
        %v3926 = vld [vmem:[#allocation3 + $0x10] sm:$0xff]
        %v3927 = vld [vmem:[#allocation3 + $0x18] sm:$0xff]
        %v3928 = vld [vmem:[#allocation3 + $0x20] sm:$0xff]
        %v3929 = vld [vmem:[#allocation3 + $0x28] sm:$0xff]
        %v3930 = vld [vmem:[#allocation3 + $0x30] sm:$0xff]
        %v3931 = vld [vmem:[#allocation3 + $0x38] sm:$0xff]
        %v3932 = vld [vmem:[#allocation3 + $0x40] sm:$0xff]
        %v3933 = vld [vmem:[#allocation3 + $0x48] sm:$0xff]
        %v3934 = vld [vmem:[#allocation3 + $0x50] sm:$0xff]
        %v3935 = vld [vmem:[#allocation3 + $0x58] sm:$0xff]
        %v3936 = vld [vmem:[#allocation3 + $0x60] sm:$0xff]
        %v3937 = vld [vmem:[#allocation3 + $0x68] sm:$0xff]
        %v3938 = vld [vmem:[#allocation3 + $0x70] sm:$0xff]
        %v3939 = vld [vmem:[#allocation3 + $0x78] sm:$0xff]
        %v3940 = vld [vmem:[#allocation3 + $0x80] sm:$0xff]
        %v3941 = vld [vmem:[#allocation3 + $0x88] sm:$0xff]
        %v3942 = vld [vmem:[#allocation3 + $0x90] sm:$0xff]
        %v3943 = vld [vmem:[#allocation3 + $0x98] sm:$0xff]
        %v3944 = vld [vmem:[#allocation3 + $0xa0] sm:$0xff]
        %v3945 = vld [vmem:[#allocation3 + $0xa8] sm:$0xff]
        %v3946 = vld [vmem:[#allocation3 + $0xb0] sm:$0xff]
        %v3947 = vld [vmem:[#allocation3 + $0xb8] sm:$0xff]
        %v3948 = vld [vmem:[#allocation3 + $0xc0] sm:$0xff]
        %v3949 = vld [vmem:[#allocation3 + $0xc8] sm:$0xff]
        %v3950 = vld [vmem:[#allocation3 + $0xd0] sm:$0xff]
        %v3951 = vld [vmem:[#allocation3 + $0xd8] sm:$0xff]
        %v3952 = vld [vmem:[#allocation3 + $0xe0] sm:$0xff]
        %v3953 = vadd.f32 %v3924, %v3807
        %v3954 = vadd.f32 %v3925, %v3810
        %v3955 = vadd.f32 %v3926, %v3815
        %v3956 = vadd.f32 %v3927, %v3818
        %v3957 = vadd.f32 %v3928, %v3823
        %v3958 = vadd.f32 %v3929, %v3826
        %v3959 = vadd.f32 %v3930, %v3831
        %v3960 = vadd.f32 %v3931, %v3834
        %v3961 = vadd.f32 %v3932, %v3839
        %v3962 = vadd.f32 %v3933, %v3842
        %v3963 = vadd.f32 %v3934, %v3847
        %v3964 = vadd.f32 %v3935, %v3850
        %v3965 = vadd.f32 %v3936, %v3855
        %v3966 = vadd.f32 %v3937, %v3858
        %v3967 = vadd.f32 %v3938, %v3863
        %v3968 = vadd.f32 %v3939, %v3866
        %v3969 = vadd.f32 %v3940, %v3871
        %v3970 = vadd.f32 %v3941, %v3874
        %v3971 = vadd.f32 %v3942, %v3879
        %v3972 = vadd.f32 %v3943, %v3882
        %v3973 = vadd.f32 %v3944, %v3887
        %v3974 = vadd.f32 %v3945, %v3890
        %v3975 = vadd.f32 %v3946, %v3895
        %v3976 = vadd.f32 %v3947, %v3898
        %v3977 = vadd.f32 %v3948, %v3903
        %v3978 = vadd.f32 %v3949, %v3906
        %v3979 = vadd.f32 %v3950, %v3911
        %v3980 = vadd.f32 %v3951, %v3914
        %v3981 = vadd.f32 %v3952, %v3919
        %3982 = vst [vmem:[#allocation3] sm:$0xff] %v3953
        %3983 = vst [vmem:[#allocation3 + $0x8] sm:$0xff] %v3954
        %3984 = vst [vmem:[#allocation3 + $0x10] sm:$0xff] %v3955
        %3985 = vst [vmem:[#allocation3 + $0x18] sm:$0xff] %v3956
        %3986 = vst [vmem:[#allocation3 + $0x20] sm:$0xff] %v3957
        %3987 = vst [vmem:[#allocation3 + $0x28] sm:$0xff] %v3958
        %3988 = vst [vmem:[#allocation3 + $0x30] sm:$0xff] %v3959
        %3989 = vst [vmem:[#allocation3 + $0x38] sm:$0xff] %v3960
        %3990 = vst [vmem:[#allocation3 + $0x40] sm:$0xff] %v3961
        %3991 = vst [vmem:[#allocation3 + $0x48] sm:$0xff] %v3962
        %3992 = vst [vmem:[#allocation3 + $0x50] sm:$0xff] %v3963
        %3993 = vst [vmem:[#allocation3 + $0x58] sm:$0xff] %v3964
        %3994 = vst [vmem:[#allocation3 + $0x60] sm:$0xff] %v3965
        %3995 = vst [vmem:[#allocation3 + $0x68] sm:$0xff] %v3966
        %3996 = vst [vmem:[#allocation3 + $0x70] sm:$0xff] %v3967
        %3997 = vst [vmem:[#allocation3 + $0x78] sm:$0xff] %v3968
        %3998 = vst [vmem:[#allocation3 + $0x80] sm:$0xff] %v3969
        %3999 = vst [vmem:[#allocation3 + $0x88] sm:$0xff] %v3970
        %4000 = vst [vmem:[#allocation3 + $0x90] sm:$0xff] %v3971
        %4001 = vst [vmem:[#allocation3 + $0x98] sm:$0xff] %v3972
        %4002 = vst [vmem:[#allocation3 + $0xa0] sm:$0xff] %v3973
        %4003 = vst [vmem:[#allocation3 + $0xa8] sm:$0xff] %v3974
        %4004 = vst [vmem:[#allocation3 + $0xb0] sm:$0xff] %v3975
        %4005 = vst [vmem:[#allocation3 + $0xb8] sm:$0xff] %v3976
        %4006 = vst [vmem:[#allocation3 + $0xc0] sm:$0xff] %v3977
        %4007 = vst [vmem:[#allocation3 + $0xc8] sm:$0xff] %v3978
        %4008 = vst [vmem:[#allocation3 + $0xd0] sm:$0xff] %v3979
        %4009 = vst [vmem:[#allocation3 + $0xd8] sm:$0xff] %v3980
        %4010 = vst [vmem:[#allocation3 + $0xe0] sm:$0xff] %v3981
        %v4011 = vlaneseq
        %v4012 = vshrl.u32 %v4011, 7
        %v4013 = vadd.s32 %v4012, 8
        %v4014 = vadd.s32 %v4012, 16
        %v4015 = vadd.s32 %v4012, 24
        %v4016 = vadd.s32 %v4012, 32
        %v4017 = vadd.s32 %v4012, 40
        %v4018 = vadd.s32 %v4012, 48
        %v4019 = vadd.s32 %v4012, 56
        %v4020 = vadd.s32 %v4012, 64
        %v4021 = vadd.s32 %v4012, 72
        %v4022 = vadd.s32 %v4012, 80
        %v4023 = vadd.s32 %v4012, 88
        %v4024 = vadd.s32 %v4012, 96
        %v4025 = vadd.s32 %v4012, 104
        %v4026 = vadd.s32 %v4012, 112
        %v4027 = vadd.s32 %v4012, 120
        %v4028 = vadd.s32 %v4012, 128
        %v4029 = vadd.s32 %v4012, 136
        %v4030 = vadd.s32 %v4012, 144
        %v4031 = vadd.s32 %v4012, 152
        %v4032 = vadd.s32 %v4012, 160
        %v4033 = vadd.s32 %v4012, 168
        %v4034 = vadd.s32 %v4012, 176
        %v4035 = vadd.s32 %v4012, 184
        %v4036 = vadd.s32 %v4012, 192
        %v4037 = vadd.s32 %v4012, 200
        %v4038 = vadd.s32 %v4012, 208
        %v4039 = vadd.s32 %v4012, 216
        %v4040 = vadd.s32 %v4012, 224
        %vm4041 = vcmp.lt.s32.totalorder %v4012, 0
        %v4042 = vsub.s32 0, %v4012
        %v4043 = vsel %vm4041, %v4042, %v4012
        %v4044 = vshrl.u32 %v4043, 5
        %v4045 = vand.u32 %v4043, 31
        %v4046 = vsub.s32 0, %v4045
        %v4047 = vsel %vm4041, %v4046, %v4045
        %vm4048 = vcmp.lt.s32.totalorder %v4013, 0
        %v4049 = vsub.s32 0, %v4013
        %v4050 = vsel %vm4048, %v4049, %v4013
        %v4051 = vshrl.u32 %v4050, 5
        %v4052 = vand.u32 %v4050, 31
        %v4053 = vsub.s32 0, %v4052
        %v4054 = vsel %vm4048, %v4053, %v4052
        %vm4055 = vcmp.lt.s32.totalorder %v4014, 0
        %v4056 = vsub.s32 0, %v4014
        %v4057 = vsel %vm4055, %v4056, %v4014
        %v4058 = vshrl.u32 %v4057, 5
        %v4059 = vand.u32 %v4057, 31
        %v4060 = vsub.s32 0, %v4059
        %v4061 = vsel %vm4055, %v4060, %v4059
        %vm4062 = vcmp.lt.s32.totalorder %v4015, 0
        %v4063 = vsub.s32 0, %v4015
        %v4064 = vsel %vm4062, %v4063, %v4015
        %v4065 = vshrl.u32 %v4064, 5
        %v4066 = vand.u32 %v4064, 31
        %v4067 = vsub.s32 0, %v4066
        %v4068 = vsel %vm4062, %v4067, %v4066
        %vm4069 = vcmp.lt.s32.totalorder %v4016, 0
        %v4070 = vsub.s32 0, %v4016
        %v4071 = vsel %vm4069, %v4070, %v4016
        %v4072 = vshrl.u32 %v4071, 5
        %v4073 = vand.u32 %v4071, 31
        %v4074 = vsub.s32 0, %v4073
        %v4075 = vsel %vm4069, %v4074, %v4073
        %vm4076 = vcmp.lt.s32.totalorder %v4017, 0
        %v4077 = vsub.s32 0, %v4017
        %v4078 = vsel %vm4076, %v4077, %v4017
        %v4079 = vshrl.u32 %v4078, 5
        %v4080 = vand.u32 %v4078, 31
        %v4081 = vsub.s32 0, %v4080
        %v4082 = vsel %vm4076, %v4081, %v4080
        %vm4083 = vcmp.lt.s32.totalorder %v4018, 0
        %v4084 = vsub.s32 0, %v4018
        %v4085 = vsel %vm4083, %v4084, %v4018
        %v4086 = vshrl.u32 %v4085, 5
        %v4087 = vand.u32 %v4085, 31
        %v4088 = vsub.s32 0, %v4087
        %v4089 = vsel %vm4083, %v4088, %v4087
        %vm4090 = vcmp.lt.s32.totalorder %v4019, 0
        %v4091 = vsub.s32 0, %v4019
        %v4092 = vsel %vm4090, %v4091, %v4019
        %v4093 = vshrl.u32 %v4092, 5
        %v4094 = vand.u32 %v4092, 31
        %v4095 = vsub.s32 0, %v4094
        %v4096 = vsel %vm4090, %v4095, %v4094
        %vm4097 = vcmp.lt.s32.totalorder %v4020, 0
        %v4098 = vsub.s32 0, %v4020
        %v4099 = vsel %vm4097, %v4098, %v4020
        %v4100 = vshrl.u32 %v4099, 5
        %v4101 = vand.u32 %v4099, 31
        %v4102 = vsub.s32 0, %v4101
        %v4103 = vsel %vm4097, %v4102, %v4101
        %vm4104 = vcmp.lt.s32.totalorder %v4021, 0
        %v4105 = vsub.s32 0, %v4021
        %v4106 = vsel %vm4104, %v4105, %v4021
        %v4107 = vshrl.u32 %v4106, 5
        %v4108 = vand.u32 %v4106, 31
        %v4109 = vsub.s32 0, %v4108
        %v4110 = vsel %vm4104, %v4109, %v4108
        %vm4111 = vcmp.lt.s32.totalorder %v4022, 0
        %v4112 = vsub.s32 0, %v4022
        %v4113 = vsel %vm4111, %v4112, %v4022
        %v4114 = vshrl.u32 %v4113, 5
        %v4115 = vand.u32 %v4113, 31
        %v4116 = vsub.s32 0, %v4115
        %v4117 = vsel %vm4111, %v4116, %v4115
        %vm4118 = vcmp.lt.s32.totalorder %v4023, 0
        %v4119 = vsub.s32 0, %v4023
        %v4120 = vsel %vm4118, %v4119, %v4023
        %v4121 = vshrl.u32 %v4120, 5
        %v4122 = vand.u32 %v4120, 31
        %v4123 = vsub.s32 0, %v4122
        %v4124 = vsel %vm4118, %v4123, %v4122
        %vm4125 = vcmp.lt.s32.totalorder %v4024, 0
        %v4126 = vsub.s32 0, %v4024
        %v4127 = vsel %vm4125, %v4126, %v4024
        %v4128 = vshrl.u32 %v4127, 5
        %v4129 = vand.u32 %v4127, 31
        %v4130 = vsub.s32 0, %v4129
        %v4131 = vsel %vm4125, %v4130, %v4129
        %vm4132 = vcmp.lt.s32.totalorder %v4025, 0
        %v4133 = vsub.s32 0, %v4025
        %v4134 = vsel %vm4132, %v4133, %v4025
        %v4135 = vshrl.u32 %v4134, 5
        %v4136 = vand.u32 %v4134, 31
        %v4137 = vsub.s32 0, %v4136
        %v4138 = vsel %vm4132, %v4137, %v4136
        %vm4139 = vcmp.lt.s32.totalorder %v4026, 0
        %v4140 = vsub.s32 0, %v4026
        %v4141 = vsel %vm4139, %v4140, %v4026
        %v4142 = vshrl.u32 %v4141, 5
        %v4143 = vand.u32 %v4141, 31
        %v4144 = vsub.s32 0, %v4143
        %v4145 = vsel %vm4139, %v4144, %v4143
        %vm4146 = vcmp.lt.s32.totalorder %v4027, 0
        %v4147 = vsub.s32 0, %v4027
        %v4148 = vsel %vm4146, %v4147, %v4027
        %v4149 = vshrl.u32 %v4148, 5
        %v4150 = vand.u32 %v4148, 31
        %v4151 = vsub.s32 0, %v4150
        %v4152 = vsel %vm4146, %v4151, %v4150
        %vm4153 = vcmp.lt.s32.totalorder %v4028, 0
        %v4154 = vsub.s32 0, %v4028
        %v4155 = vsel %vm4153, %v4154, %v4028
        %v4156 = vshrl.u32 %v4155, 5
        %v4157 = vand.u32 %v4155, 31
        %v4158 = vsub.s32 0, %v4157
        %v4159 = vsel %vm4153, %v4158, %v4157
        %vm4160 = vcmp.lt.s32.totalorder %v4029, 0
        %v4161 = vsub.s32 0, %v4029
        %v4162 = vsel %vm4160, %v4161, %v4029
        %v4163 = vshrl.u32 %v4162, 5
        %v4164 = vand.u32 %v4162, 31
        %v4165 = vsub.s32 0, %v4164
        %v4166 = vsel %vm4160, %v4165, %v4164
        %vm4167 = vcmp.lt.s32.totalorder %v4030, 0
        %v4168 = vsub.s32 0, %v4030
        %v4169 = vsel %vm4167, %v4168, %v4030
        %v4170 = vshrl.u32 %v4169, 5
        %v4171 = vand.u32 %v4169, 31
        %v4172 = vsub.s32 0, %v4171
        %v4173 = vsel %vm4167, %v4172, %v4171
        %vm4174 = vcmp.lt.s32.totalorder %v4031, 0
        %v4175 = vsub.s32 0, %v4031
        %v4176 = vsel %vm4174, %v4175, %v4031
        %v4177 = vshrl.u32 %v4176, 5
        %v4178 = vand.u32 %v4176, 31
        %v4179 = vsub.s32 0, %v4178
        %v4180 = vsel %vm4174, %v4179, %v4178
        %vm4181 = vcmp.lt.s32.totalorder %v4032, 0
        %v4182 = vsub.s32 0, %v4032
        %v4183 = vsel %vm4181, %v4182, %v4032
        %v4184 = vshrl.u32 %v4183, 5
        %v4185 = vand.u32 %v4183, 31
        %v4186 = vsub.s32 0, %v4185
        %v4187 = vsel %vm4181, %v4186, %v4185
        %vm4188 = vcmp.lt.s32.totalorder %v4033, 0
        %v4189 = vsub.s32 0, %v4033
        %v4190 = vsel %vm4188, %v4189, %v4033
        %v4191 = vshrl.u32 %v4190, 5
        %v4192 = vand.u32 %v4190, 31
        %v4193 = vsub.s32 0, %v4192
        %v4194 = vsel %vm4188, %v4193, %v4192
        %vm4195 = vcmp.lt.s32.totalorder %v4034, 0
        %v4196 = vsub.s32 0, %v4034
        %v4197 = vsel %vm4195, %v4196, %v4034
        %v4198 = vshrl.u32 %v4197, 5
        %v4199 = vand.u32 %v4197, 31
        %v4200 = vsub.s32 0, %v4199
        %v4201 = vsel %vm4195, %v4200, %v4199
        %vm4202 = vcmp.lt.s32.totalorder %v4035, 0
        %v4203 = vsub.s32 0, %v4035
        %v4204 = vsel %vm4202, %v4203, %v4035
        %v4205 = vshrl.u32 %v4204, 5
        %v4206 = vand.u32 %v4204, 31
        %v4207 = vsub.s32 0, %v4206
        %v4208 = vsel %vm4202, %v4207, %v4206
        %vm4209 = vcmp.lt.s32.totalorder %v4036, 0
        %v4210 = vsub.s32 0, %v4036
        %v4211 = vsel %vm4209, %v4210, %v4036
        %v4212 = vshrl.u32 %v4211, 5
        %v4213 = vand.u32 %v4211, 31
        %v4214 = vsub.s32 0, %v4213
        %v4215 = vsel %vm4209, %v4214, %v4213
        %vm4216 = vcmp.lt.s32.totalorder %v4037, 0
        %v4217 = vsub.s32 0, %v4037
        %v4218 = vsel %vm4216, %v4217, %v4037
        %v4219 = vshrl.u32 %v4218, 5
        %v4220 = vand.u32 %v4218, 31
        %v4221 = vsub.s32 0, %v4220
        %v4222 = vsel %vm4216, %v4221, %v4220
        %vm4223 = vcmp.lt.s32.totalorder %v4038, 0
        %v4224 = vsub.s32 0, %v4038
        %v4225 = vsel %vm4223, %v4224, %v4038
        %v4226 = vshrl.u32 %v4225, 5
        %v4227 = vand.u32 %v4225, 31
        %v4228 = vsub.s32 0, %v4227
        %v4229 = vsel %vm4223, %v4228, %v4227
        %vm4230 = vcmp.lt.s32.totalorder %v4039, 0
        %v4231 = vsub.s32 0, %v4039
        %v4232 = vsel %vm4230, %v4231, %v4039
        %v4233 = vshrl.u32 %v4232, 5
        %v4234 = vand.u32 %v4232, 31
        %v4235 = vsub.s32 0, %v4234
        %v4236 = vsel %vm4230, %v4235, %v4234
        %vm4237 = vcmp.lt.s32.totalorder %v4040, 0
        %v4238 = vsub.s32 0, %v4040
        %v4239 = vsel %vm4237, %v4238, %v4040
        %v4240 = vshrl.u32 %v4239, 5
        %v4241 = vand.u32 %v4239, 31
        %v4242 = vsub.s32 0, %v4241
        %v4243 = vsel %vm4237, %v4242, %v4241
        %vm4244 = vcmp.ne.s32.totalorder %v4047, 0
        %vm4245 = vcmp.ne.s32.totalorder %v4054, 0
        %vm4246 = vcmp.ne.s32.totalorder %v4061, 0
        %vm4247 = vcmp.ne.s32.totalorder %v4068, 0
        %vm4248 = vcmp.ne.s32.totalorder %v4075, 0
        %vm4249 = vcmp.ne.s32.totalorder %v4082, 0
        %vm4250 = vcmp.ne.s32.totalorder %v4089, 0
        %vm4251 = vcmp.ne.s32.totalorder %v4096, 0
        %vm4252 = vcmp.ne.s32.totalorder %v4103, 0
        %vm4253 = vcmp.ne.s32.totalorder %v4110, 0
        %vm4254 = vcmp.ne.s32.totalorder %v4117, 0
        %vm4255 = vcmp.ne.s32.totalorder %v4124, 0
        %vm4256 = vcmp.ne.s32.totalorder %v4131, 0
        %vm4257 = vcmp.ne.s32.totalorder %v4138, 0
        %vm4258 = vcmp.ne.s32.totalorder %v4145, 0
        %vm4259 = vcmp.ne.s32.totalorder %v4152, 0
        %vm4260 = vcmp.ne.s32.totalorder %v4159, 0
        %vm4261 = vcmp.ne.s32.totalorder %v4166, 0
        %vm4262 = vcmp.ne.s32.totalorder %v4173, 0
        %vm4263 = vcmp.ne.s32.totalorder %v4180, 0
        %vm4264 = vcmp.ne.s32.totalorder %v4187, 0
        %vm4265 = vcmp.ne.s32.totalorder %v4194, 0
        %vm4266 = vcmp.ne.s32.totalorder %v4201, 0
        %vm4267 = vcmp.ne.s32.totalorder %v4208, 0
        %vm4268 = vcmp.ne.s32.totalorder %v4215, 0
        %vm4269 = vcmp.ne.s32.totalorder %v4222, 0
        %vm4270 = vcmp.ne.s32.totalorder %v4229, 0
        %vm4271 = vcmp.ne.s32.totalorder %v4236, 0
        %vm4272 = vcmp.ne.s32.totalorder %v4243, 0
        %vm4273 = vcmp.lt.s32.totalorder %v4047, 0
        %vm4274 = vcmp.lt.s32.totalorder %v4054, 0
        %vm4275 = vcmp.lt.s32.totalorder %v4061, 0
        %vm4276 = vcmp.lt.s32.totalorder %v4068, 0
        %vm4277 = vcmp.lt.s32.totalorder %v4075, 0
        %vm4278 = vcmp.lt.s32.totalorder %v4082, 0
        %vm4279 = vcmp.lt.s32.totalorder %v4089, 0
        %vm4280 = vcmp.lt.s32.totalorder %v4096, 0
        %vm4281 = vcmp.lt.s32.totalorder %v4103, 0
        %vm4282 = vcmp.lt.s32.totalorder %v4110, 0
        %vm4283 = vcmp.lt.s32.totalorder %v4117, 0
        %vm4284 = vcmp.lt.s32.totalorder %v4124, 0
        %vm4285 = vcmp.lt.s32.totalorder %v4131, 0
        %vm4286 = vcmp.lt.s32.totalorder %v4138, 0
        %vm4287 = vcmp.lt.s32.totalorder %v4145, 0
        %vm4288 = vcmp.lt.s32.totalorder %v4152, 0
        %vm4289 = vcmp.lt.s32.totalorder %v4159, 0
        %vm4290 = vcmp.lt.s32.totalorder %v4166, 0
        %vm4291 = vcmp.lt.s32.totalorder %v4173, 0
        %vm4292 = vcmp.lt.s32.totalorder %v4180, 0
        %vm4293 = vcmp.lt.s32.totalorder %v4187, 0
        %vm4294 = vcmp.lt.s32.totalorder %v4194, 0
        %vm4295 = vcmp.lt.s32.totalorder %v4201, 0
        %vm4296 = vcmp.lt.s32.totalorder %v4208, 0
        %vm4297 = vcmp.lt.s32.totalorder %v4215, 0
        %vm4298 = vcmp.lt.s32.totalorder %v4222, 0
        %vm4299 = vcmp.lt.s32.totalorder %v4229, 0
        %vm4300 = vcmp.lt.s32.totalorder %v4236, 0
        %vm4301 = vcmp.lt.s32.totalorder %v4243, 0
        %vm4302 = vmand %vm4273, %vm4244
        %vm4303 = vmand %vm4274, %vm4245
        %vm4304 = vmand %vm4275, %vm4246
        %vm4305 = vmand %vm4276, %vm4247
        %vm4306 = vmand %vm4277, %vm4248
        %vm4307 = vmand %vm4278, %vm4249
        %vm4308 = vmand %vm4279, %vm4250
        %vm4309 = vmand %vm4280, %vm4251
        %vm4310 = vmand %vm4281, %vm4252
        %vm4311 = vmand %vm4282, %vm4253
        %vm4312 = vmand %vm4283, %vm4254
        %vm4313 = vmand %vm4284, %vm4255
        %vm4314 = vmand %vm4285, %vm4256
        %vm4315 = vmand %vm4286, %vm4257
        %vm4316 = vmand %vm4287, %vm4258
        %vm4317 = vmand %vm4288, %vm4259
        %vm4318 = vmand %vm4289, %vm4260
        %vm4319 = vmand %vm4290, %vm4261
        %vm4320 = vmand %vm4291, %vm4262
        %vm4321 = vmand %vm4292, %vm4263
        %vm4322 = vmand %vm4293, %vm4264
        %vm4323 = vmand %vm4294, %vm4265
        %vm4324 = vmand %vm4295, %vm4266
        %vm4325 = vmand %vm4296, %vm4267
        %vm4326 = vmand %vm4297, %vm4268
        %vm4327 = vmand %vm4298, %vm4269
        %vm4328 = vmand %vm4299, %vm4270
        %vm4329 = vmand %vm4300, %vm4271
        %vm4330 = vmand %vm4301, %vm4272
        %v4331 = vadd.s32 %v4047, 32
        %v4332 = vadd.s32 %v4054, 32
        %v4333 = vadd.s32 %v4061, 32
        %v4334 = vadd.s32 %v4068, 32
        %v4335 = vadd.s32 %v4075, 32
        %v4336 = vadd.s32 %v4082, 32
        %v4337 = vadd.s32 %v4089, 32
        %v4338 = vadd.s32 %v4096, 32
        %v4339 = vadd.s32 %v4103, 32
        %v4340 = vadd.s32 %v4110, 32
        %v4341 = vadd.s32 %v4117, 32
        %v4342 = vadd.s32 %v4124, 32
        %v4343 = vadd.s32 %v4131, 32
        %v4344 = vadd.s32 %v4138, 32
        %v4345 = vadd.s32 %v4145, 32
        %v4346 = vadd.s32 %v4152, 32
        %v4347 = vadd.s32 %v4159, 32
        %v4348 = vadd.s32 %v4166, 32
        %v4349 = vadd.s32 %v4173, 32
        %v4350 = vadd.s32 %v4180, 32
        %v4351 = vadd.s32 %v4187, 32
        %v4352 = vadd.s32 %v4194, 32
        %v4353 = vadd.s32 %v4201, 32
        %v4354 = vadd.s32 %v4208, 32
        %v4355 = vadd.s32 %v4215, 32
        %v4356 = vadd.s32 %v4222, 32
        %v4357 = vadd.s32 %v4229, 32
        %v4358 = vadd.s32 %v4236, 32
        %v4359 = vadd.s32 %v4243, 32
        %v4360 = vsel %vm4302, %v4331, %v4047
        %v4361 = vsel %vm4303, %v4332, %v4054
        %v4362 = vsel %vm4304, %v4333, %v4061
        %v4363 = vsel %vm4305, %v4334, %v4068
        %v4364 = vsel %vm4306, %v4335, %v4075
        %v4365 = vsel %vm4307, %v4336, %v4082
        %v4366 = vsel %vm4308, %v4337, %v4089
        %v4367 = vsel %vm4309, %v4338, %v4096
        %v4368 = vsel %vm4310, %v4339, %v4103
        %v4369 = vsel %vm4311, %v4340, %v4110
        %v4370 = vsel %vm4312, %v4341, %v4117
        %v4371 = vsel %vm4313, %v4342, %v4124
        %v4372 = vsel %vm4314, %v4343, %v4131
        %v4373 = vsel %vm4315, %v4344, %v4138
        %v4374 = vsel %vm4316, %v4345, %v4145
        %v4375 = vsel %vm4317, %v4346, %v4152
        %v4376 = vsel %vm4318, %v4347, %v4159
        %v4377 = vsel %vm4319, %v4348, %v4166
        %v4378 = vsel %vm4320, %v4349, %v4173
        %v4379 = vsel %vm4321, %v4350, %v4180
        %v4380 = vsel %vm4322, %v4351, %v4187
        %v4381 = vsel %vm4323, %v4352, %v4194
        %v4382 = vsel %vm4324, %v4353, %v4201
        %v4383 = vsel %vm4325, %v4354, %v4208
        %v4384 = vsel %vm4326, %v4355, %v4215
        %v4385 = vsel %vm4327, %v4356, %v4222
        %v4386 = vsel %vm4328, %v4357, %v4229
        %v4387 = vsel %vm4329, %v4358, %v4236
        %v4388 = vsel %vm4330, %v4359, %v4243
        %vm4389 = vcmp.lt.s32.totalorder %v4360, 8
        %vm4390 = vcmp.lt.s32.totalorder %v4361, 8
        %vm4391 = vcmp.lt.s32.totalorder %v4362, 8
        %vm4392 = vcmp.lt.s32.totalorder %v4363, 8
        %vm4393 = vcmp.lt.s32.totalorder %v4364, 8
        %vm4394 = vcmp.lt.s32.totalorder %v4365, 8
        %vm4395 = vcmp.lt.s32.totalorder %v4366, 8
        %vm4396 = vcmp.lt.s32.totalorder %v4367, 8
        %vm4397 = vcmp.lt.s32.totalorder %v4368, 8
        %vm4398 = vcmp.lt.s32.totalorder %v4369, 8
        %vm4399 = vcmp.lt.s32.totalorder %v4370, 8
        %vm4400 = vcmp.lt.s32.totalorder %v4371, 8
        %vm4401 = vcmp.lt.s32.totalorder %v4372, 8
        %vm4402 = vcmp.lt.s32.totalorder %v4373, 8
        %vm4403 = vcmp.lt.s32.totalorder %v4374, 8
        %vm4404 = vcmp.lt.s32.totalorder %v4375, 8
        %vm4405 = vcmp.lt.s32.totalorder %v4376, 8
        %vm4406 = vcmp.lt.s32.totalorder %v4377, 8
        %vm4407 = vcmp.lt.s32.totalorder %v4378, 8
        %vm4408 = vcmp.lt.s32.totalorder %v4379, 8
        %vm4409 = vcmp.lt.s32.totalorder %v4380, 8
        %vm4410 = vcmp.lt.s32.totalorder %v4381, 8
        %vm4411 = vcmp.lt.s32.totalorder %v4382, 8
        %vm4412 = vcmp.lt.s32.totalorder %v4383, 8
        %vm4413 = vcmp.lt.s32.totalorder %v4384, 8
        %vm4414 = vcmp.lt.s32.totalorder %v4385, 8
        %vm4415 = vcmp.lt.s32.totalorder %v4386, 8
        %vm4416 = vcmp.lt.s32.totalorder %v4387, 8
        %vm4417 = vcmp.lt.s32.totalorder %v4388, 8
        %v4418 = vld [vmem:[#allocation3] sm:$0xff]
        %v4419 = vld [vmem:[#allocation3 + $0x8] sm:$0xff]
        %v4420 = vld [vmem:[#allocation3 + $0x10] sm:$0xff]
        %v4421 = vld [vmem:[#allocation3 + $0x18] sm:$0xff]
        %v4422 = vld [vmem:[#allocation3 + $0x20] sm:$0xff]
        %v4423 = vld [vmem:[#allocation3 + $0x28] sm:$0xff]
        %v4424 = vld [vmem:[#allocation3 + $0x30] sm:$0xff]
        %v4425 = vld [vmem:[#allocation3 + $0x38] sm:$0xff]
        %v4426 = vld [vmem:[#allocation3 + $0x40] sm:$0xff]
        %v4427 = vld [vmem:[#allocation3 + $0x48] sm:$0xff]
        %v4428 = vld [vmem:[#allocation3 + $0x50] sm:$0xff]
        %v4429 = vld [vmem:[#allocation3 + $0x58] sm:$0xff]
        %v4430 = vld [vmem:[#allocation3 + $0x60] sm:$0xff]
        %v4431 = vld [vmem:[#allocation3 + $0x68] sm:$0xff]
        %v4432 = vld [vmem:[#allocation3 + $0x70] sm:$0xff]
        %v4433 = vld [vmem:[#allocation3 + $0x78] sm:$0xff]
        %v4434 = vld [vmem:[#allocation3 + $0x80] sm:$0xff]
        %v4435 = vld [vmem:[#allocation3 + $0x88] sm:$0xff]
        %v4436 = vld [vmem:[#allocation3 + $0x90] sm:$0xff]
        %v4437 = vld [vmem:[#allocation3 + $0x98] sm:$0xff]
        %v4438 = vld [vmem:[#allocation3 + $0xa0] sm:$0xff]
        %v4439 = vld [vmem:[#allocation3 + $0xa8] sm:$0xff]
        %v4440 = vld [vmem:[#allocation3 + $0xb0] sm:$0xff]
        %v4441 = vld [vmem:[#allocation3 + $0xb8] sm:$0xff]
        %v4442 = vld [vmem:[#allocation3 + $0xc0] sm:$0xff]
        %v4443 = vld [vmem:[#allocation3 + $0xc8] sm:$0xff]
        %v4444 = vld [vmem:[#allocation3 + $0xd0] sm:$0xff]
        %v4445 = vld [vmem:[#allocation3 + $0xd8] sm:$0xff]
        %v4446 = vld [vmem:[#allocation3 + $0xe0] sm:$0xff]
        %s4447 = scalar_lea.vmem %s4, %s26
        %v4448 = vld [vmem:[%s4447] sm:$0x1]
        %v4450 = vlaneseq
        %v4451 = vshrl.u32 %v4450, 7
        %v4452 = vsub.s32 0, %v4451
        %v4453 = vrot.slane %v4448, %v4452
        %v4455 = vadd.f32 %v4418, %v4453
        %v4456 = vadd.f32 %v4419, %v4453
        %v4457 = vadd.f32 %v4420, %v4453
        %v4458 = vadd.f32 %v4421, %v4453
        %v4459 = vadd.f32 %v4422, %v4453
        %v4460 = vadd.f32 %v4423, %v4453
        %v4461 = vadd.f32 %v4424, %v4453
        %v4462 = vadd.f32 %v4425, %v4453
        %v4463 = vadd.f32 %v4426, %v4453
        %v4464 = vadd.f32 %v4427, %v4453
        %v4465 = vadd.f32 %v4428, %v4453
        %v4466 = vadd.f32 %v4429, %v4453
        %v4467 = vadd.f32 %v4430, %v4453
        %v4468 = vadd.f32 %v4431, %v4453
        %v4469 = vadd.f32 %v4432, %v4453
        %v4470 = vadd.f32 %v4433, %v4453
        %v4471 = vadd.f32 %v4434, %v4453
        %v4472 = vadd.f32 %v4435, %v4453
        %v4473 = vadd.f32 %v4436, %v4453
        %v4474 = vadd.f32 %v4437, %v4453
        %v4475 = vadd.f32 %v4438, %v4453
        %v4476 = vadd.f32 %v4439, %v4453
        %v4477 = vadd.f32 %v4440, %v4453
        %v4478 = vadd.f32 %v4441, %v4453
        %v4479 = vadd.f32 %v4442, %v4453
        %v4480 = vadd.f32 %v4443, %v4453
        %v4481 = vadd.f32 %v4444, %v4453
        %v4482 = vadd.f32 %v4445, %v4453
        %v4483 = vadd.f32 %v4446, %v4453
        %v4484 = vmax.f32 %v4455, 0.0
        %v4485 = vmax.f32 %v4456, 0.0
        %v4486 = vmax.f32 %v4457, 0.0
        %v4487 = vmax.f32 %v4458, 0.0
        %v4488 = vmax.f32 %v4459, 0.0
        %v4489 = vmax.f32 %v4460, 0.0
        %v4490 = vmax.f32 %v4461, 0.0
        %v4491 = vmax.f32 %v4462, 0.0
        %v4492 = vmax.f32 %v4463, 0.0
        %v4493 = vmax.f32 %v4464, 0.0
        %v4494 = vmax.f32 %v4465, 0.0
        %v4495 = vmax.f32 %v4466, 0.0
        %v4496 = vmax.f32 %v4467, 0.0
        %v4497 = vmax.f32 %v4468, 0.0
        %v4498 = vmax.f32 %v4469, 0.0
        %v4499 = vmax.f32 %v4470, 0.0
        %v4500 = vmax.f32 %v4471, 0.0
        %v4501 = vmax.f32 %v4472, 0.0
        %v4502 = vmax.f32 %v4473, 0.0
        %v4503 = vmax.f32 %v4474, 0.0
        %v4504 = vmax.f32 %v4475, 0.0
        %v4505 = vmax.f32 %v4476, 0.0
        %v4506 = vmax.f32 %v4477, 0.0
        %v4507 = vmax.f32 %v4478, 0.0
        %v4508 = vmax.f32 %v4479, 0.0
        %v4509 = vmax.f32 %v4480, 0.0
        %v4510 = vmax.f32 %v4481, 0.0
        %v4511 = vmax.f32 %v4482, 0.0
        %v4512 = vmax.f32 %v4483, 0.0
        %v4513 = vsel %vm4389, 1, 0
        %v4514 = vsel %vm4390, 1, 0
        %v4515 = vsel %vm4391, 1, 0
        %v4516 = vsel %vm4392, 1, 0
        %v4517 = vsel %vm4393, 1, 0
        %v4518 = vsel %vm4394, 1, 0
        %v4519 = vsel %vm4395, 1, 0
        %v4520 = vsel %vm4396, 1, 0
        %v4521 = vsel %vm4397, 1, 0
        %v4522 = vsel %vm4398, 1, 0
        %v4523 = vsel %vm4399, 1, 0
        %v4524 = vsel %vm4400, 1, 0
        %v4525 = vsel %vm4401, 1, 0
        %v4526 = vsel %vm4402, 1, 0
        %v4527 = vsel %vm4403, 1, 0
        %v4528 = vsel %vm4404, 1, 0
        %v4529 = vsel %vm4405, 1, 0
        %v4530 = vsel %vm4406, 1, 0
        %v4531 = vsel %vm4407, 1, 0
        %v4532 = vsel %vm4408, 1, 0
        %v4533 = vsel %vm4409, 1, 0
        %v4534 = vsel %vm4410, 1, 0
        %v4535 = vsel %vm4411, 1, 0
        %v4536 = vsel %vm4412, 1, 0
        %v4537 = vsel %vm4413, 1, 0
        %v4538 = vsel %vm4414, 1, 0
        %v4539 = vsel %vm4415, 1, 0
        %v4540 = vsel %vm4416, 1, 0
        %v4541 = vsel %vm4417, 1, 0
        %vm4542 = vcmp.eq.s32.totalorder %v4513, 1
        %vm4543 = vcmp.eq.s32.totalorder %v4514, 1
        %vm4544 = vcmp.eq.s32.totalorder %v4515, 1
        %vm4545 = vcmp.eq.s32.totalorder %v4516, 1
        %vm4546 = vcmp.eq.s32.totalorder %v4517, 1
        %vm4547 = vcmp.eq.s32.totalorder %v4518, 1
        %vm4548 = vcmp.eq.s32.totalorder %v4519, 1
        %vm4549 = vcmp.eq.s32.totalorder %v4520, 1
        %vm4550 = vcmp.eq.s32.totalorder %v4521, 1
        %vm4551 = vcmp.eq.s32.totalorder %v4522, 1
        %vm4552 = vcmp.eq.s32.totalorder %v4523, 1
        %vm4553 = vcmp.eq.s32.totalorder %v4524, 1
        %vm4554 = vcmp.eq.s32.totalorder %v4525, 1
        %vm4555 = vcmp.eq.s32.totalorder %v4526, 1
        %vm4556 = vcmp.eq.s32.totalorder %v4527, 1
        %vm4557 = vcmp.eq.s32.totalorder %v4528, 1
        %vm4558 = vcmp.eq.s32.totalorder %v4529, 1
        %vm4559 = vcmp.eq.s32.totalorder %v4530, 1
        %vm4560 = vcmp.eq.s32.totalorder %v4531, 1
        %vm4561 = vcmp.eq.s32.totalorder %v4532, 1
        %vm4562 = vcmp.eq.s32.totalorder %v4533, 1
        %vm4563 = vcmp.eq.s32.totalorder %v4534, 1
        %vm4564 = vcmp.eq.s32.totalorder %v4535, 1
        %vm4565 = vcmp.eq.s32.totalorder %v4536, 1
        %vm4566 = vcmp.eq.s32.totalorder %v4537, 1
        %vm4567 = vcmp.eq.s32.totalorder %v4538, 1
        %vm4568 = vcmp.eq.s32.totalorder %v4539, 1
        %vm4569 = vcmp.eq.s32.totalorder %v4540, 1
        %vm4570 = vcmp.eq.s32.totalorder %v4541, 1
        %v4571 = vsel %vm4542, %v4484, 0.0
        %v4572 = vsel %vm4543, %v4485, 0.0
        %v4573 = vsel %vm4544, %v4486, 0.0
        %v4574 = vsel %vm4545, %v4487, 0.0
        %v4575 = vsel %vm4546, %v4488, 0.0
        %v4576 = vsel %vm4547, %v4489, 0.0
        %v4577 = vsel %vm4548, %v4490, 0.0
        %v4578 = vsel %vm4549, %v4491, 0.0
        %v4579 = vsel %vm4550, %v4492, 0.0
        %v4580 = vsel %vm4551, %v4493, 0.0
        %v4581 = vsel %vm4552, %v4494, 0.0
        %v4582 = vsel %vm4553, %v4495, 0.0
        %v4583 = vsel %vm4554, %v4496, 0.0
        %v4584 = vsel %vm4555, %v4497, 0.0
        %v4585 = vsel %vm4556, %v4498, 0.0
        %v4586 = vsel %vm4557, %v4499, 0.0
        %v4587 = vsel %vm4558, %v4500, 0.0
        %v4588 = vsel %vm4559, %v4501, 0.0
        %v4589 = vsel %vm4560, %v4502, 0.0
        %v4590 = vsel %vm4561, %v4503, 0.0
        %v4591 = vsel %vm4562, %v4504, 0.0
        %v4592 = vsel %vm4563, %v4505, 0.0
        %v4593 = vsel %vm4564, %v4506, 0.0
        %v4594 = vsel %vm4565, %v4507, 0.0
        %v4595 = vsel %vm4566, %v4508, 0.0
        %v4596 = vsel %vm4567, %v4509, 0.0
        %v4597 = vsel %vm4568, %v4510, 0.0
        %v4598 = vsel %vm4569, %v4511, 0.0
        %v4599 = vsel %vm4570, %v4512, 0.0
        %v4600 = vadd.f32 %v4571, %v4572
        %v4601 = vadd.f32 %v4600, %v4573
        %v4602 = vadd.f32 %v4601, %v4574
        %v4603 = vadd.f32 %v4602, %v4575
        %v4604 = vadd.f32 %v4603, %v4576
        %v4605 = vadd.f32 %v4604, %v4577
        %v4606 = vadd.f32 %v4605, %v4578
        %v4607 = vadd.f32 %v4606, %v4579
        %v4608 = vadd.f32 %v4607, %v4580
        %v4609 = vadd.f32 %v4608, %v4581
        %v4610 = vadd.f32 %v4609, %v4582
        %v4611 = vadd.f32 %v4610, %v4583
        %v4612 = vadd.f32 %v4611, %v4584
        %v4613 = vadd.f32 %v4612, %v4585
        %v4614 = vadd.f32 %v4613, %v4586
        %v4615 = vadd.f32 %v4614, %v4587
        %v4616 = vadd.f32 %v4615, %v4588
        %v4617 = vadd.f32 %v4616, %v4589
        %v4618 = vadd.f32 %v4617, %v4590
        %v4619 = vadd.f32 %v4618, %v4591
        %v4620 = vadd.f32 %v4619, %v4592
        %v4621 = vadd.f32 %v4620, %v4593
        %v4622 = vadd.f32 %v4621, %v4594
        %v4623 = vadd.f32 %v4622, %v4595
        %v4624 = vadd.f32 %v4623, %v4596
        %v4625 = vadd.f32 %v4624, %v4597
        %v4626 = vadd.f32 %v4625, %v4598
        %v4627 = vadd.f32 %v4626, %v4599
        %v4628 = vrot.slane %v4627, 4
        %v4629 = vadd.f32 %v4627, %v4628
        %v4630 = vrot.slane %v4629, 2
        %v4631 = vadd.f32 %v4629, %v4630
        %v4632 = vrot.slane %v4631, 1
        %v4633 = vadd.f32 %v4631, %v4632
        %v4634 = vmul.f32 %v4633, 0.015625
        %s4635 = smul.u32 %s26, 128
        %s4636 = scalar_lea.vmem %s5, %s4635
        %v4637 = vld [vmem:[%s4636] sm:$0xff]
        %v4638 = vld [vmem:[%s4636 + $0x8] sm:$0xff]
        %v4639 = vld [vmem:[%s4636 + $0x10] sm:$0xff]
        %v4640 = vld [vmem:[%s4636 + $0x18] sm:$0xff]
        %v4641 = vld [vmem:[%s4636 + $0x20] sm:$0xff]
        %v4642 = vld [vmem:[%s4636 + $0x28] sm:$0xff]
        %v4643 = vld [vmem:[%s4636 + $0x30] sm:$0xff]
        %v4644 = vld [vmem:[%s4636 + $0x38] sm:$0xff]
        %v4645 = vld [vmem:[%s4636 + $0x40] sm:$0xff]
        %v4646 = vld [vmem:[%s4636 + $0x48] sm:$0xff]
        %v4647 = vld [vmem:[%s4636 + $0x50] sm:$0xff]
        %v4648 = vld [vmem:[%s4636 + $0x58] sm:$0xff]
        %v4649 = vld [vmem:[%s4636 + $0x60] sm:$0xff]
        %v4650 = vld [vmem:[%s4636 + $0x68] sm:$0xff]
        %v4651 = vld [vmem:[%s4636 + $0x70] sm:$0xff]
        %v4652 = vld [vmem:[%s4636 + $0x78] sm:$0xff]
        %4653 = vmatprep.subr.mxu0 0.0
        %4654 = vmatpush1.msra.mxu0 %v4652
        %4655 = vmatprep.subr.mxu0 0.0
        %4656 = vmatpush1.msra.mxu0 %v4651
        %4657 = vmatprep.subr.mxu0 0.0
        %4658 = vmatpush1.msra.mxu0 %v4650
        %4659 = vmatprep.subr.mxu0 0.0
        %4660 = vmatpush1.msra.mxu0 %v4649
        %4661 = vmatprep.subr.mxu0 0.0
        %4662 = vmatpush1.msra.mxu0 %v4648
        %4663 = vmatprep.subr.mxu0 0.0
        %4664 = vmatpush1.msra.mxu0 %v4647
        %4665 = vmatprep.subr.mxu0 0.0
        %4666 = vmatpush1.msra.mxu0 %v4646
        %4667 = vmatprep.subr.mxu0 0.0
        %4668 = vmatpush1.msra.mxu0 %v4645
        %4669 = vmatprep.subr.mxu0 0.0
        %4670 = vmatpush1.msra.mxu0 %v4644
        %4671 = vmatprep.subr.mxu0 0.0
        %4672 = vmatpush1.msra.mxu0 %v4643
        %4673 = vmatprep.subr.mxu0 0.0
        %4674 = vmatpush1.msra.mxu0 %v4642
        %4675 = vmatprep.subr.mxu0 0.0
        %4676 = vmatpush1.msra.mxu0 %v4641
        %4677 = vmatprep.subr.mxu0 0.0
        %4678 = vmatpush1.msra.mxu0 %v4640
        %4679 = vmatprep.subr.mxu0 0.0
        %4680 = vmatpush1.msra.mxu0 %v4639
        %4681 = vmatprep.subr.mxu0 0.0
        %4682 = vmatpush1.msra.mxu0 %v4638
        %4683 = vmatprep.subr.mxu0 0.0
        %4684 = vmatpush1.msra.mxu0 %v4637
        %4685 = vmatprep.subr.mxu0 0.0
        %4686 = vmatpush2.msra.mxu0 0.0
        %4687 = vmatprep.subr.mxu0 0.0
        %4688 = vmatpush2.msra.mxu0 0.0
        %4689 = vmatprep.subr.mxu0 0.0
        %4690 = vmatpush2.msra.mxu0 0.0
        %4691 = vmatprep.subr.mxu0 0.0
        %4692 = vmatpush2.msra.mxu0 0.0
        %4693 = vmatprep.subr.mxu0 0.0
        %4694 = vmatpush2.msra.mxu0 0.0
        %4695 = vmatprep.subr.mxu0 0.0
        %4696 = vmatpush2.msra.mxu0 0.0
        %4697 = vmatprep.subr.mxu0 0.0
        %4698 = vmatpush2.msra.mxu0 0.0
        %4699 = vmatprep.subr.mxu0 0.0
        %4700 = vmatpush2.msra.mxu0 0.0
        %4701 = vmatprep.subr.mxu0 0.0
        %4702 = vmatpush2.msra.mxu0 0.0
        %4703 = vmatprep.subr.mxu0 0.0
        %4704 = vmatpush2.msra.mxu0 0.0
        %4705 = vmatprep.subr.mxu0 0.0
        %4706 = vmatpush2.msra.mxu0 0.0
        %4707 = vmatprep.subr.mxu0 0.0
        %4708 = vmatpush2.msra.mxu0 0.0
        %4709 = vmatprep.subr.mxu0 0.0
        %4710 = vmatpush2.msra.mxu0 0.0
        %4711 = vmatprep.subr.mxu0 0.0
        %4712 = vmatpush2.msra.mxu0 0.0
        %4713 = vmatprep.subr.mxu0 0.0
        %4714 = vmatpush2.msra.mxu0 0.0
        %4715 = vmatprep.subr.mxu0 0.0
        %4716 = vmatpush2.msra.mxu0 0.0
        %4717 = vmatprep.mubr.f32.mxu0 0.0
        %4718 = vmatmul.mubr.f32.gmra.mxu0 %v4634
        %v4719 = vpop.f32.mrf.mxu0
        %v4720 = vadd.f32 0.0, %v4719
        %v4721 = vpop.f32.mrf.mxu0
        %4722 = vdwg.mxu0
        %p4723 = scmp.eq.s32.totalorder %s26, 0
        // Predicated region
        $region49: #{mi_model_forward.1} parent=47 // pred_check
          %p4724 = pneg %p4723
        $region50: #{mi_model_forward.1} parent=47 // pred_check_branch
          %4726 = sbr.rel (%p4724) target = $region52
        $region51: #{mi_model_forward.1} parent=47 // pred_region
          %v4727 = vld [vmem:[%s6] sm:$0x1]
          %v4728 = vadd.f32 %v4727, %v4720
          %4729 = vst [vmem:[%s292] sm:$0x1] %v4728
        $region52: #{mi_model_forward.1} parent=47 // pred_fallthru
          _
        %p4730 = scmp.ne.s32.totalorder %s26, 0
        // Predicated region
        $region53: #{mi_model_forward.1} parent=47 // pred_check
          %p4731 = pneg %p4730
        $region54: #{mi_model_forward.1} parent=47 // pred_check_branch
          %4733 = sbr.rel (%p4731) target = $region56
        $region55: #{mi_model_forward.1} parent=47 // pred_region
          %v4734 = vld [vmem:[%s292] sm:$0x1]
          %v4735 = vadd.f32 %v4734, %v4720
          %4736 = vst [vmem:[%s292] sm:$0x1] %v4735
        $region56: #{mi_model_forward.1} parent=47 // pred_fallthru
          _
        %s4737 = sand.u32 %s195, 1
        %s4738 = scalar_lea.sflag [#allocation5], %s4737
        %s4739 = sand.u32 %s195, 1
        %s4740 = scalar_lea.vmem [#allocation4], %s4739
        // Predicated region
        $region57: #{mi_model_forward.1} parent=47 // pred_check
          %p4741 = pneg %p205
        $region58: #{mi_model_forward.1} parent=47 // pred_check_branch
          %4743 = sbr.rel (%p4741) target = $region60
        $region59: #{mi_model_forward.1} parent=47 // pred_region
          %s4745 = ssub.s32 16, 16
          %4746 = vsyncadd %s4738, %s4745
          %s4747 = smul.addr %s25, 16
          %s4748 = scalar_lea.hbm %s7, %s4747
          %s4750 = sshll.u32 %s4740, 4
          %s4751 = int_to_ptr.vmem [resolvable:$true] %s4750
          %4753 = dma.vmem_to_hbm [thread:$0]  %s4751, 16, %s4748, %s4738
        $region60: #{mi_model_forward.1} parent=47 // pred_fallthru
          _
      $region48: #{mi_model_forward.1} parent=5 // pred_fallthru
        _
      %p4754 = scmp.le.s32.totalorder 2, %s16
      // Predicated region
      $region61: #{mi_model_forward.1} parent=5 // pred_check
        %p4755 = pneg %p4754
      $region62: #{mi_model_forward.1} parent=5 // pred_check_branch
        %4757 = sbr.rel (%p4755) target = $region64
      $region63: #{mi_model_forward.1} parent=5 // pred_region
        %s4758 = ssub.s32 %s16, 2
        // Predicated region
        $region65: #{mi_model_forward.1} parent=63 // pred_check
          %p4759 = pneg %p211
        $region66: #{mi_model_forward.1} parent=63 // pred_check_branch
          %4761 = sbr.rel (%p4759) target = $region68
        $region67: #{mi_model_forward.1} parent=63 // pred_region
          %s4762 = sand.u32 %s196, 1
          %s4763 = scalar_lea.sflag [#allocation5], %s4762
          %s4764 = sand.u32 %s196, 1
          %s4765 = scalar_lea.vmem [#allocation4], %s4764
          %4766 = dma.done %s4763, 16
        $region68: #{mi_model_forward.1} parent=63 // pred_fallthru
          _
      $region64: #{mi_model_forward.1} parent=5 // pred_fallthru
        _
    $region6: #{mi_model_forward.1} parent=1 // loop_footer
      %s20 = sadd.s32 1, %s16
    $region7: #{mi_model_forward.1} parent=1 // loop_footer_branch
      %15 = sbr.rel target = $region3
    $region8: #{mi_model_forward.1} parent=1 // loop_exit
      _
    %4767 = vsyncpa [#allocation5], 1
    %s4768 = scalar_lea.sflag [#allocation5], 1
    %4769 = vsyncpa %s4768, 1

</llo_original>
